<compile_context>
chip_gen: v7x
topology: tpu7x:2x2x1
jax: 0.10.0
libtpu: 0.0.40
codegen_flags: <defaults>
</compile_context>

<pallas_src>
import functools

import jax
import jax.numpy as jnp
import numpy as np
from jax.experimental import pallas as pl
from jax.experimental.pallas import tpu as pltpu

BN_EPS = 1e-5


# --------------------------------------------------------------------------- VMEM budget
def _vmem_limit_bytes():
    cap = 64 << 20  # conservative default = v7x physical VMEM
    try:
        info = pltpu.get_tpu_info()
        cap = int(getattr(info, "vmem_capacity_bytes", cap))
    except Exception:
        pass
    # ~3/4 of physical: 48 MiB on v7x, 96 MiB on v5e/v6e.
    return min(int(cap * 3 // 4), 112 << 20)


_VMEM_LIMIT = _vmem_limit_bytes()
_CPARAMS = pltpu.CompilerParams(
    dimension_semantics=("parallel", "parallel"),
    vmem_limit_bytes=_VMEM_LIMIT,
)


def _round_up(x, m):
    return (x + m - 1) // m * m


def _pick_tile(n_pad, c_max, batch):
    """Largest 128-multiple point tile dividing n_pad that fits the VMEM budget
    and (when possible) keeps >= 2 grid blocks for the v7x megacore."""
    # Per point column: double-buffered bf16 input + bf16 output activation blocks.
    per_col = 2 * (c_max * 2 + c_max * 2)
    # Resident weights (bf16, assume double-buffered) + slack for stats/scratch.
    resident = 2 * (c_max * c_max * 2) + (2 << 20)
    budget_cols = max(128, (_VMEM_LIMIT - resident) // max(per_col, 1))
    tn_cap = max(128, min(2048, (budget_cols // 128) * 128))

    k = n_pad // 128
    tn = 128
    for d in range(1, k + 1):
        if k % d:
            continue
        t = d * 128
        if t > tn_cap:
            break
        if t == 128 or batch * (n_pad // t) >= 2:
            tn = t
    return tn


# --------------------------------------------------------------------------- kernels
def _first_layer_kernel(x_ref, w_ref, y_ref, ssum_ref, ssq_ref):
    """conv1 on one (C, tile_N) slab (bf16 in, f32 accumulate) + BN partials."""
    y = jnp.dot(w_ref[...], x_ref[0], preferred_element_type=jnp.float32)
    y_ref[0] = y.astype(y_ref.dtype)                      # bf16 activation stream
    ssum_ref[0, 0] = jnp.sum(y, axis=1, keepdims=True)    # f32 stats
    ssq_ref[0, 0] = jnp.sum(y * y, axis=1, keepdims=True)


def _mid_layer_kernel(yprev_ref, s_ref, t_ref, w_ref, y_ref, ssum_ref, ssq_ref,
                      *, tn, n_valid, mask_tail):
    """Fold previous BN (y*s + t) + ReLU (f32), conv_k (bf16 MXU), BN partials."""
    h = jnp.maximum(yprev_ref[0].astype(jnp.float32) * s_ref[...] + t_ref[...], 0.0)
    if mask_tail:
        # Zero padded point columns so conv output (and BN stats) ignore them.
        col = pl.program_id(1) * tn + jax.lax.broadcasted_iota(jnp.int32, (1, tn), 1)
        h = jnp.where(col < n_valid, h, 0.0)
    y = jnp.dot(w_ref[...], h.astype(jnp.bfloat16),
                preferred_element_type=jnp.float32)
    y_ref[0] = y.astype(y_ref.dtype)
    ssum_ref[0, 0] = jnp.sum(y, axis=1, keepdims=True)
    ssq_ref[0, 0] = jnp.sum(y * y, axis=1, keepdims=True)


def _last_layer_kernel(yprev_ref, s_ref, t_ref, w_ref, b_ref, o_ref):
    """Fold BN3 + ReLU, conv4 (padded to 8 output rows) + bias, tanh."""
    h = jnp.maximum(yprev_ref[0].astype(jnp.float32) * s_ref[...] + t_ref[...], 0.0)
    y = jnp.dot(w_ref[...], h.astype(jnp.bfloat16),
                preferred_element_type=jnp.float32) + b_ref[...]
    o_ref[0] = jnp.tanh(y)


# --------------------------------------------------------------------------- specs / sweeps
def _act_spec(c, tn):
    """(B, c, N_pad) activation, one (1, c, tn) block per grid step."""
    return pl.BlockSpec((1, c, tn), lambda b, j: (b, 0, j))


def _const_spec(shape):
    """Full-array block, constant index map: fetched once, VMEM resident."""
    return pl.BlockSpec(shape, lambda b, j, _n=len(shape): (0,) * _n)


def _conv_stats_sweep(h, w_bf16, s, t, *, tn, n_valid):
    """One sweep over the point axis: (fold prev BN+ReLU,) conv, partial stats."""
    B, c_in, n_pad = h.shape
    c_out = w_bf16.shape[0]
    n_t = n_pad // tn
    mask_tail = n_pad != n_valid

    if s is None:
        kernel = _first_layer_kernel
        args = (h, w_bf16)
        in_specs = [_act_spec(c_in, tn), _const_spec(w_bf16.shape)]
    else:
        kernel = functools.partial(_mid_layer_kernel, tn=tn, n_valid=n_valid,
                                   mask_tail=mask_tail)
        args = (h, s, t, w_bf16)
        in_specs = [_act_spec(c_in, tn), _const_spec(s.shape),
                    _const_spec(t.shape), _const_spec(w_bf16.shape)]

    stats_spec = pl.BlockSpec((1, 1, c_out, 1), lambda b, j: (b, j, 0, 0))
    ce = pl.CostEstimate(
        flops=2 * c_out * c_in * B * n_pad,
        transcendentals=0,
        bytes_accessed=(B * c_in * n_pad * 2 + B * c_out * n_pad * 2
                        + c_out * c_in * 2 + 2 * B * n_t * c_out * 4),
    )
    y, ssum, ssq = pl.pallas_call(
        kernel,
        grid=(B, n_t),
        in_specs=in_specs,
        out_specs=[_act_spec(c_out, tn), stats_spec, stats_spec],
        out_shape=[jax.ShapeDtypeStruct((B, c_out, n_pad), jnp.bfloat16),
                   jax.ShapeDtypeStruct((B, n_t, c_out, 1), jnp.float32),
                   jax.ShapeDtypeStruct((B, n_t, c_out, 1), jnp.float32)],
        compiler_params=_CPARAMS,
        cost_estimate=ce,
    )(*args)
    return y, ssum, ssq


def _final_sweep(h, s, t, w4p_bf16, b4p, *, tn):
    B, c_in, n_pad = h.shape
    n_t = n_pad // tn
    ce = pl.CostEstimate(
        flops=2 * 8 * c_in * B * n_pad,
        transcendentals=8 * B * n_pad,
        bytes_accessed=B * c_in * n_pad * 2 + B * 8 * n_pad * 4 + 8 * c_in * 2,
    )
    return pl.pallas_call(
        _last_layer_kernel,
        grid=(B, n_t),
        in_specs=[_act_spec(c_in, tn), _const_spec(s.shape), _const_spec(t.shape),
                  _const_spec(w4p_bf16.shape), _const_spec(b4p.shape)],
        out_specs=_act_spec(8, tn),
        out_shape=jax.ShapeDtypeStruct((B, 8, n_pad), jnp.float32),
        compiler_params=_CPARAMS,
        cost_estimate=ce,
    )(h, s, t, w4p_bf16, b4p)


def _bn_scale_shift(ssum, ssq, gamma, beta, count):
    """Fold training-mode BN into per-channel scale/shift (all shapes (C, 1))."""
    mean = ssum.sum(axis=(0, 1)) / count
    var = jnp.maximum(ssq.sum(axis=(0, 1)) / count - mean * mean, 0.0)  # biased var
    s = gamma * jax.lax.rsqrt(var + BN_EPS)
    t = beta - mean * s
    return s, t


@jax.jit
def point_gen_con(x, params):
    """x: (B, C, N) float32 -> (B, 3, N) float32 (training-mode BatchNorm)."""
    (w1, b1, g1, be1, w2, b2, g2, be2, w3, b3, g3, be3, w4, b4) = params
    del b1, b2, b3  # exactly cancelled by the training-mode BN mean subtraction
    B, C, N = x.shape
    count = jnp.float32(B * N)          # stats over *valid* points only
    c4 = w4.shape[1]

    n_pad = _round_up(N, 128)
    tn = _pick_tile(n_pad, C, B)

    # bf16 MXU feed: weights and input cast once here; W4/b4 padded to 8 rows.
    w1b, w2b, w3b = (w.astype(jnp.bfloat16) for w in (w1, w2, w3))
    w4p = jnp.zeros((8, c4), jnp.float32).at[:3].set(w4).astype(jnp.bfloat16)
    b4p = jnp.zeros((8, 1), jnp.float32).at[:3].set(b4)
    xb = jnp.pad(x.astype(jnp.bfloat16), ((0, 0), (0, 0), (0, n_pad - N)))

    y1, s1sum, s1sq = _conv_stats_sweep(xb, w1b, None, None, tn=tn, n_valid=N)
    sc1, sh1 = _bn_scale_shift(s1sum, s1sq, g1, be1, count)
    y2, s2sum, s2sq = _conv_stats_sweep(y1, w2b, sc1, sh1, tn=tn, n_valid=N)
    sc2, sh2 = _bn_scale_shift(s2sum, s2sq, g2, be2, count)
    y3, s3sum, s3sq = _conv_stats_sweep(y2, w3b, sc2, sh2, tn=tn, n_valid=N)
    sc3, sh3 = _bn_scale_shift(s3sum, s3sq, g3, be3, count)
    out = _final_sweep(y3, sc3, sh3, w4p, b4p, tn=tn)
    return out[:, :3, :N]


# --------------------------------------------------------------------------- params / reference
def make_params(key, bottleneck):
    """Deterministic synthetic parameters (same shapes as the PyTorch module)."""
    C, C2, C4 = bottleneck, bottleneck // 2, bottleneck // 4
    ks = jax.random.split(key, 8)

    def w(k, co, ci):
        return jax.random.normal(k, (co, ci), jnp.float32) * (1.0 / np.sqrt(ci))

    def b(k, co):
        return jax.random.normal(k, (co, 1), jnp.float32) * 0.02

    w1, b1 = w(ks[0], C, C),   b(ks[1], C)
    w2, b2 = w(ks[2], C2, C),  b(ks[3], C2)
    w3, b3 = w(ks[4], C4, C2), b(ks[5], C4)
    w4, b4 = w(ks[6], 3, C4),  b(ks[7], 3)
    g1, be1 = jnp.ones((C, 1), jnp.float32),  jnp.zeros((C, 1), jnp.float32)
    g2, be2 = jnp.ones((C2, 1), jnp.float32), jnp.zeros((C2, 1), jnp.float32)
    g3, be3 = jnp.ones((C4, 1), jnp.float32), jnp.zeros((C4, 1), jnp.float32)
    return (w1, b1, g1, be1, w2, b2, g2, be2, w3, b3, g3, be3, w4, b4)


def point_gen_con_ref(x, params):
    """Pure-JAX f32 reference of the PyTorch forward (training-mode BN, with biases)."""
    (w1, b1, g1, be1, w2, b2, g2, be2, w3, b3, g3, be3, w4, b4) = params
    B, C, N = x.shape
    h = jnp.transpose(x, (1, 0, 2)).reshape(C, B * N)

    def layer(h, w, b, g, be):
        y = w @ h + b
        m = y.mean(axis=1, keepdims=True)
        v = ((y - m) ** 2).mean(axis=1, keepdims=True)
        return jnp.maximum((y - m) / jnp.sqrt(v + BN_EPS) * g + be, 0.0)

    h = layer(h, w1, b1, g1, be1)
    h = layer(h, w2, b2, g2, be2)
    h = layer(h, w3, b3, g3, be3)
    y = jnp.tanh(w4 @ h + b4)
    return jnp.transpose(y.reshape(3, B, N), (1, 0, 2))


if __name__ == "__main__":
    BOTTLENECK = 256   # small stand-in for the default 1024
    B, N = 2, 300      # N not a multiple of 128 -> exercises the padded/masked tail

    key = jax.random.PRNGKey(0)
    kx, kp = jax.random.split(key)
    x = jax.random.normal(kx, (B, BOTTLENECK, N), jnp.float32)
    params = make_params(kp, BOTTLENECK)

    out = jax.block_until_ready(point_gen_con(x, params))
    ref = jax.block_until_ready(point_gen_con_ref(x, params))

    assert out.shape == (B, 3, N), out.shape
    # bf16 MXU feed + bf16 activation storage vs. the f32 reference (intentional
    # perf trade-off); outputs are tanh-bounded, so use a loosened tolerance.
    np.testing.assert_allclose(np.asarray(out), np.asarray(ref), atol=7e-2, rtol=7e-2)
    print("KERNEL_OK")
</pallas_src>

<mosaic_0001>
module attributes {stable_mosaic.version = 11 : i64} {
  func.func @_first_layer_kernel(%arg0: i32, %arg1: i32, %arg2: memref<1x256x384xbf16, #tpu.memory_space<vmem>>, %arg3: memref<256x256xbf16, #tpu.memory_space<vmem>>, %arg4: memref<1x256x384xbf16, #tpu.memory_space<vmem>>, %arg5: memref<1x1x256x1xf32, #tpu.memory_space<vmem>>, %arg6: memref<1x1x256x1xf32, #tpu.memory_space<vmem>>) attributes {dimension_semantics = [#tpu.dimension_semantics<parallel>, #tpu.dimension_semantics<parallel>], iteration_bounds = array<i64: 2, 1>, scalar_prefetch = 0 : i64, scratch_operands = 0 : i64, tpu.core_type = #tpu.core_type<tc>, window_params = [{transform_indices = @transform_0, window_bounds = array<i64: 1, 256, 384>}, {pipeline_mode = #tpu.pipeline_mode<synchronous>, transform_indices = @transform_1, window_bounds = array<i64: 256, 256>}, {transform_indices = @transform_2, window_bounds = array<i64: 1, 256, 384>}, {transform_indices = @transform_3, window_bounds = array<i64: 1, 1, 256, 1>}, {transform_indices = @transform_4, window_bounds = array<i64: 1, 1, 256, 1>}]} {
    %c0 = arith.constant 0 : index
    %c0_0 = arith.constant 0 : index
    %0 = vector.load %arg3[%c0, %c0_0] : memref<256x256xbf16, #tpu.memory_space<vmem>>, vector<256x256xbf16>
    %c0_1 = arith.constant 0 : index
    %c0_2 = arith.constant 0 : index
    %c0_3 = arith.constant 0 : index
    %1 = vector.load %arg2[%c0_1, %c0_2, %c0_3] : memref<1x256x384xbf16, #tpu.memory_space<vmem>>, vector<1x256x384xbf16>
    %2 = vector.shape_cast %1 : vector<1x256x384xbf16> to vector<256x384xbf16>
    %cst = arith.constant dense<0.000000e+00> : vector<256x384xf32>
    %3 = tpu.matmul %0, %2, %cst {dimension_numbers = #tpu.dot_dimension_numbers<[1], [0], [0], [1], [0, 0, 1, 1], [], []>} : vector<256x256xbf16>, vector<256x384xbf16>, vector<256x384xf32> -> vector<256x384xf32>
    %4 = arith.truncf %3 : vector<256x384xf32> to vector<256x384xbf16>
    %c0_4 = arith.constant 0 : index
    %c0_5 = arith.constant 0 : index
    %c0_6 = arith.constant 0 : index
    %5 = vector.load %arg4[%c0_4, %c0_5, %c0_6] : memref<1x256x384xbf16, #tpu.memory_space<vmem>>, vector<1x256x384xbf16>
    %6 = vector.shape_cast %5 : vector<1x256x384xbf16> to vector<256x384xbf16>
    %7 = vector.shape_cast %4 : vector<256x384xbf16> to vector<1x256x384xbf16>
    tpu.vector_store %arg4[%c0_4, %c0_5, %c0_6], %7 {strides = array<i32>} : memref<1x256x384xbf16, #tpu.memory_space<vmem>>, vector<1x256x384xbf16>,
    %cst_7 = arith.constant dense<0.000000e+00> : vector<256xf32>
    %8 = vector.multi_reduction <add>, %3, %cst_7 [1] : vector<256x384xf32> to vector<256xf32>
    %9 = vector.shape_cast %8 : vector<256xf32> to vector<256x1xf32>
    %c0_8 = arith.constant 0 : index
    %c0_9 = arith.constant 0 : index
    %c0_10 = arith.constant 0 : index
    %c0_11 = arith.constant 0 : index
    %10 = vector.load %arg5[%c0_8, %c0_9, %c0_10, %c0_11] : memref<1x1x256x1xf32, #tpu.memory_space<vmem>>, vector<1x1x256x1xf32>
    %11 = vector.shape_cast %10 : vector<1x1x256x1xf32> to vector<256x1xf32>
    %12 = vector.shape_cast %9 : vector<256x1xf32> to vector<1x1x256x1xf32>
    tpu.vector_store %arg5[%c0_8, %c0_9, %c0_10, %c0_11], %12 {strides = array<i32>} : memref<1x1x256x1xf32, #tpu.memory_space<vmem>>, vector<1x1x256x1xf32>,
    %13 = arith.mulf %3, %3 : vector<256x384xf32>
    %cst_12 = arith.constant dense<0.000000e+00> : vector<256xf32>
    %14 = vector.multi_reduction <add>, %13, %cst_12 [1] : vector<256x384xf32> to vector<256xf32>
    %15 = vector.shape_cast %14 : vector<256xf32> to vector<256x1xf32>
    %c0_13 = arith.constant 0 : index
    %c0_14 = arith.constant 0 : index
    %c0_15 = arith.constant 0 : index
    %c0_16 = arith.constant 0 : index
    %16 = vector.load %arg6[%c0_13, %c0_14, %c0_15, %c0_16] : memref<1x1x256x1xf32, #tpu.memory_space<vmem>>, vector<1x1x256x1xf32>
    %17 = vector.shape_cast %16 : vector<1x1x256x1xf32> to vector<256x1xf32>
    %18 = vector.shape_cast %15 : vector<256x1xf32> to vector<1x1x256x1xf32>
    tpu.vector_store %arg6[%c0_13, %c0_14, %c0_15, %c0_16], %18 {strides = array<i32>} : memref<1x1x256x1xf32, #tpu.memory_space<vmem>>, vector<1x1x256x1xf32>,
    return
  }
  func.func @transform_0(%arg0: i32, %arg1: i32) -> (i32, i32, i32) {
    %c0_i32 = arith.constant 0 : i32
    %c0_i32_0 = arith.constant 0 : i32
    return %arg0, %c0_i32, %arg1 : i32, i32, i32
  }
  func.func @transform_1(%arg0: i32, %arg1: i32) -> (i32, i32) {
    %c0_i32 = arith.constant 0 : i32
    %c0_i32_0 = arith.constant 0 : i32
    %c0_i32_1 = arith.constant 0 : i32
    return %c0_i32, %c0_i32_0 : i32, i32
  }
  func.func @transform_2(%arg0: i32, %arg1: i32) -> (i32, i32, i32) {
    %c0_i32 = arith.constant 0 : i32
    %c0_i32_0 = arith.constant 0 : i32
    return %arg0, %c0_i32, %arg1 : i32, i32, i32
  }
  func.func @transform_3(%arg0: i32, %arg1: i32) -> (i32, i32, i32, i32) {
    %c0_i32 = arith.constant 0 : i32
    %c0_i32_0 = arith.constant 0 : i32
    %c0_i32_1 = arith.constant 0 : i32
    return %arg0, %arg1, %c0_i32, %c0_i32_0 : i32, i32, i32, i32
  }
  func.func @transform_4(%arg0: i32, %arg1: i32) -> (i32, i32, i32, i32) {
    %c0_i32 = arith.constant 0 : i32
    %c0_i32_0 = arith.constant 0 : i32
    %c0_i32_1 = arith.constant 0 : i32
    return %arg0, %arg1, %c0_i32, %c0_i32_0 : i32, i32, i32, i32
  }
}

module attributes {stable_mosaic.version = 11 : i64} {
  func.func @_mid_layer_kernel(%arg0: i32, %arg1: i32, %arg2: memref<1x256x384xbf16, #tpu.memory_space<vmem>>, %arg3: memref<256x1xf32, #tpu.memory_space<vmem>>, %arg4: memref<256x1xf32, #tpu.memory_space<vmem>>, %arg5: memref<128x256xbf16, #tpu.memory_space<vmem>>, %arg6: memref<1x128x384xbf16, #tpu.memory_space<vmem>>, %arg7: memref<1x1x128x1xf32, #tpu.memory_space<vmem>>, %arg8: memref<1x1x128x1xf32, #tpu.memory_space<vmem>>) attributes {dimension_semantics = [#tpu.dimension_semantics<parallel>, #tpu.dimension_semantics<parallel>], iteration_bounds = array<i64: 2, 1>, scalar_prefetch = 0 : i64, scratch_operands = 0 : i64, tpu.core_type = #tpu.core_type<tc>, window_params = [{transform_indices = @transform_0, window_bounds = array<i64: 1, 256, 384>}, {pipeline_mode = #tpu.pipeline_mode<synchronous>, transform_indices = @transform_1, window_bounds = array<i64: 256, 1>}, {pipeline_mode = #tpu.pipeline_mode<synchronous>, transform_indices = @transform_2, window_bounds = array<i64: 256, 1>}, {pipeline_mode = #tpu.pipeline_mode<synchronous>, transform_indices = @transform_3, window_bounds = array<i64: 128, 256>}, {transform_indices = @transform_4, window_bounds = array<i64: 1, 128, 384>}, {transform_indices = @transform_5, window_bounds = array<i64: 1, 1, 128, 1>}, {transform_indices = @transform_6, window_bounds = array<i64: 1, 1, 128, 1>}]} {
    %c0 = arith.constant 0 : index
    %c0_0 = arith.constant 0 : index
    %c0_1 = arith.constant 0 : index
    %0 = vector.load %arg2[%c0, %c0_0, %c0_1] : memref<1x256x384xbf16, #tpu.memory_space<vmem>>, vector<1x256x384xbf16>
    %1 = vector.shape_cast %0 : vector<1x256x384xbf16> to vector<256x384xbf16>
    %2 = arith.extf %1 : vector<256x384xbf16> to vector<256x384xf32>
    %c0_2 = arith.constant 0 : index
    %c0_3 = arith.constant 0 : index
    %3 = vector.load %arg3[%c0_2, %c0_3] : memref<256x1xf32, #tpu.memory_space<vmem>>, vector<256x1xf32>
    %4 = vector.broadcast %3 : vector<256x1xf32> to vector<256x384xf32>
    %5 = arith.mulf %2, %4 : vector<256x384xf32>
    %c0_4 = arith.constant 0 : index
    %c0_5 = arith.constant 0 : index
    %6 = vector.load %arg4[%c0_4, %c0_5] : memref<256x1xf32, #tpu.memory_space<vmem>>, vector<256x1xf32>
    %7 = vector.broadcast %6 : vector<256x1xf32> to vector<256x384xf32>
    %8 = arith.addf %5, %7 : vector<256x384xf32>
    %cst = arith.constant 0.000000e+00 : f32
    %9 = vector.broadcast %cst : f32 to vector<256x384xf32>
    %10 = arith.maximumf %8, %9 : vector<256x384xf32>
    %c384_i32 = arith.constant 384 : i32
    %11 = arith.muli %arg1, %c384_i32 : i32
    %12 = tpu.iota {dimensions = array<i32: 1>} : vector<1x384xi32>
    %13 = vector.broadcast %11 : i32 to vector<1x384xi32>
    %14 = arith.addi %13, %12 : vector<1x384xi32>
    %c300_i32 = arith.constant 300 : i32
    %15 = vector.broadcast %c300_i32 : i32 to vector<1x384xi32>
    %16 = arith.cmpi slt, %14, %15 : vector<1x384xi32>
    %cst_6 = arith.constant 0.000000e+00 : f32
    %17 = vector.shape_cast %16 : vector<1x384xi1> to vector<1x384xi1>
    %18 = vector.broadcast %17 : vector<1x384xi1> to vector<256x384xi1>
    %19 = vector.broadcast %cst_6 : f32 to vector<256x384xf32>
    %20 = arith.select %18, %10, %19 : vector<256x384xi1>, vector<256x384xf32>
    %c0_7 = arith.constant 0 : index
    %c0_8 = arith.constant 0 : index
    %21 = vector.load %arg5[%c0_7, %c0_8] : memref<128x256xbf16, #tpu.memory_space<vmem>>, vector<128x256xbf16>
    %22 = arith.truncf %20 : vector<256x384xf32> to vector<256x384xbf16>
    %cst_9 = arith.constant dense<0.000000e+00> : vector<128x384xf32>
    %23 = tpu.matmul %21, %22, %cst_9 {dimension_numbers = #tpu.dot_dimension_numbers<[1], [0], [0], [1], [0, 0, 1, 1], [], []>} : vector<128x256xbf16>, vector<256x384xbf16>, vector<128x384xf32> -> vector<128x384xf32>
    %24 = arith.truncf %23 : vector<128x384xf32> to vector<128x384xbf16>
    %c0_10 = arith.constant 0 : index
    %c0_11 = arith.constant 0 : index
    %c0_12 = arith.constant 0 : index
    %25 = vector.load %arg6[%c0_10, %c0_11, %c0_12] : memref<1x128x384xbf16, #tpu.memory_space<vmem>>, vector<1x128x384xbf16>
    %26 = vector.shape_cast %25 : vector<1x128x384xbf16> to vector<128x384xbf16>
    %27 = vector.shape_cast %24 : vector<128x384xbf16> to vector<1x128x384xbf16>
    tpu.vector_store %arg6[%c0_10, %c0_11, %c0_12], %27 {strides = array<i32>} : memref<1x128x384xbf16, #tpu.memory_space<vmem>>, vector<1x128x384xbf16>,
    %cst_13 = arith.constant dense<0.000000e+00> : vector<128xf32>
    %28 = vector.multi_reduction <add>, %23, %cst_13 [1] : vector<128x384xf32> to vector<128xf32>
    %29 = vector.shape_cast %28 : vector<128xf32> to vector<128x1xf32>
    %c0_14 = arith.constant 0 : index
    %c0_15 = arith.constant 0 : index
    %c0_16 = arith.constant 0 : index
    %c0_17 = arith.constant 0 : index
    %30 = vector.load %arg7[%c0_14, %c0_15, %c0_16, %c0_17] : memref<1x1x128x1xf32, #tpu.memory_space<vmem>>, vector<1x1x128x1xf32>
    %31 = vector.shape_cast %30 : vector<1x1x128x1xf32> to vector<128x1xf32>
    %32 = vector.shape_cast %29 : vector<128x1xf32> to vector<1x1x128x1xf32>
    tpu.vector_store %arg7[%c0_14, %c0_15, %c0_16, %c0_17], %32 {strides = array<i32>} : memref<1x1x128x1xf32, #tpu.memory_space<vmem>>, vector<1x1x128x1xf32>,
    %33 = arith.mulf %23, %23 : vector<128x384xf32>
    %cst_18 = arith.constant dense<0.000000e+00> : vector<128xf32>
    %34 = vector.multi_reduction <add>, %33, %cst_18 [1] : vector<128x384xf32> to vector<128xf32>
    %35 = vector.shape_cast %34 : vector<128xf32> to vector<128x1xf32>
    %c0_19 = arith.constant 0 : index
    %c0_20 = arith.constant 0 : index
    %c0_21 = arith.constant 0 : index
    %c0_22 = arith.constant 0 : index
    %36 = vector.load %arg8[%c0_19, %c0_20, %c0_21, %c0_22] : memref<1x1x128x1xf32, #tpu.memory_space<vmem>>, vector<1x1x128x1xf32>
    %37 = vector.shape_cast %36 : vector<1x1x128x1xf32> to vector<128x1xf32>
    %38 = vector.shape_cast %35 : vector<128x1xf32> to vector<1x1x128x1xf32>
    tpu.vector_store %arg8[%c0_19, %c0_20, %c0_21, %c0_22], %38 {strides = array<i32>} : memref<1x1x128x1xf32, #tpu.memory_space<vmem>>, vector<1x1x128x1xf32>,
    return
  }
  func.func @transform_0(%arg0: i32, %arg1: i32) -> (i32, i32, i32) {
    %c0_i32 = arith.constant 0 : i32
    %c0_i32_0 = arith.constant 0 : i32
    return %arg0, %c0_i32, %arg1 : i32, i32, i32
  }
  func.func @transform_1(%arg0: i32, %arg1: i32) -> (i32, i32) {
    %c0_i32 = arith.constant 0 : i32
    %c0_i32_0 = arith.constant 0 : i32
    %c0_i32_1 = arith.constant 0 : i32
    return %c0_i32, %c0_i32_0 : i32, i32
  }
  func.func @transform_2(%arg0: i32, %arg1: i32) -> (i32, i32) {
    %c0_i32 = arith.constant 0 : i32
    %c0_i32_0 = arith.constant 0 : i32
    %c0_i32_1 = arith.constant 0 : i32
    return %c0_i32, %c0_i32_0 : i32, i32
  }
  func.func @transform_3(%arg0: i32, %arg1: i32) -> (i32, i32) {
    %c0_i32 = arith.constant 0 : i32
    %c0_i32_0 = arith.constant 0 : i32
    %c0_i32_1 = arith.constant 0 : i32
    return %c0_i32, %c0_i32_0 : i32, i32
  }
  func.func @transform_4(%arg0: i32, %arg1: i32) -> (i32, i32, i32) {
    %c0_i32 = arith.constant 0 : i32
    %c0_i32_0 = arith.constant 0 : i32
    return %arg0, %c0_i32, %arg1 : i32, i32, i32
  }
  func.func @transform_5(%arg0: i32, %arg1: i32) -> (i32, i32, i32, i32) {
    %c0_i32 = arith.constant 0 : i32
    %c0_i32_0 = arith.constant 0 : i32
    %c0_i32_1 = arith.constant 0 : i32
    return %arg0, %arg1, %c0_i32, %c0_i32_0 : i32, i32, i32, i32
  }
  func.func @transform_6(%arg0: i32, %arg1: i32) -> (i32, i32, i32, i32) {
    %c0_i32 = arith.constant 0 : i32
    %c0_i32_0 = arith.constant 0 : i32
    %c0_i32_1 = arith.constant 0 : i32
    return %arg0, %arg1, %c0_i32, %c0_i32_0 : i32, i32, i32, i32
  }
}

module attributes {stable_mosaic.version = 11 : i64} {
  func.func @_mid_layer_kernel(%arg0: i32, %arg1: i32, %arg2: memref<1x128x384xbf16, #tpu.memory_space<vmem>>, %arg3: memref<128x1xf32, #tpu.memory_space<vmem>>, %arg4: memref<128x1xf32, #tpu.memory_space<vmem>>, %arg5: memref<64x128xbf16, #tpu.memory_space<vmem>>, %arg6: memref<1x64x384xbf16, #tpu.memory_space<vmem>>, %arg7: memref<1x1x64x1xf32, #tpu.memory_space<vmem>>, %arg8: memref<1x1x64x1xf32, #tpu.memory_space<vmem>>) attributes {dimension_semantics = [#tpu.dimension_semantics<parallel>, #tpu.dimension_semantics<parallel>], iteration_bounds = array<i64: 2, 1>, scalar_prefetch = 0 : i64, scratch_operands = 0 : i64, tpu.core_type = #tpu.core_type<tc>, window_params = [{transform_indices = @transform_0, window_bounds = array<i64: 1, 128, 384>}, {pipeline_mode = #tpu.pipeline_mode<synchronous>, transform_indices = @transform_1, window_bounds = array<i64: 128, 1>}, {pipeline_mode = #tpu.pipeline_mode<synchronous>, transform_indices = @transform_2, window_bounds = array<i64: 128, 1>}, {pipeline_mode = #tpu.pipeline_mode<synchronous>, transform_indices = @transform_3, window_bounds = array<i64: 64, 128>}, {transform_indices = @transform_4, window_bounds = array<i64: 1, 64, 384>}, {transform_indices = @transform_5, window_bounds = array<i64: 1, 1, 64, 1>}, {transform_indices = @transform_6, window_bounds = array<i64: 1, 1, 64, 1>}]} {
    %c0 = arith.constant 0 : index
    %c0_0 = arith.constant 0 : index
    %c0_1 = arith.constant 0 : index
    %0 = vector.load %arg2[%c0, %c0_0, %c0_1] : memref<1x128x384xbf16, #tpu.memory_space<vmem>>, vector<1x128x384xbf16>
    %1 = vector.shape_cast %0 : vector<1x128x384xbf16> to vector<128x384xbf16>
    %2 = arith.extf %1 : vector<128x384xbf16> to vector<128x384xf32>
    %c0_2 = arith.constant 0 : index
    %c0_3 = arith.constant 0 : index
    %3 = vector.load %arg3[%c0_2, %c0_3] : memref<128x1xf32, #tpu.memory_space<vmem>>, vector<128x1xf32>
    %4 = vector.broadcast %3 : vector<128x1xf32> to vector<128x384xf32>
    %5 = arith.mulf %2, %4 : vector<128x384xf32>
    %c0_4 = arith.constant 0 : index
    %c0_5 = arith.constant 0 : index
    %6 = vector.load %arg4[%c0_4, %c0_5] : memref<128x1xf32, #tpu.memory_space<vmem>>, vector<128x1xf32>
    %7 = vector.broadcast %6 : vector<128x1xf32> to vector<128x384xf32>
    %8 = arith.addf %5, %7 : vector<128x384xf32>
    %cst = arith.constant 0.000000e+00 : f32
    %9 = vector.broadcast %cst : f32 to vector<128x384xf32>
    %10 = arith.maximumf %8, %9 : vector<128x384xf32>
    %c384_i32 = arith.constant 384 : i32
    %11 = arith.muli %arg1, %c384_i32 : i32
    %12 = tpu.iota {dimensions = array<i32: 1>} : vector<1x384xi32>
    %13 = vector.broadcast %11 : i32 to vector<1x384xi32>
    %14 = arith.addi %13, %12 : vector<1x384xi32>
    %c300_i32 = arith.constant 300 : i32
    %15 = vector.broadcast %c300_i32 : i32 to vector<1x384xi32>
    %16 = arith.cmpi slt, %14, %15 : vector<1x384xi32>
    %cst_6 = arith.constant 0.000000e+00 : f32
    %17 = vector.shape_cast %16 : vector<1x384xi1> to vector<1x384xi1>
    %18 = vector.broadcast %17 : vector<1x384xi1> to vector<128x384xi1>
    %19 = vector.broadcast %cst_6 : f32 to vector<128x384xf32>
    %20 = arith.select %18, %10, %19 : vector<128x384xi1>, vector<128x384xf32>
    %c0_7 = arith.constant 0 : index
    %c0_8 = arith.constant 0 : index
    %21 = vector.load %arg5[%c0_7, %c0_8] : memref<64x128xbf16, #tpu.memory_space<vmem>>, vector<64x128xbf16>
    %22 = arith.truncf %20 : vector<128x384xf32> to vector<128x384xbf16>
    %cst_9 = arith.constant dense<0.000000e+00> : vector<64x384xf32>
    %23 = tpu.matmul %21, %22, %cst_9 {dimension_numbers = #tpu.dot_dimension_numbers<[1], [0], [0], [1], [0, 0, 1, 1], [], []>} : vector<64x128xbf16>, vector<128x384xbf16>, vector<64x384xf32> -> vector<64x384xf32>
    %24 = arith.truncf %23 : vector<64x384xf32> to vector<64x384xbf16>
    %c0_10 = arith.constant 0 : index
    %c0_11 = arith.constant 0 : index
    %c0_12 = arith.constant 0 : index
    %25 = vector.load %arg6[%c0_10, %c0_11, %c0_12] : memref<1x64x384xbf16, #tpu.memory_space<vmem>>, vector<1x64x384xbf16>
    %26 = vector.shape_cast %25 : vector<1x64x384xbf16> to vector<64x384xbf16>
    %27 = vector.shape_cast %24 : vector<64x384xbf16> to vector<1x64x384xbf16>
    tpu.vector_store %arg6[%c0_10, %c0_11, %c0_12], %27 {strides = array<i32>} : memref<1x64x384xbf16, #tpu.memory_space<vmem>>, vector<1x64x384xbf16>,
    %cst_13 = arith.constant dense<0.000000e+00> : vector<64xf32>
    %28 = vector.multi_reduction <add>, %23, %cst_13 [1] : vector<64x384xf32> to vector<64xf32>
    %29 = vector.shape_cast %28 : vector<64xf32> to vector<64x1xf32>
    %c0_14 = arith.constant 0 : index
    %c0_15 = arith.constant 0 : index
    %c0_16 = arith.constant 0 : index
    %c0_17 = arith.constant 0 : index
    %30 = vector.load %arg7[%c0_14, %c0_15, %c0_16, %c0_17] : memref<1x1x64x1xf32, #tpu.memory_space<vmem>>, vector<1x1x64x1xf32>
    %31 = vector.shape_cast %30 : vector<1x1x64x1xf32> to vector<64x1xf32>
    %32 = vector.shape_cast %29 : vector<64x1xf32> to vector<1x1x64x1xf32>
    tpu.vector_store %arg7[%c0_14, %c0_15, %c0_16, %c0_17], %32 {strides = array<i32>} : memref<1x1x64x1xf32, #tpu.memory_space<vmem>>, vector<1x1x64x1xf32>,
    %33 = arith.mulf %23, %23 : vector<64x384xf32>
    %cst_18 = arith.constant dense<0.000000e+00> : vector<64xf32>
    %34 = vector.multi_reduction <add>, %33, %cst_18 [1] : vector<64x384xf32> to vector<64xf32>
    %35 = vector.shape_cast %34 : vector<64xf32> to vector<64x1xf32>
    %c0_19 = arith.constant 0 : index
    %c0_20 = arith.constant 0 : index
    %c0_21 = arith.constant 0 : index
    %c0_22 = arith.constant 0 : index
    %36 = vector.load %arg8[%c0_19, %c0_20, %c0_21, %c0_22] : memref<1x1x64x1xf32, #tpu.memory_space<vmem>>, vector<1x1x64x1xf32>
    %37 = vector.shape_cast %36 : vector<1x1x64x1xf32> to vector<64x1xf32>
    %38 = vector.shape_cast %35 : vector<64x1xf32> to vector<1x1x64x1xf32>
    tpu.vector_store %arg8[%c0_19, %c0_20, %c0_21, %c0_22], %38 {strides = array<i32>} : memref<1x1x64x1xf32, #tpu.memory_space<vmem>>, vector<1x1x64x1xf32>,
    return
  }
  func.func @transform_0(%arg0: i32, %arg1: i32) -> (i32, i32, i32) {
    %c0_i32 = arith.constant 0 : i32
    %c0_i32_0 = arith.constant 0 : i32
    return %arg0, %c0_i32, %arg1 : i32, i32, i32
  }
  func.func @transform_1(%arg0: i32, %arg1: i32) -> (i32, i32) {
    %c0_i32 = arith.constant 0 : i32
    %c0_i32_0 = arith.constant 0 : i32
    %c0_i32_1 = arith.constant 0 : i32
    return %c0_i32, %c0_i32_0 : i32, i32
  }
  func.func @transform_2(%arg0: i32, %arg1: i32) -> (i32, i32) {
    %c0_i32 = arith.constant 0 : i32
    %c0_i32_0 = arith.constant 0 : i32
    %c0_i32_1 = arith.constant 0 : i32
    return %c0_i32, %c0_i32_0 : i32, i32
  }
  func.func @transform_3(%arg0: i32, %arg1: i32) -> (i32, i32) {
    %c0_i32 = arith.constant 0 : i32
    %c0_i32_0 = arith.constant 0 : i32
    %c0_i32_1 = arith.constant 0 : i32
    return %c0_i32, %c0_i32_0 : i32, i32
  }
  func.func @transform_4(%arg0: i32, %arg1: i32) -> (i32, i32, i32) {
    %c0_i32 = arith.constant 0 : i32
    %c0_i32_0 = arith.constant 0 : i32
    return %arg0, %c0_i32, %arg1 : i32, i32, i32
  }
  func.func @transform_5(%arg0: i32, %arg1: i32) -> (i32, i32, i32, i32) {
    %c0_i32 = arith.constant 0 : i32
    %c0_i32_0 = arith.constant 0 : i32
    %c0_i32_1 = arith.constant 0 : i32
    return %arg0, %arg1, %c0_i32, %c0_i32_0 : i32, i32, i32, i32
  }
  func.func @transform_6(%arg0: i32, %arg1: i32) -> (i32, i32, i32, i32) {
    %c0_i32 = arith.constant 0 : i32
    %c0_i32_0 = arith.constant 0 : i32
    %c0_i32_1 = arith.constant 0 : i32
    return %arg0, %arg1, %c0_i32, %c0_i32_0 : i32, i32, i32, i32
  }
}

module attributes {stable_mosaic.version = 11 : i64} {
  func.func @_last_layer_kernel(%arg0: i32, %arg1: i32, %arg2: memref<1x64x384xbf16, #tpu.memory_space<vmem>>, %arg3: memref<64x1xf32, #tpu.memory_space<vmem>>, %arg4: memref<64x1xf32, #tpu.memory_space<vmem>>, %arg5: memref<8x64xbf16, #tpu.memory_space<vmem>>, %arg6: memref<8x1xf32, #tpu.memory_space<vmem>>, %arg7: memref<1x8x384xf32, #tpu.memory_space<vmem>>) attributes {dimension_semantics = [#tpu.dimension_semantics<parallel>, #tpu.dimension_semantics<parallel>], iteration_bounds = array<i64: 2, 1>, scalar_prefetch = 0 : i64, scratch_operands = 0 : i64, tpu.core_type = #tpu.core_type<tc>, window_params = [{transform_indices = @transform_0, window_bounds = array<i64: 1, 64, 384>}, {pipeline_mode = #tpu.pipeline_mode<synchronous>, transform_indices = @transform_1, window_bounds = array<i64: 64, 1>}, {pipeline_mode = #tpu.pipeline_mode<synchronous>, transform_indices = @transform_2, window_bounds = array<i64: 64, 1>}, {pipeline_mode = #tpu.pipeline_mode<synchronous>, transform_indices = @transform_3, window_bounds = array<i64: 8, 64>}, {pipeline_mode = #tpu.pipeline_mode<synchronous>, transform_indices = @transform_4, window_bounds = array<i64: 8, 1>}, {transform_indices = @transform_5, window_bounds = array<i64: 1, 8, 384>}]} {
    %c0 = arith.constant 0 : index
    %c0_0 = arith.constant 0 : index
    %c0_1 = arith.constant 0 : index
    %0 = vector.load %arg2[%c0, %c0_0, %c0_1] : memref<1x64x384xbf16, #tpu.memory_space<vmem>>, vector<1x64x384xbf16>
    %1 = vector.shape_cast %0 : vector<1x64x384xbf16> to vector<64x384xbf16>
    %2 = arith.extf %1 : vector<64x384xbf16> to vector<64x384xf32>
    %c0_2 = arith.constant 0 : index
    %c0_3 = arith.constant 0 : index
    %3 = vector.load %arg3[%c0_2, %c0_3] : memref<64x1xf32, #tpu.memory_space<vmem>>, vector<64x1xf32>
    %4 = vector.broadcast %3 : vector<64x1xf32> to vector<64x384xf32>
    %5 = arith.mulf %2, %4 : vector<64x384xf32>
    %c0_4 = arith.constant 0 : index
    %c0_5 = arith.constant 0 : index
    %6 = vector.load %arg4[%c0_4, %c0_5] : memref<64x1xf32, #tpu.memory_space<vmem>>, vector<64x1xf32>
    %7 = vector.broadcast %6 : vector<64x1xf32> to vector<64x384xf32>
    %8 = arith.addf %5, %7 : vector<64x384xf32>
    %cst = arith.constant 0.000000e+00 : f32
    %9 = vector.broadcast %cst : f32 to vector<64x384xf32>
    %10 = arith.maximumf %8, %9 : vector<64x384xf32>
    %c0_6 = arith.constant 0 : index
    %c0_7 = arith.constant 0 : index
    %11 = vector.load %arg5[%c0_6, %c0_7] : memref<8x64xbf16, #tpu.memory_space<vmem>>, vector<8x64xbf16>
    %12 = arith.truncf %10 : vector<64x384xf32> to vector<64x384xbf16>
    %cst_8 = arith.constant dense<0.000000e+00> : vector<8x384xf32>
    %13 = tpu.matmul %11, %12, %cst_8 {dimension_numbers = #tpu.dot_dimension_numbers<[1], [0], [0], [1], [0, 0, 1, 1], [], []>} : vector<8x64xbf16>, vector<64x384xbf16>, vector<8x384xf32> -> vector<8x384xf32>
    %c0_9 = arith.constant 0 : index
    %c0_10 = arith.constant 0 : index
    %14 = vector.load %arg6[%c0_9, %c0_10] : memref<8x1xf32, #tpu.memory_space<vmem>>, vector<8x1xf32>
    %15 = vector.broadcast %14 : vector<8x1xf32> to vector<8x384xf32>
    %16 = arith.addf %13, %15 : vector<8x384xf32>
    %17 = math.tanh %16 : vector<8x384xf32>
    %c0_11 = arith.constant 0 : index
    %c0_12 = arith.constant 0 : index
    %c0_13 = arith.constant 0 : index
    %18 = vector.load %arg7[%c0_11, %c0_12, %c0_13] : memref<1x8x384xf32, #tpu.memory_space<vmem>>, vector<1x8x384xf32>
    %19 = vector.shape_cast %18 : vector<1x8x384xf32> to vector<8x384xf32>
    %20 = vector.shape_cast %17 : vector<8x384xf32> to vector<1x8x384xf32>
    tpu.vector_store %arg7[%c0_11, %c0_12, %c0_13], %20 {strides = array<i32>} : memref<1x8x384xf32, #tpu.memory_space<vmem>>, vector<1x8x384xf32>,
    return
  }
  func.func @transform_0(%arg0: i32, %arg1: i32) -> (i32, i32, i32) {
    %c0_i32 = arith.constant 0 : i32
    %c0_i32_0 = arith.constant 0 : i32
    return %arg0, %c0_i32, %arg1 : i32, i32, i32
  }
  func.func @transform_1(%arg0: i32, %arg1: i32) -> (i32, i32) {
    %c0_i32 = arith.constant 0 : i32
    %c0_i32_0 = arith.constant 0 : i32
    %c0_i32_1 = arith.constant 0 : i32
    return %c0_i32, %c0_i32_0 : i32, i32
  }
  func.func @transform_2(%arg0: i32, %arg1: i32) -> (i32, i32) {
    %c0_i32 = arith.constant 0 : i32
    %c0_i32_0 = arith.constant 0 : i32
    %c0_i32_1 = arith.constant 0 : i32
    return %c0_i32, %c0_i32_0 : i32, i32
  }
  func.func @transform_3(%arg0: i32, %arg1: i32) -> (i32, i32) {
    %c0_i32 = arith.constant 0 : i32
    %c0_i32_0 = arith.constant 0 : i32
    %c0_i32_1 = arith.constant 0 : i32
    return %c0_i32, %c0_i32_0 : i32, i32
  }
  func.func @transform_4(%arg0: i32, %arg1: i32) -> (i32, i32) {
    %c0_i32 = arith.constant 0 : i32
    %c0_i32_0 = arith.constant 0 : i32
    %c0_i32_1 = arith.constant 0 : i32
    return %c0_i32, %c0_i32_0 : i32, i32
  }
  func.func @transform_5(%arg0: i32, %arg1: i32) -> (i32, i32, i32) {
    %c0_i32 = arith.constant 0 : i32
    %c0_i32_0 = arith.constant 0 : i32
    return %arg0, %c0_i32, %arg1 : i32, i32, i32
  }
}

</mosaic_0001>

<llo_original>
// kernel: mul.30
$region0: #{mul.30}
  #allocation0 [shape = 's32[1]{0}', space=sflag, size = 0x4, scoped, tag = 'scoped memory for mul.30']
  %s0 = inlined_call_operand.vmem [shape: f32[256,1], index: 0, kind: input, shape index: {}, may-alias: {0,1}]
  %s1 = inlined_call_operand.vmem [shape: f32[256,1], index: 1, kind: input, shape index: {}, may-alias: {0,1}]
  %s2 = inlined_call_operand.vmem [shape: f32[256,1], index: 2, kind: output, shape index: {}]
  %v3 = vld [vmem:[%s0] sm:$0x1]
  %v4 = vld [vmem:[%s1] sm:$0x1]
  %5 = xla_tuple %v3, %v4
  %6 = xla_tuple %5
  %v7 = vmul.f32 %v3, %v4
  %8 = xla_tuple %v7
  %9 = vst [vmem:[%s2] sm:$0x1] %v7
  %s10 = scalar_lea.vmem %s0, 1
  %v11 = vld [vmem:[%s10] sm:$0x1]
  %s12 = scalar_lea.vmem %s1, 1
  %v13 = vld [vmem:[%s12] sm:$0x1]
  %14 = xla_tuple %v11, %v13
  %15 = xla_tuple %14
  %v16 = vmul.f32 %v11, %v13
  %17 = xla_tuple %v16
  %s18 = scalar_lea.vmem %s2, 1
  %19 = vst [vmem:[%s18] sm:$0x1] %v16

// kernel: point_gen_con.4
$region0: #{point_gen_con.4}
  #allocation0 [shape = 'u32[]', space=smem, size = 0x4, offset = 0x4, fixed_abs, tag = 'smem constant byte address 0x4 - core index']
  #allocation1 [shape = 'u32[144,128]{1,0:T(1,128)}', space=vmem, size = 0x12000, scoped, tag = 'internal scratch']
  %s0 = inlined_call_operand.vmem [shape: bf16[2,256,384], index: 0, kind: input, shape index: {}]
  %s1 = inlined_call_operand.vmem [shape: bf16[256,256], index: 1, kind: input, shape index: {}]
  %s2 = inlined_call_operand.vmem [shape: bf16[2,256,384], index: 2, kind: output, shape index: {0}]
  %s3 = inlined_call_operand.vmem [shape: f32[2,1,256,1], index: 3, kind: output, shape index: {1}]
  %s4 = inlined_call_operand.vmem [shape: f32[2,1,256,1], index: 4, kind: output, shape index: {2}]
  %5 = xla_tuple %s2, %s3, %s4
  %s6 = sld [smem:[#allocation0]]
  $region57: #{point_gen_con.4} parent=0
    _
  %s8 = ssub.s32 1, %s6
  %s9 = scalar_select 0, %s8, %s6
  loop: start=0, step=1, limit=4
  $region2: #{point_gen_con.4} parent=0 // loop_pre_header
    _
  $region3: #{point_gen_con.4} parent=0 // loop_header
    %s11 = sphi 0, %s15
    %p12 = scmp.ge.s32.totalorder %s11, 4
    %s18 = sphi 0, %s30
    %s19 = sphi 0, %s26
    %s20 = sphi 0, %s18
    %s21 = sphi 0, %s19
    %s22 = sphi 0, %s20
    %s23 = sphi 0, %s21
    %s35 = sphi 0, %s37
    %s38 = sphi 0, %s35
    %s39 = sphi 0, %s38
    %s55 = sphi 0, %s39
    %s59 = sphi 0, %s59
    %s61 = sphi 0, %s59
    %s62 = sphi 0, %s61
    %s76 = sphi 0, %s62
    %s84 = sphi 0, %s86
    %s87 = sphi 0, %s84
    %s88 = sphi 0, %s87
    %s104 = sphi 0, %s88
    %s112 = sphi 0, %s114
    %s115 = sphi 0, %s112
    %s116 = sphi 0, %s115
    %s132 = sphi 0, %s116
    %s140 = sphi 0, %s142
    %s143 = sphi 0, %s140
    %s144 = sphi 0, %s143
    %s160 = sphi 0, %s144
  $region4: #{point_gen_con.4} parent=0 // loop_header_branch
    %14 = sbr.rel (%p12) target = $region8
  $region5: #{point_gen_con.4} parent=0 // loop_body
    %s16 = ssub.s32 %s11, 1
    %s17 = ssub.s32 %s11, 2
    %s24 = sadd.s32 1, %s19
    %p25 = scmp.ge.s32.totalorder %s24, 1
    %s26 = scalar_select %p25, 0, %s24
    %s27 = sadd.s32 1, %s18
    %s28 = scalar_select %p25, %s27, %s18
    %p29 = scmp.ge.s32.totalorder %s28, 2
    %s30 = scalar_select %p29, 0, %s28
    %s31 = ssub.s32 %s18, %s30
    %s32 = ssub.s32 %s19, %s26
    %s33 = sor.u32 %s31, %s32
    %p34 = scmp.eq.s32.totalorder %s33, 0
    %s36 = sadd.s32 %s35, 1
    %s37 = scalar_select %p34, %s35, %s36
    %p40 = pneg %p34
    %p41 = scmp.eq.s32.totalorder %s11, 1
    %p42 = por %p40, %p41
    %p43 = scmp.ne.s32.totalorder %s35, %s38
    %p44 = scmp.eq.s32.totalorder %s11, 0
    %p45 = por %p43, %p44
    %p46 = scmp.ne.s32.totalorder %s35, %s38
    %p47 = scmp.eq.s32.totalorder %s16, 1
    %p48 = por %p46, %p47
    %p49 = scmp.ne.s32.totalorder %s38, %s39
    %p50 = scmp.eq.s32.totalorder %s16, 0
    %p51 = por %p49, %p50
    %p52 = scmp.ne.s32.totalorder %s38, %s39
    %p53 = scmp.eq.s32.totalorder %s17, 1
    %p54 = por %p52, %p53
    %p56 = scmp.ne.s32.totalorder %s39, %s55
    %p57 = scmp.eq.s32.totalorder %s17, 0
    %p58 = por %p56, %p57
    %s60 = sadd.s32 %s59, 1
    %p63 = scmp.eq.s32.totalorder %s11, 1
    %p64 = scmp.ne.s32.totalorder %s59, %s61
    %p65 = scmp.eq.s32.totalorder %s11, 0
    %p66 = por %p64, %p65
    %p67 = scmp.ne.s32.totalorder %s59, %s61
    %p68 = scmp.eq.s32.totalorder %s16, 1
    %p69 = por %p67, %p68
    %p70 = scmp.ne.s32.totalorder %s61, %s62
    %p71 = scmp.eq.s32.totalorder %s16, 0
    %p72 = por %p70, %p71
    %p73 = scmp.ne.s32.totalorder %s61, %s62
    %p74 = scmp.eq.s32.totalorder %s17, 1
    %p75 = por %p73, %p74
    %p77 = scmp.ne.s32.totalorder %s62, %s76
    %p78 = scmp.eq.s32.totalorder %s17, 0
    %p79 = por %p77, %p78
    %s80 = ssub.s32 %s18, %s30
    %s81 = ssub.s32 %s19, %s26
    %s82 = sor.u32 %s80, %s81
    %p83 = scmp.eq.s32.totalorder %s82, 0
    %s85 = sadd.s32 %s84, 1
    %s86 = scalar_select %p83, %s84, %s85
    %p89 = pneg %p83
    %p90 = scmp.eq.s32.totalorder %s11, 1
    %p91 = por %p89, %p90
    %p92 = scmp.ne.s32.totalorder %s84, %s87
    %p93 = scmp.eq.s32.totalorder %s11, 0
    %p94 = por %p92, %p93
    %p95 = scmp.ne.s32.totalorder %s84, %s87
    %p96 = scmp.eq.s32.totalorder %s16, 1
    %p97 = por %p95, %p96
    %p98 = scmp.ne.s32.totalorder %s87, %s88
    %p99 = scmp.eq.s32.totalorder %s16, 0
    %p100 = por %p98, %p99
    %p101 = scmp.ne.s32.totalorder %s87, %s88
    %p102 = scmp.eq.s32.totalorder %s17, 1
    %p103 = por %p101, %p102
    %p105 = scmp.ne.s32.totalorder %s88, %s104
    %p106 = scmp.eq.s32.totalorder %s17, 0
    %p107 = por %p105, %p106
    %s108 = ssub.s32 %s18, %s30
    %s109 = ssub.s32 %s19, %s26
    %s110 = sor.u32 %s108, %s109
    %p111 = scmp.eq.s32.totalorder %s110, 0
    %s113 = sadd.s32 %s112, 1
    %s114 = scalar_select %p111, %s112, %s113
    %p117 = pneg %p111
    %p118 = scmp.eq.s32.totalorder %s11, 1
    %p119 = por %p117, %p118
    %p120 = scmp.ne.s32.totalorder %s112, %s115
    %p121 = scmp.eq.s32.totalorder %s11, 0
    %p122 = por %p120, %p121
    %p123 = scmp.ne.s32.totalorder %s112, %s115
    %p124 = scmp.eq.s32.totalorder %s16, 1
    %p125 = por %p123, %p124
    %p126 = scmp.ne.s32.totalorder %s115, %s116
    %p127 = scmp.eq.s32.totalorder %s16, 0
    %p128 = por %p126, %p127
    %p129 = scmp.ne.s32.totalorder %s115, %s116
    %p130 = scmp.eq.s32.totalorder %s17, 1
    %p131 = por %p129, %p130
    %p133 = scmp.ne.s32.totalorder %s116, %s132
    %p134 = scmp.eq.s32.totalorder %s17, 0
    %p135 = por %p133, %p134
    %s136 = ssub.s32 %s18, %s30
    %s137 = ssub.s32 %s19, %s26
    %s138 = sor.u32 %s136, %s137
    %p139 = scmp.eq.s32.totalorder %s138, 0
    %s141 = sadd.s32 %s140, 1
    %s142 = scalar_select %p139, %s140, %s141
    %p145 = pneg %p139
    %p146 = scmp.eq.s32.totalorder %s11, 1
    %p147 = por %p145, %p146
    %p148 = scmp.ne.s32.totalorder %s140, %s143
    %p149 = scmp.eq.s32.totalorder %s11, 0
    %p150 = por %p148, %p149
    %p151 = scmp.ne.s32.totalorder %s140, %s143
    %p152 = scmp.eq.s32.totalorder %s16, 1
    %p153 = por %p151, %p152
    %p154 = scmp.ne.s32.totalorder %s143, %s144
    %p155 = scmp.eq.s32.totalorder %s16, 0
    %p156 = por %p154, %p155
    %p157 = scmp.ne.s32.totalorder %s143, %s144
    %p158 = scmp.eq.s32.totalorder %s17, 1
    %p159 = por %p157, %p158
    %p161 = scmp.ne.s32.totalorder %s144, %s160
    %p162 = scmp.eq.s32.totalorder %s17, 0
    %p163 = por %p161, %p162
    %p164 = scmp.le.s32.totalorder 1, %s11
    %p165 = scmp.lt.s32.totalorder %s11, 3
    %p166 = pnand %p164, %p165
    %p167 = pneg %p166
    // Predicated region
    $region9: #{point_gen_con.4} parent=5 // pred_check
      _
    $region10: #{point_gen_con.4} parent=5 // pred_check_branch
      %169 = sbr.rel (%p166) target = $region12
    $region11: #{point_gen_con.4} parent=5 // pred_region
      %s170 = ssub.s32 %s11, 1
      // Predicated region
      $region13: #{point_gen_con.4} parent=11 // pred_check
        %p171 = pneg %p72
      $region14: #{point_gen_con.4} parent=11 // pred_check_branch
        %173 = sbr.rel (%p171) target = $region16
      $region15: #{point_gen_con.4} parent=11 // pred_region
        _
      $region16: #{point_gen_con.4} parent=11 // pred_fallthru
        _
    $region12: #{point_gen_con.4} parent=5 // pred_fallthru
      _
    %p174 = scmp.lt.s32.totalorder %s11, 2
    // Predicated region
    $region17: #{point_gen_con.4} parent=5 // pred_check
      %p175 = pneg %p174
    $region18: #{point_gen_con.4} parent=5 // pred_check_branch
      %177 = sbr.rel (%p175) target = $region20
    $region19: #{point_gen_con.4} parent=5 // pred_region
      // Predicated region
      $region21: #{point_gen_con.4} parent=19 // pred_check
        %p178 = pneg %p45
      $region22: #{point_gen_con.4} parent=19 // pred_check_branch
        %180 = sbr.rel (%p178) target = $region24
      $region23: #{point_gen_con.4} parent=19 // pred_region
        %s181 = smul.u32 3, %s19
        %p182 = scmp.lt.s32.totalorder %s18, 1
        %s183 = scalar_select %p182, %s18, 1
        %p184 = scmp.lt.s32.totalorder %s181, 2
        %s185 = scalar_select %p184, %s181, 2
        %s186 = smul.addr %s183, 96
        %s187 = sadd.s32 %s185, %s186
        %s188 = smul.addr %s187, 4
        %s189 = scalar_lea.vmem %s0, %s188
        %s190 = smul.u32 3, %s19
      $region24: #{point_gen_con.4} parent=19 // pred_fallthru
        _
    $region20: #{point_gen_con.4} parent=5 // pred_fallthru
      _
    %p191 = scmp.le.s32.totalorder 1, %s11
    %p192 = scmp.lt.s32.totalorder %s11, 3
    %p193 = pnand %p191, %p192
    %p194 = pneg %p193
    // Predicated region
    $region25: #{point_gen_con.4} parent=5 // pred_check
      _
    $region26: #{point_gen_con.4} parent=5 // pred_check_branch
      %196 = sbr.rel (%p193) target = $region28
    $region27: #{point_gen_con.4} parent=5 // pred_region
      %s197 = ssub.s32 %s11, 1
      %s198 = smul.u32 3, %s21
      %p199 = scmp.lt.s32.totalorder %s20, 1
      %s200 = scalar_select %p199, %s20, 1
      %p201 = scmp.lt.s32.totalorder %s198, 2
      %s202 = scalar_select %p201, %s198, 2
      %s203 = smul.addr %s200, 96
      %s204 = sadd.s32 %s202, %s203
      %s205 = smul.addr %s204, 4
      %s206 = scalar_lea.vmem %s0, %s205
      %p207 = pneg %p51
      %p208 = pneg %p48
      %p209 = pneg %p72
      %p210 = pneg %p69
      %p211 = pneg %p100
      %p212 = pneg %p97
      %s213 = smul.u32 3, %s21
      %p214 = scmp.lt.s32.totalorder %s20, 1
      %s215 = scalar_select %p214, %s20, 1
      %p216 = scmp.lt.s32.totalorder %s213, 2
      %s217 = scalar_select %p216, %s213, 2
      %s218 = smul.addr %s215, 96
      %s219 = sadd.s32 %s217, %s218
      %s220 = smul.addr %s219, 4
      %s221 = scalar_lea.vmem %s2, %s220
      %p222 = pneg %p128
      %p223 = pneg %p125
      %p224 = scmp.lt.s32.totalorder %s20, 1
      %s225 = scalar_select %p224, %s20, 1
      %p226 = scmp.lt.s32.totalorder %s21, 0
      %s227 = scalar_select %p226, %s21, 0
      %s228 = smul.addr %s227, 32
      %s229 = smul.addr %s225, 32
      %s230 = sadd.s32 %s228, %s229
      %s231 = smul.addr %s230, 8
      %s232 = scalar_lea.vmem %s3, %s231
      %p233 = pneg %p156
      %p234 = pneg %p153
      %p235 = scmp.lt.s32.totalorder %s20, 1
      %s236 = scalar_select %p235, %s20, 1
      %p237 = scmp.lt.s32.totalorder %s21, 0
      %s238 = scalar_select %p237, %s21, 0
      %s239 = smul.addr %s238, 32
      %s240 = smul.addr %s236, 32
      %s241 = sadd.s32 %s239, %s240
      %s242 = smul.addr %s241, 8
      %s243 = scalar_lea.vmem %s4, %s242
      %s244 = smul.u32 3, %s21
      %p245 = scmp.lt.s32.totalorder %s20, 1
      %s246 = scalar_select %p245, %s20, 1
      %p247 = scmp.lt.s32.totalorder %s244, 2
      %s248 = scalar_select %p247, %s244, 2
      %s249 = smul.addr %s246, 96
      %s250 = sadd.s32 %s248, %s249
      %s251 = smul.addr %s250, 4
      %s252 = scalar_lea.vmem %s0, %s251
      %s253 = smul.u32 3, %s21
      %s254 = smul.u32 3, %s21
      %p255 = scmp.lt.s32.totalorder %s20, 1
      %s256 = scalar_select %p255, %s20, 1
      %p257 = scmp.lt.s32.totalorder %s254, 2
      %s258 = scalar_select %p257, %s254, 2
      %s259 = smul.addr %s256, 96
      %s260 = sadd.s32 %s258, %s259
      %s261 = smul.addr %s260, 4
      %s262 = scalar_lea.vmem %s2, %s261
      %s263 = smul.u32 3, %s21
      %p264 = scmp.lt.s32.totalorder %s20, 1
      %s265 = scalar_select %p264, %s20, 1
      %p266 = scmp.lt.s32.totalorder %s21, 0
      %s267 = scalar_select %p266, %s21, 0
      %s268 = smul.addr %s267, 32
      %s269 = smul.addr %s265, 32
      %s270 = sadd.s32 %s268, %s269
      %s271 = smul.addr %s270, 8
      %s272 = scalar_lea.vmem %s3, %s271
      %p273 = scmp.lt.s32.totalorder %s20, 1
      %s274 = scalar_select %p273, %s20, 1
      %p275 = scmp.lt.s32.totalorder %s21, 0
      %s276 = scalar_select %p275, %s21, 0
      %s277 = smul.addr %s276, 32
      %s278 = smul.addr %s274, 32
      %s279 = sadd.s32 %s277, %s278
      %s280 = smul.addr %s279, 8
      %s281 = scalar_lea.vmem %s4, %s280
      %v283 = vld [vmem:[%s1] sm:$0xff]
      %v284 = vld [vmem:[%s1 + $0x8] sm:$0xff]
      %v285 = vld [vmem:[%s1 + $0x10] sm:$0xff]
      %v286 = vld [vmem:[%s1 + $0x18] sm:$0xff]
      %v287 = vld [vmem:[%s1 + $0x20] sm:$0xff]
      %v288 = vld [vmem:[%s1 + $0x28] sm:$0xff]
      %v289 = vld [vmem:[%s1 + $0x30] sm:$0xff]
      %v290 = vld [vmem:[%s1 + $0x38] sm:$0xff]
      %v291 = vld [vmem:[%s1 + $0x40] sm:$0xff]
      %v292 = vld [vmem:[%s1 + $0x48] sm:$0xff]
      %v293 = vld [vmem:[%s1 + $0x50] sm:$0xff]
      %v294 = vld [vmem:[%s1 + $0x58] sm:$0xff]
      %v295 = vld [vmem:[%s1 + $0x60] sm:$0xff]
      %v296 = vld [vmem:[%s1 + $0x68] sm:$0xff]
      %v297 = vld [vmem:[%s1 + $0x70] sm:$0xff]
      %v298 = vld [vmem:[%s1 + $0x78] sm:$0xff]
      %v299 = vld [vmem:[%s1 + $0x80] sm:$0xff]
      %v300 = vld [vmem:[%s1 + $0x88] sm:$0xff]
      %v301 = vld [vmem:[%s1 + $0x90] sm:$0xff]
      %v302 = vld [vmem:[%s1 + $0x98] sm:$0xff]
      %v303 = vld [vmem:[%s1 + $0xa0] sm:$0xff]
      %v304 = vld [vmem:[%s1 + $0xa8] sm:$0xff]
      %v305 = vld [vmem:[%s1 + $0xb0] sm:$0xff]
      %v306 = vld [vmem:[%s1 + $0xb8] sm:$0xff]
      %v307 = vld [vmem:[%s1 + $0xc0] sm:$0xff]
      %v308 = vld [vmem:[%s1 + $0xc8] sm:$0xff]
      %v309 = vld [vmem:[%s1 + $0xd0] sm:$0xff]
      %v310 = vld [vmem:[%s1 + $0xd8] sm:$0xff]
      %v311 = vld [vmem:[%s1 + $0xe0] sm:$0xff]
      %v312 = vld [vmem:[%s1 + $0xe8] sm:$0xff]
      %v313 = vld [vmem:[%s1 + $0xf0] sm:$0xff]
      %v314 = vld [vmem:[%s1 + $0xf8] sm:$0xff]
      %v315 = vld [vmem:[%s252] sm:$0xff]
      %v316 = vld [vmem:[%s252 + $0x8] sm:$0xf]
      %v317 = vld [vmem:[%s252 + $0xc] sm:$0xff]
      %v318 = vld [vmem:[%s252 + $0x14] sm:$0xf]
      %v319 = vld [vmem:[%s252 + $0x18] sm:$0xff]
      %v320 = vld [vmem:[%s252 + $0x20] sm:$0xf]
      %v321 = vld [vmem:[%s252 + $0x24] sm:$0xff]
      %v322 = vld [vmem:[%s252 + $0x2c] sm:$0xf]
      %v323 = vld [vmem:[%s252 + $0x30] sm:$0xff]
      %v324 = vld [vmem:[%s252 + $0x38] sm:$0xf]
      %v325 = vld [vmem:[%s252 + $0x3c] sm:$0xff]
      %v326 = vld [vmem:[%s252 + $0x44] sm:$0xf]
      %v327 = vld [vmem:[%s252 + $0x48] sm:$0xff]
      %v328 = vld [vmem:[%s252 + $0x50] sm:$0xf]
      %v329 = vld [vmem:[%s252 + $0x54] sm:$0xff]
      %v330 = vld [vmem:[%s252 + $0x5c] sm:$0xf]
      %v331 = vld [vmem:[%s252 + $0x60] sm:$0xff]
      %v332 = vld [vmem:[%s252 + $0x68] sm:$0xf]
      %v333 = vld [vmem:[%s252 + $0x6c] sm:$0xff]
      %v334 = vld [vmem:[%s252 + $0x74] sm:$0xf]
      %v335 = vld [vmem:[%s252 + $0x78] sm:$0xff]
      %v336 = vld [vmem:[%s252 + $0x80] sm:$0xf]
      %v337 = vld [vmem:[%s252 + $0x84] sm:$0xff]
      %v338 = vld [vmem:[%s252 + $0x8c] sm:$0xf]
      %v339 = vld [vmem:[%s252 + $0x90] sm:$0xff]
      %v340 = vld [vmem:[%s252 + $0x98] sm:$0xf]
      %v341 = vld [vmem:[%s252 + $0x9c] sm:$0xff]
      %v342 = vld [vmem:[%s252 + $0xa4] sm:$0xf]
      %v343 = vld [vmem:[%s252 + $0xa8] sm:$0xff]
      %v344 = vld [vmem:[%s252 + $0xb0] sm:$0xf]
      %v345 = vld [vmem:[%s252 + $0xb4] sm:$0xff]
      %v346 = vld [vmem:[%s252 + $0xbc] sm:$0xf]
      %v347 = vld [vmem:[%s252 + $0xc0] sm:$0xff]
      %v348 = vld [vmem:[%s252 + $0xc8] sm:$0xf]
      %v349 = vld [vmem:[%s252 + $0xcc] sm:$0xff]
      %v350 = vld [vmem:[%s252 + $0xd4] sm:$0xf]
      %v351 = vld [vmem:[%s252 + $0xd8] sm:$0xff]
      %v352 = vld [vmem:[%s252 + $0xe0] sm:$0xf]
      %v353 = vld [vmem:[%s252 + $0xe4] sm:$0xff]
      %v354 = vld [vmem:[%s252 + $0xec] sm:$0xf]
      %v355 = vld [vmem:[%s252 + $0xf0] sm:$0xff]
      %v356 = vld [vmem:[%s252 + $0xf8] sm:$0xf]
      %v357 = vld [vmem:[%s252 + $0xfc] sm:$0xff]
      %v358 = vld [vmem:[%s252 + $0x104] sm:$0xf]
      %v359 = vld [vmem:[%s252 + $0x108] sm:$0xff]
      %v360 = vld [vmem:[%s252 + $0x110] sm:$0xf]
      %v361 = vld [vmem:[%s252 + $0x114] sm:$0xff]
      %v362 = vld [vmem:[%s252 + $0x11c] sm:$0xf]
      %v363 = vld [vmem:[%s252 + $0x120] sm:$0xff]
      %v364 = vld [vmem:[%s252 + $0x128] sm:$0xf]
      %v365 = vld [vmem:[%s252 + $0x12c] sm:$0xff]
      %v366 = vld [vmem:[%s252 + $0x134] sm:$0xf]
      %v367 = vld [vmem:[%s252 + $0x138] sm:$0xff]
      %v368 = vld [vmem:[%s252 + $0x140] sm:$0xf]
      %v369 = vld [vmem:[%s252 + $0x144] sm:$0xff]
      %v370 = vld [vmem:[%s252 + $0x14c] sm:$0xf]
      %v371 = vld [vmem:[%s252 + $0x150] sm:$0xff]
      %v372 = vld [vmem:[%s252 + $0x158] sm:$0xf]
      %v373 = vld [vmem:[%s252 + $0x15c] sm:$0xff]
      %v374 = vld [vmem:[%s252 + $0x164] sm:$0xf]
      %v375 = vld [vmem:[%s252 + $0x168] sm:$0xff]
      %v376 = vld [vmem:[%s252 + $0x170] sm:$0xf]
      %v377 = vld [vmem:[%s252 + $0x174] sm:$0xff]
      %v378 = vld [vmem:[%s252 + $0x17c] sm:$0xf]
      %v411 = vunpack.c.l.b16 %v283
      %v412 = vunpack.c.h.b16 %v283
      %v413 = vunpack.c.l.b16 %v284
      %v414 = vunpack.c.h.b16 %v284
      %v415 = vunpack.c.l.b16 %v285
      %v416 = vunpack.c.h.b16 %v285
      %v417 = vunpack.c.l.b16 %v286
      %v418 = vunpack.c.h.b16 %v286
      %v419 = vunpack.c.l.b16 %v287
      %v420 = vunpack.c.h.b16 %v287
      %v421 = vunpack.c.l.b16 %v288
      %v422 = vunpack.c.h.b16 %v288
      %v423 = vunpack.c.l.b16 %v289
      %v424 = vunpack.c.h.b16 %v289
      %v425 = vunpack.c.l.b16 %v290
      %v426 = vunpack.c.h.b16 %v290
      %v427 = vunpack.c.l.b16 %v291
      %v428 = vunpack.c.h.b16 %v291
      %v429 = vunpack.c.l.b16 %v292
      %v430 = vunpack.c.h.b16 %v292
      %v431 = vunpack.c.l.b16 %v293
      %v432 = vunpack.c.h.b16 %v293
      %v433 = vunpack.c.l.b16 %v294
      %v434 = vunpack.c.h.b16 %v294
      %v435 = vunpack.c.l.b16 %v295
      %v436 = vunpack.c.h.b16 %v295
      %v437 = vunpack.c.l.b16 %v296
      %v438 = vunpack.c.h.b16 %v296
      %v439 = vunpack.c.l.b16 %v297
      %v440 = vunpack.c.h.b16 %v297
      %v441 = vunpack.c.l.b16 %v298
      %v442 = vunpack.c.h.b16 %v298
      %v443 = vunpack.c.l.b16 %v299
      %v444 = vunpack.c.h.b16 %v299
      %v445 = vunpack.c.l.b16 %v300
      %v446 = vunpack.c.h.b16 %v300
      %v447 = vunpack.c.l.b16 %v301
      %v448 = vunpack.c.h.b16 %v301
      %v449 = vunpack.c.l.b16 %v302
      %v450 = vunpack.c.h.b16 %v302
      %v451 = vunpack.c.l.b16 %v303
      %v452 = vunpack.c.h.b16 %v303
      %v453 = vunpack.c.l.b16 %v304
      %v454 = vunpack.c.h.b16 %v304
      %v455 = vunpack.c.l.b16 %v305
      %v456 = vunpack.c.h.b16 %v305
      %v457 = vunpack.c.l.b16 %v306
      %v458 = vunpack.c.h.b16 %v306
      %v459 = vunpack.c.l.b16 %v307
      %v460 = vunpack.c.h.b16 %v307
      %v461 = vunpack.c.l.b16 %v308
      %v462 = vunpack.c.h.b16 %v308
      %v463 = vunpack.c.l.b16 %v309
      %v464 = vunpack.c.h.b16 %v309
      %v465 = vunpack.c.l.b16 %v310
      %v466 = vunpack.c.h.b16 %v310
      %v467 = vunpack.c.l.b16 %v311
      %v468 = vunpack.c.h.b16 %v311
      %v469 = vunpack.c.l.b16 %v312
      %v470 = vunpack.c.h.b16 %v312
      %v471 = vunpack.c.l.b16 %v313
      %v472 = vunpack.c.h.b16 %v313
      %v473 = vunpack.c.l.b16 %v314
      %v474 = vunpack.c.h.b16 %v314
      %v475 = vpack.c.b16 %v413, %v411
      %v476 = vpack.c.b16 %v414, %v412
      %v477 = vpack.c.b16 %v417, %v415
      %v478 = vpack.c.b16 %v418, %v416
      %v479 = vpack.c.b16 %v421, %v419
      %v480 = vpack.c.b16 %v422, %v420
      %v481 = vpack.c.b16 %v425, %v423
      %v482 = vpack.c.b16 %v426, %v424
      %v483 = vpack.c.b16 %v429, %v427
      %v484 = vpack.c.b16 %v430, %v428
      %v485 = vpack.c.b16 %v433, %v431
      %v486 = vpack.c.b16 %v434, %v432
      %v487 = vpack.c.b16 %v437, %v435
      %v488 = vpack.c.b16 %v438, %v436
      %v489 = vpack.c.b16 %v441, %v439
      %v490 = vpack.c.b16 %v442, %v440
      %v491 = vpack.c.b16 %v445, %v443
      %v492 = vpack.c.b16 %v446, %v444
      %v493 = vpack.c.b16 %v449, %v447
      %v494 = vpack.c.b16 %v450, %v448
      %v495 = vpack.c.b16 %v453, %v451
      %v496 = vpack.c.b16 %v454, %v452
      %v497 = vpack.c.b16 %v457, %v455
      %v498 = vpack.c.b16 %v458, %v456
      %v499 = vpack.c.b16 %v461, %v459
      %v500 = vpack.c.b16 %v462, %v460
      %v501 = vpack.c.b16 %v465, %v463
      %v502 = vpack.c.b16 %v466, %v464
      %v503 = vpack.c.b16 %v469, %v467
      %v504 = vpack.c.b16 %v470, %v468
      %v505 = vpack.c.b16 %v473, %v471
      %v506 = vpack.c.b16 %v474, %v472
      %v603 = vunpack.c.l.b16 %v315
      %v604 = vunpack.c.h.b16 %v315
      %v605 = vunpack.c.l.b16 %v316
      %v606 = vunpack.c.l.b16 %v317
      %v607 = vunpack.c.h.b16 %v317
      %v608 = vunpack.c.l.b16 %v318
      %v609 = vunpack.c.l.b16 %v319
      %v610 = vunpack.c.h.b16 %v319
      %v611 = vunpack.c.l.b16 %v320
      %v612 = vunpack.c.l.b16 %v321
      %v613 = vunpack.c.h.b16 %v321
      %v614 = vunpack.c.l.b16 %v322
      %v615 = vunpack.c.l.b16 %v323
      %v616 = vunpack.c.h.b16 %v323
      %v617 = vunpack.c.l.b16 %v324
      %v618 = vunpack.c.l.b16 %v325
      %v619 = vunpack.c.h.b16 %v325
      %v620 = vunpack.c.l.b16 %v326
      %v621 = vunpack.c.l.b16 %v327
      %v622 = vunpack.c.h.b16 %v327
      %v623 = vunpack.c.l.b16 %v328
      %v624 = vunpack.c.l.b16 %v329
      %v625 = vunpack.c.h.b16 %v329
      %v626 = vunpack.c.l.b16 %v330
      %v627 = vunpack.c.l.b16 %v331
      %v628 = vunpack.c.h.b16 %v331
      %v629 = vunpack.c.l.b16 %v332
      %v630 = vunpack.c.l.b16 %v333
      %v631 = vunpack.c.h.b16 %v333
      %v632 = vunpack.c.l.b16 %v334
      %v633 = vunpack.c.l.b16 %v335
      %v634 = vunpack.c.h.b16 %v335
      %v635 = vunpack.c.l.b16 %v336
      %v636 = vunpack.c.l.b16 %v337
      %v637 = vunpack.c.h.b16 %v337
      %v638 = vunpack.c.l.b16 %v338
      %v639 = vunpack.c.l.b16 %v339
      %v640 = vunpack.c.h.b16 %v339
      %v641 = vunpack.c.l.b16 %v340
      %v642 = vunpack.c.l.b16 %v341
      %v643 = vunpack.c.h.b16 %v341
      %v644 = vunpack.c.l.b16 %v342
      %v645 = vunpack.c.l.b16 %v343
      %v646 = vunpack.c.h.b16 %v343
      %v647 = vunpack.c.l.b16 %v344
      %v648 = vunpack.c.l.b16 %v345
      %v649 = vunpack.c.h.b16 %v345
      %v650 = vunpack.c.l.b16 %v346
      %v651 = vunpack.c.l.b16 %v347
      %v652 = vunpack.c.h.b16 %v347
      %v653 = vunpack.c.l.b16 %v348
      %v654 = vunpack.c.l.b16 %v349
      %v655 = vunpack.c.h.b16 %v349
      %v656 = vunpack.c.l.b16 %v350
      %v657 = vunpack.c.l.b16 %v351
      %v658 = vunpack.c.h.b16 %v351
      %v659 = vunpack.c.l.b16 %v352
      %v660 = vunpack.c.l.b16 %v353
      %v661 = vunpack.c.h.b16 %v353
      %v662 = vunpack.c.l.b16 %v354
      %v663 = vunpack.c.l.b16 %v355
      %v664 = vunpack.c.h.b16 %v355
      %v665 = vunpack.c.l.b16 %v356
      %v666 = vunpack.c.l.b16 %v357
      %v667 = vunpack.c.h.b16 %v357
      %v668 = vunpack.c.l.b16 %v358
      %v669 = vunpack.c.l.b16 %v359
      %v670 = vunpack.c.h.b16 %v359
      %v671 = vunpack.c.l.b16 %v360
      %v672 = vunpack.c.l.b16 %v361
      %v673 = vunpack.c.h.b16 %v361
      %v674 = vunpack.c.l.b16 %v362
      %v675 = vunpack.c.l.b16 %v363
      %v676 = vunpack.c.h.b16 %v363
      %v677 = vunpack.c.l.b16 %v364
      %v678 = vunpack.c.l.b16 %v365
      %v679 = vunpack.c.h.b16 %v365
      %v680 = vunpack.c.l.b16 %v366
      %v681 = vunpack.c.l.b16 %v367
      %v682 = vunpack.c.h.b16 %v367
      %v683 = vunpack.c.l.b16 %v368
      %v684 = vunpack.c.l.b16 %v369
      %v685 = vunpack.c.h.b16 %v369
      %v686 = vunpack.c.l.b16 %v370
      %v687 = vunpack.c.l.b16 %v371
      %v688 = vunpack.c.h.b16 %v371
      %v689 = vunpack.c.l.b16 %v372
      %v690 = vunpack.c.l.b16 %v373
      %v691 = vunpack.c.h.b16 %v373
      %v692 = vunpack.c.l.b16 %v374
      %v693 = vunpack.c.l.b16 %v375
      %v694 = vunpack.c.h.b16 %v375
      %v695 = vunpack.c.l.b16 %v376
      %v696 = vunpack.c.l.b16 %v377
      %v697 = vunpack.c.h.b16 %v377
      %v698 = vunpack.c.l.b16 %v378
      %v699 = vpack.c.b16 %v606, %v603
      %v700 = vpack.c.b16 %v607, %v604
      %v701 = vpack.c.b16 %v608, %v605
      %v702 = vpack.c.b16 %v612, %v609
      %v703 = vpack.c.b16 %v613, %v610
      %v704 = vpack.c.b16 %v614, %v611
      %v705 = vpack.c.b16 %v618, %v615
      %v706 = vpack.c.b16 %v619, %v616
      %v707 = vpack.c.b16 %v620, %v617
      %v708 = vpack.c.b16 %v624, %v621
      %v709 = vpack.c.b16 %v625, %v622
      %v710 = vpack.c.b16 %v626, %v623
      %v711 = vpack.c.b16 %v630, %v627
      %v712 = vpack.c.b16 %v631, %v628
      %v713 = vpack.c.b16 %v632, %v629
      %v714 = vpack.c.b16 %v636, %v633
      %v715 = vpack.c.b16 %v637, %v634
      %v716 = vpack.c.b16 %v638, %v635
      %v717 = vpack.c.b16 %v642, %v639
      %v718 = vpack.c.b16 %v643, %v640
      %v719 = vpack.c.b16 %v644, %v641
      %v720 = vpack.c.b16 %v648, %v645
      %v721 = vpack.c.b16 %v649, %v646
      %v722 = vpack.c.b16 %v650, %v647
      %v723 = vpack.c.b16 %v654, %v651
      %v724 = vpack.c.b16 %v655, %v652
      %v725 = vpack.c.b16 %v656, %v653
      %v726 = vpack.c.b16 %v660, %v657
      %v727 = vpack.c.b16 %v661, %v658
      %v728 = vpack.c.b16 %v662, %v659
      %v729 = vpack.c.b16 %v666, %v663
      %v730 = vpack.c.b16 %v667, %v664
      %v731 = vpack.c.b16 %v668, %v665
      %v732 = vpack.c.b16 %v672, %v669
      %v733 = vpack.c.b16 %v673, %v670
      %v734 = vpack.c.b16 %v674, %v671
      %v735 = vpack.c.b16 %v678, %v675
      %v736 = vpack.c.b16 %v679, %v676
      %v737 = vpack.c.b16 %v680, %v677
      %v738 = vpack.c.b16 %v684, %v681
      %v739 = vpack.c.b16 %v685, %v682
      %v740 = vpack.c.b16 %v686, %v683
      %v741 = vpack.c.b16 %v690, %v687
      %v742 = vpack.c.b16 %v691, %v688
      %v743 = vpack.c.b16 %v692, %v689
      %v744 = vpack.c.b16 %v696, %v693
      %v745 = vpack.c.b16 %v697, %v694
      %v746 = vpack.c.b16 %v698, %v695
      %795 = vmatprep.subr.bf16.mxu0 %v700
      %796 = vmatpush1.bf16.msra.mxu0 %v699
      %797 = vmatprep.subr.bf16.mxu0 %v703
      %798 = vmatpush1.bf16.msra.mxu0 %v702
      %799 = vmatprep.subr.bf16.mxu0 %v706
      %800 = vmatpush1.bf16.msra.mxu0 %v705
      %801 = vmatprep.subr.bf16.mxu0 %v709
      %802 = vmatpush1.bf16.msra.mxu0 %v708
      %803 = vmatprep.subr.bf16.mxu0 %v712
      %804 = vmatpush1.bf16.msra.mxu0 %v711
      %805 = vmatprep.subr.bf16.mxu0 %v715
      %806 = vmatpush1.bf16.msra.mxu0 %v714
      %807 = vmatprep.subr.bf16.mxu0 %v718
      %808 = vmatpush1.bf16.msra.mxu0 %v717
      %809 = vmatprep.subr.bf16.mxu0 %v721
      %810 = vmatpush1.bf16.msra.mxu0 %v720
      %811 = vmatprep.subr.bf16.mxu0 %v724
      %812 = vmatpush1.bf16.msra.mxu0 %v723
      %813 = vmatprep.subr.bf16.mxu0 %v727
      %814 = vmatpush1.bf16.msra.mxu0 %v726
      %815 = vmatprep.subr.bf16.mxu0 %v730
      %816 = vmatpush1.bf16.msra.mxu0 %v729
      %817 = vmatprep.subr.bf16.mxu0 %v733
      %818 = vmatpush1.bf16.msra.mxu0 %v732
      %819 = vmatprep.subr.bf16.mxu0 %v736
      %820 = vmatpush1.bf16.msra.mxu0 %v735
      %821 = vmatprep.subr.bf16.mxu0 %v739
      %822 = vmatpush1.bf16.msra.mxu0 %v738
      %823 = vmatprep.subr.bf16.mxu0 %v742
      %824 = vmatpush1.bf16.msra.mxu0 %v741
      %825 = vmatprep.subr.bf16.mxu0 %v745
      %826 = vmatpush1.bf16.msra.mxu0 %v744
      %827 = vmatprep.mubr.bf16.mxu0 %v476
      %828 = vmatmul.mubr.bf16.gmra.mrb[0].mxu0 %v475
      %v829 = vpop.f32.mrb[0].mxu0
      %v830 = vadd.f32 0.0, %v829
      %v831 = vpop.f32.mrb[0].mxu0
      %v832 = vadd.f32 0.0, %v831
      %v833 = vpop.f32.mrb[0].mxu0
      %v834 = vadd.f32 0.0, %v833
      %v835 = vpop.f32.mrb[0].mxu0
      %v836 = vadd.f32 0.0, %v835
      %837 = vmatprep.mubr.bf16.mxu0 %v478
      %838 = vmatmul.mubr.bf16.gmra.mrb[0].mxu0 %v477
      %v839 = vpop.f32.mrb[0].mxu0
      %v840 = vadd.f32 0.0, %v839
      %v841 = vpop.f32.mrb[0].mxu0
      %v842 = vadd.f32 0.0, %v841
      %v843 = vpop.f32.mrb[0].mxu0
      %v844 = vadd.f32 0.0, %v843
      %v845 = vpop.f32.mrb[0].mxu0
      %v846 = vadd.f32 0.0, %v845
      %847 = vmatprep.mubr.bf16.mxu0 %v480
      %848 = vmatmul.mubr.bf16.gmra.mrb[0].mxu0 %v479
      %v849 = vpop.f32.mrb[0].mxu0
      %v850 = vadd.f32 0.0, %v849
      %v851 = vpop.f32.mrb[0].mxu0
      %v852 = vadd.f32 0.0, %v851
      %v853 = vpop.f32.mrb[0].mxu0
      %v854 = vadd.f32 0.0, %v853
      %v855 = vpop.f32.mrb[0].mxu0
      %v856 = vadd.f32 0.0, %v855
      %857 = vmatprep.mubr.bf16.mxu0 %v482
      %858 = vmatmul.mubr.bf16.gmra.mrb[0].mxu0 %v481
      %v859 = vpop.f32.mrb[0].mxu0
      %v860 = vadd.f32 0.0, %v859
      %v861 = vpop.f32.mrb[0].mxu0
      %v862 = vadd.f32 0.0, %v861
      %v863 = vpop.f32.mrb[0].mxu0
      %v864 = vadd.f32 0.0, %v863
      %v865 = vpop.f32.mrb[0].mxu0
      %v866 = vadd.f32 0.0, %v865
      %867 = vmatprep.mubr.bf16.mxu0 %v484
      %868 = vmatmul.mubr.bf16.gmra.mrb[0].mxu0 %v483
      %v869 = vpop.f32.mrb[0].mxu0
      %v870 = vadd.f32 0.0, %v869
      %v871 = vpop.f32.mrb[0].mxu0
      %v872 = vadd.f32 0.0, %v871
      %v873 = vpop.f32.mrb[0].mxu0
      %v874 = vadd.f32 0.0, %v873
      %v875 = vpop.f32.mrb[0].mxu0
      %v876 = vadd.f32 0.0, %v875
      %877 = vmatprep.mubr.bf16.mxu0 %v486
      %878 = vmatmul.mubr.bf16.gmra.mrb[0].mxu0 %v485
      %v879 = vpop.f32.mrb[0].mxu0
      %v880 = vadd.f32 0.0, %v879
      %v881 = vpop.f32.mrb[0].mxu0
      %v882 = vadd.f32 0.0, %v881
      %v883 = vpop.f32.mrb[0].mxu0
      %v884 = vadd.f32 0.0, %v883
      %v885 = vpop.f32.mrb[0].mxu0
      %v886 = vadd.f32 0.0, %v885
      %887 = vmatprep.mubr.bf16.mxu0 %v488
      %888 = vmatmul.mubr.bf16.gmra.mrb[0].mxu0 %v487
      %v889 = vpop.f32.mrb[0].mxu0
      %v890 = vadd.f32 0.0, %v889
      %v891 = vpop.f32.mrb[0].mxu0
      %v892 = vadd.f32 0.0, %v891
      %v893 = vpop.f32.mrb[0].mxu0
      %v894 = vadd.f32 0.0, %v893
      %v895 = vpop.f32.mrb[0].mxu0
      %v896 = vadd.f32 0.0, %v895
      %897 = vmatprep.mubr.bf16.mxu0 %v490
      %898 = vmatmul.mubr.bf16.gmra.mrb[0].mxu0 %v489
      %v899 = vpop.f32.mrb[0].mxu0
      %v900 = vadd.f32 0.0, %v899
      %v901 = vpop.f32.mrb[0].mxu0
      %v902 = vadd.f32 0.0, %v901
      %v903 = vpop.f32.mrb[0].mxu0
      %v904 = vadd.f32 0.0, %v903
      %v905 = vpop.f32.mrb[0].mxu0
      %v906 = vadd.f32 0.0, %v905
      %907 = vmatprep.mubr.bf16.mxu0 %v492
      %908 = vmatmul.mubr.bf16.gmra.mrb[0].mxu0 %v491
      %v909 = vpop.f32.mrb[0].mxu0
      %v910 = vadd.f32 0.0, %v909
      %v911 = vpop.f32.mrb[0].mxu0
      %v912 = vadd.f32 0.0, %v911
      %v913 = vpop.f32.mrb[0].mxu0
      %v914 = vadd.f32 0.0, %v913
      %v915 = vpop.f32.mrb[0].mxu0
      %v916 = vadd.f32 0.0, %v915
      %917 = vmatprep.mubr.bf16.mxu0 %v494
      %918 = vmatmul.mubr.bf16.gmra.mrb[0].mxu0 %v493
      %v919 = vpop.f32.mrb[0].mxu0
      %v920 = vadd.f32 0.0, %v919
      %v921 = vpop.f32.mrb[0].mxu0
      %v922 = vadd.f32 0.0, %v921
      %v923 = vpop.f32.mrb[0].mxu0
      %v924 = vadd.f32 0.0, %v923
      %v925 = vpop.f32.mrb[0].mxu0
      %v926 = vadd.f32 0.0, %v925
      %927 = vmatprep.mubr.bf16.mxu0 %v496
      %928 = vmatmul.mubr.bf16.gmra.mrb[0].mxu0 %v495
      %v929 = vpop.f32.mrb[0].mxu0
      %v930 = vadd.f32 0.0, %v929
      %v931 = vpop.f32.mrb[0].mxu0
      %v932 = vadd.f32 0.0, %v931
      %v933 = vpop.f32.mrb[0].mxu0
      %v934 = vadd.f32 0.0, %v933
      %v935 = vpop.f32.mrb[0].mxu0
      %v936 = vadd.f32 0.0, %v935
      %937 = vmatprep.mubr.bf16.mxu0 %v498
      %938 = vmatmul.mubr.bf16.gmra.mrb[0].mxu0 %v497
      %v939 = vpop.f32.mrb[0].mxu0
      %v940 = vadd.f32 0.0, %v939
      %v941 = vpop.f32.mrb[0].mxu0
      %v942 = vadd.f32 0.0, %v941
      %v943 = vpop.f32.mrb[0].mxu0
      %v944 = vadd.f32 0.0, %v943
      %v945 = vpop.f32.mrb[0].mxu0
      %v946 = vadd.f32 0.0, %v945
      %947 = vmatprep.mubr.bf16.mxu0 %v500
      %948 = vmatmul.mubr.bf16.gmra.mrb[0].mxu0 %v499
      %v949 = vpop.f32.mrb[0].mxu0
      %v950 = vadd.f32 0.0, %v949
      %v951 = vpop.f32.mrb[0].mxu0
      %v952 = vadd.f32 0.0, %v951
      %v953 = vpop.f32.mrb[0].mxu0
      %v954 = vadd.f32 0.0, %v953
      %v955 = vpop.f32.mrb[0].mxu0
      %v956 = vadd.f32 0.0, %v955
      %957 = vmatprep.mubr.bf16.mxu0 %v502
      %958 = vmatmul.mubr.bf16.gmra.mrb[0].mxu0 %v501
      %v959 = vpop.f32.mrb[0].mxu0
      %v960 = vadd.f32 0.0, %v959
      %v961 = vpop.f32.mrb[0].mxu0
      %v962 = vadd.f32 0.0, %v961
      %v963 = vpop.f32.mrb[0].mxu0
      %v964 = vadd.f32 0.0, %v963
      %v965 = vpop.f32.mrb[0].mxu0
      %v966 = vadd.f32 0.0, %v965
      %967 = vmatprep.mubr.bf16.mxu0 %v504
      %968 = vmatmul.mubr.bf16.gmra.mrb[0].mxu0 %v503
      %v969 = vpop.f32.mrb[0].mxu0
      %v970 = vadd.f32 0.0, %v969
      %v971 = vpop.f32.mrb[0].mxu0
      %v972 = vadd.f32 0.0, %v971
      %v973 = vpop.f32.mrb[0].mxu0
      %v974 = vadd.f32 0.0, %v973
      %v975 = vpop.f32.mrb[0].mxu0
      %v976 = vadd.f32 0.0, %v975
      %977 = vmatprep.mubr.bf16.mxu0 %v506
      %978 = vmatmul.mubr.bf16.gmra.mrb[0].mxu0 %v505
      %v979 = vpop.f32.mrb[0].mxu0
      %v980 = vadd.f32 0.0, %v979
      %v981 = vpop.f32.mrb[0].mxu0
      %v982 = vadd.f32 0.0, %v981
      %v983 = vpop.f32.mrb[0].mxu0
      %v984 = vadd.f32 0.0, %v983
      %v985 = vpop.f32.mrb[0].mxu0
      %v986 = vadd.f32 0.0, %v985
      %987 = vdwg.mxu0
      %988 = vmatprep.subr.bf16.mxu0 0
      %989 = vmatpush1.bf16.msra.mxu0 %v701
      %990 = vmatprep.subr.bf16.mxu0 0
      %991 = vmatpush1.bf16.msra.mxu0 %v704
      %992 = vmatprep.subr.bf16.mxu0 0
      %993 = vmatpush1.bf16.msra.mxu0 %v707
      %994 = vmatprep.subr.bf16.mxu0 0
      %995 = vmatpush1.bf16.msra.mxu0 %v710
      %996 = vmatprep.subr.bf16.mxu0 0
      %997 = vmatpush1.bf16.msra.mxu0 %v713
      %998 = vmatprep.subr.bf16.mxu0 0
      %999 = vmatpush1.bf16.msra.mxu0 %v716
      %1000 = vmatprep.subr.bf16.mxu0 0
      %1001 = vmatpush1.bf16.msra.mxu0 %v719
      %1002 = vmatprep.subr.bf16.mxu0 0
      %1003 = vmatpush1.bf16.msra.mxu0 %v722
      %1004 = vmatprep.subr.bf16.mxu0 0
      %1005 = vmatpush1.bf16.msra.mxu0 %v725
      %1006 = vmatprep.subr.bf16.mxu0 0
      %1007 = vmatpush1.bf16.msra.mxu0 %v728
      %1008 = vmatprep.subr.bf16.mxu0 0
      %1009 = vmatpush1.bf16.msra.mxu0 %v731
      %1010 = vmatprep.subr.bf16.mxu0 0
      %1011 = vmatpush1.bf16.msra.mxu0 %v734
      %1012 = vmatprep.subr.bf16.mxu0 0
      %1013 = vmatpush1.bf16.msra.mxu0 %v737
      %1014 = vmatprep.subr.bf16.mxu0 0
      %1015 = vmatpush1.bf16.msra.mxu0 %v740
      %1016 = vmatprep.subr.bf16.mxu0 0
      %1017 = vmatpush1.bf16.msra.mxu0 %v743
      %1018 = vmatprep.subr.bf16.mxu0 0
      %1019 = vmatpush1.bf16.msra.mxu0 %v746
      %1020 = vmatprep.mubr.bf16.mxu0 %v476
      %1021 = vmatmul.mubr.bf16.gmra.mrb[0].mxu0 %v475
      %v1022 = vpop.f32.mrb[0].mxu0
      %v1023 = vadd.f32 0.0, %v1022
      %v1024 = vpop.f32.mrb[0].mxu0
      %v1025 = vpop.f32.mrb[0].mxu0
      %v1026 = vadd.f32 0.0, %v1025
      %v1027 = vpop.f32.mrb[0].mxu0
      %1028 = vmatprep.mubr.bf16.mxu0 %v478
      %1029 = vmatmul.mubr.bf16.gmra.mrb[0].mxu0 %v477
      %v1030 = vpop.f32.mrb[0].mxu0
      %v1031 = vadd.f32 0.0, %v1030
      %v1032 = vpop.f32.mrb[0].mxu0
      %v1033 = vpop.f32.mrb[0].mxu0
      %v1034 = vadd.f32 0.0, %v1033
      %v1035 = vpop.f32.mrb[0].mxu0
      %1036 = vmatprep.mubr.bf16.mxu0 %v480
      %1037 = vmatmul.mubr.bf16.gmra.mrb[0].mxu0 %v479
      %v1038 = vpop.f32.mrb[0].mxu0
      %v1039 = vadd.f32 0.0, %v1038
      %v1040 = vpop.f32.mrb[0].mxu0
      %v1041 = vpop.f32.mrb[0].mxu0
      %v1042 = vadd.f32 0.0, %v1041
      %v1043 = vpop.f32.mrb[0].mxu0
      %1044 = vmatprep.mubr.bf16.mxu0 %v482
      %1045 = vmatmul.mubr.bf16.gmra.mrb[0].mxu0 %v481
      %v1046 = vpop.f32.mrb[0].mxu0
      %v1047 = vadd.f32 0.0, %v1046
      %v1048 = vpop.f32.mrb[0].mxu0
      %v1049 = vpop.f32.mrb[0].mxu0
      %v1050 = vadd.f32 0.0, %v1049
      %v1051 = vpop.f32.mrb[0].mxu0
      %1052 = vmatprep.mubr.bf16.mxu0 %v484
      %1053 = vmatmul.mubr.bf16.gmra.mrb[0].mxu0 %v483
      %v1054 = vpop.f32.mrb[0].mxu0
      %v1055 = vadd.f32 0.0, %v1054
      %v1056 = vpop.f32.mrb[0].mxu0
      %v1057 = vpop.f32.mrb[0].mxu0
      %v1058 = vadd.f32 0.0, %v1057
      %v1059 = vpop.f32.mrb[0].mxu0
      %1060 = vmatprep.mubr.bf16.mxu0 %v486
      %1061 = vmatmul.mubr.bf16.gmra.mrb[0].mxu0 %v485
      %v1062 = vpop.f32.mrb[0].mxu0
      %v1063 = vadd.f32 0.0, %v1062
      %v1064 = vpop.f32.mrb[0].mxu0
      %v1065 = vpop.f32.mrb[0].mxu0
      %v1066 = vadd.f32 0.0, %v1065
      %v1067 = vpop.f32.mrb[0].mxu0
      %1068 = vmatprep.mubr.bf16.mxu0 %v488
      %1069 = vmatmul.mubr.bf16.gmra.mrb[0].mxu0 %v487
      %v1070 = vpop.f32.mrb[0].mxu0
      %v1071 = vadd.f32 0.0, %v1070
      %v1072 = vpop.f32.mrb[0].mxu0
      %v1073 = vpop.f32.mrb[0].mxu0
      %v1074 = vadd.f32 0.0, %v1073
      %v1075 = vpop.f32.mrb[0].mxu0
      %1076 = vmatprep.mubr.bf16.mxu0 %v490
      %1077 = vmatmul.mubr.bf16.gmra.mrb[0].mxu0 %v489
      %v1078 = vpop.f32.mrb[0].mxu0
      %v1079 = vadd.f32 0.0, %v1078
      %v1080 = vpop.f32.mrb[0].mxu0
      %v1081 = vpop.f32.mrb[0].mxu0
      %v1082 = vadd.f32 0.0, %v1081
      %v1083 = vpop.f32.mrb[0].mxu0
      %1084 = vmatprep.mubr.bf16.mxu0 %v492
      %1085 = vmatmul.mubr.bf16.gmra.mrb[0].mxu0 %v491
      %v1086 = vpop.f32.mrb[0].mxu0
      %v1087 = vadd.f32 0.0, %v1086
      %v1088 = vpop.f32.mrb[0].mxu0
      %v1089 = vpop.f32.mrb[0].mxu0
      %v1090 = vadd.f32 0.0, %v1089
      %v1091 = vpop.f32.mrb[0].mxu0
      %1092 = vmatprep.mubr.bf16.mxu0 %v494
      %1093 = vmatmul.mubr.bf16.gmra.mrb[0].mxu0 %v493
      %v1094 = vpop.f32.mrb[0].mxu0
      %v1095 = vadd.f32 0.0, %v1094
      %v1096 = vpop.f32.mrb[0].mxu0
      %v1097 = vpop.f32.mrb[0].mxu0
      %v1098 = vadd.f32 0.0, %v1097
      %v1099 = vpop.f32.mrb[0].mxu0
      %1100 = vmatprep.mubr.bf16.mxu0 %v496
      %1101 = vmatmul.mubr.bf16.gmra.mrb[0].mxu0 %v495
      %v1102 = vpop.f32.mrb[0].mxu0
      %v1103 = vadd.f32 0.0, %v1102
      %v1104 = vpop.f32.mrb[0].mxu0
      %v1105 = vpop.f32.mrb[0].mxu0
      %v1106 = vadd.f32 0.0, %v1105
      %v1107 = vpop.f32.mrb[0].mxu0
      %1108 = vmatprep.mubr.bf16.mxu0 %v498
      %1109 = vmatmul.mubr.bf16.gmra.mrb[0].mxu0 %v497
      %v1110 = vpop.f32.mrb[0].mxu0
      %v1111 = vadd.f32 0.0, %v1110
      %v1112 = vpop.f32.mrb[0].mxu0
      %v1113 = vpop.f32.mrb[0].mxu0
      %v1114 = vadd.f32 0.0, %v1113
      %v1115 = vpop.f32.mrb[0].mxu0
      %1116 = vmatprep.mubr.bf16.mxu0 %v500
      %1117 = vmatmul.mubr.bf16.gmra.mrb[0].mxu0 %v499
      %v1118 = vpop.f32.mrb[0].mxu0
      %v1119 = vadd.f32 0.0, %v1118
      %v1120 = vpop.f32.mrb[0].mxu0
      %v1121 = vpop.f32.mrb[0].mxu0
      %v1122 = vadd.f32 0.0, %v1121
      %v1123 = vpop.f32.mrb[0].mxu0
      %1124 = vmatprep.mubr.bf16.mxu0 %v502
      %1125 = vmatmul.mubr.bf16.gmra.mrb[0].mxu0 %v501
      %v1126 = vpop.f32.mrb[0].mxu0
      %v1127 = vadd.f32 0.0, %v1126
      %v1128 = vpop.f32.mrb[0].mxu0
      %v1129 = vpop.f32.mrb[0].mxu0
      %v1130 = vadd.f32 0.0, %v1129
      %v1131 = vpop.f32.mrb[0].mxu0
      %1132 = vmatprep.mubr.bf16.mxu0 %v504
      %1133 = vmatmul.mubr.bf16.gmra.mrb[0].mxu0 %v503
      %v1134 = vpop.f32.mrb[0].mxu0
      %v1135 = vadd.f32 0.0, %v1134
      %v1136 = vpop.f32.mrb[0].mxu0
      %v1137 = vpop.f32.mrb[0].mxu0
      %v1138 = vadd.f32 0.0, %v1137
      %v1139 = vpop.f32.mrb[0].mxu0
      %1140 = vmatprep.mubr.bf16.mxu0 %v506
      %1141 = vmatmul.mubr.bf16.gmra.mrb[0].mxu0 %v505
      %v1142 = vpop.f32.mrb[0].mxu0
      %v1143 = vadd.f32 0.0, %v1142
      %v1144 = vpop.f32.mrb[0].mxu0
      %v1145 = vpop.f32.mrb[0].mxu0
      %v1146 = vadd.f32 0.0, %v1145
      %v1147 = vpop.f32.mrb[0].mxu0
      %1148 = vdwg.mxu0
      %v1149 = vpack.c.bf16 %v834, %v830
      %v1150 = vpack.c.bf16 %v836, %v832
      %v1151 = vpack.c.bf16 %v1026, %v1023
      %v1152 = vpack.c.bf16 %v844, %v840
      %v1153 = vpack.c.bf16 %v846, %v842
      %v1154 = vpack.c.bf16 %v1034, %v1031
      %v1155 = vpack.c.bf16 %v854, %v850
      %v1156 = vpack.c.bf16 %v856, %v852
      %v1157 = vpack.c.bf16 %v1042, %v1039
      %v1158 = vpack.c.bf16 %v864, %v860
      %v1159 = vpack.c.bf16 %v866, %v862
      %v1160 = vpack.c.bf16 %v1050, %v1047
      %v1161 = vpack.c.bf16 %v874, %v870
      %v1162 = vpack.c.bf16 %v876, %v872
      %v1163 = vpack.c.bf16 %v1058, %v1055
      %v1164 = vpack.c.bf16 %v884, %v880
      %v1165 = vpack.c.bf16 %v886, %v882
      %v1166 = vpack.c.bf16 %v1066, %v1063
      %v1167 = vpack.c.bf16 %v894, %v890
      %v1168 = vpack.c.bf16 %v896, %v892
      %v1169 = vpack.c.bf16 %v1074, %v1071
      %v1170 = vpack.c.bf16 %v904, %v900
      %v1171 = vpack.c.bf16 %v906, %v902
      %v1172 = vpack.c.bf16 %v1082, %v1079
      %v1173 = vpack.c.bf16 %v914, %v910
      %v1174 = vpack.c.bf16 %v916, %v912
      %v1175 = vpack.c.bf16 %v1090, %v1087
      %v1176 = vpack.c.bf16 %v924, %v920
      %v1177 = vpack.c.bf16 %v926, %v922
      %v1178 = vpack.c.bf16 %v1098, %v1095
      %v1179 = vpack.c.bf16 %v934, %v930
      %v1180 = vpack.c.bf16 %v936, %v932
      %v1181 = vpack.c.bf16 %v1106, %v1103
      %v1182 = vpack.c.bf16 %v944, %v940
      %v1183 = vpack.c.bf16 %v946, %v942
      %v1184 = vpack.c.bf16 %v1114, %v1111
      %v1185 = vpack.c.bf16 %v954, %v950
      %v1186 = vpack.c.bf16 %v956, %v952
      %v1187 = vpack.c.bf16 %v1122, %v1119
      %v1188 = vpack.c.bf16 %v964, %v960
      %v1189 = vpack.c.bf16 %v966, %v962
      %v1190 = vpack.c.bf16 %v1130, %v1127
      %v1191 = vpack.c.bf16 %v974, %v970
      %v1192 = vpack.c.bf16 %v976, %v972
      %v1193 = vpack.c.bf16 %v1138, %v1135
      %v1194 = vpack.c.bf16 %v984, %v980
      %v1195 = vpack.c.bf16 %v986, %v982
      %v1196 = vpack.c.bf16 %v1146, %v1143
      %v1245 = vunpack.c.l.b16 %v1149
      %v1246 = vunpack.c.l.b16 %v1150
      %v1247 = vunpack.c.l.b16 %v1151
      %v1248 = vunpack.c.h.b16 %v1149
      %v1249 = vunpack.c.h.b16 %v1150
      %v1250 = vunpack.c.h.b16 %v1151
      %v1251 = vunpack.c.l.b16 %v1152
      %v1252 = vunpack.c.l.b16 %v1153
      %v1253 = vunpack.c.l.b16 %v1154
      %v1254 = vunpack.c.h.b16 %v1152
      %v1255 = vunpack.c.h.b16 %v1153
      %v1256 = vunpack.c.h.b16 %v1154
      %v1257 = vunpack.c.l.b16 %v1155
      %v1258 = vunpack.c.l.b16 %v1156
      %v1259 = vunpack.c.l.b16 %v1157
      %v1260 = vunpack.c.h.b16 %v1155
      %v1261 = vunpack.c.h.b16 %v1156
      %v1262 = vunpack.c.h.b16 %v1157
      %v1263 = vunpack.c.l.b16 %v1158
      %v1264 = vunpack.c.l.b16 %v1159
      %v1265 = vunpack.c.l.b16 %v1160
      %v1266 = vunpack.c.h.b16 %v1158
      %v1267 = vunpack.c.h.b16 %v1159
      %v1268 = vunpack.c.h.b16 %v1160
      %v1269 = vunpack.c.l.b16 %v1161
      %v1270 = vunpack.c.l.b16 %v1162
      %v1271 = vunpack.c.l.b16 %v1163
      %v1272 = vunpack.c.h.b16 %v1161
      %v1273 = vunpack.c.h.b16 %v1162
      %v1274 = vunpack.c.h.b16 %v1163
      %v1275 = vunpack.c.l.b16 %v1164
      %v1276 = vunpack.c.l.b16 %v1165
      %v1277 = vunpack.c.l.b16 %v1166
      %v1278 = vunpack.c.h.b16 %v1164
      %v1279 = vunpack.c.h.b16 %v1165
      %v1280 = vunpack.c.h.b16 %v1166
      %v1281 = vunpack.c.l.b16 %v1167
      %v1282 = vunpack.c.l.b16 %v1168
      %v1283 = vunpack.c.l.b16 %v1169
      %v1284 = vunpack.c.h.b16 %v1167
      %v1285 = vunpack.c.h.b16 %v1168
      %v1286 = vunpack.c.h.b16 %v1169
      %v1287 = vunpack.c.l.b16 %v1170
      %v1288 = vunpack.c.l.b16 %v1171
      %v1289 = vunpack.c.l.b16 %v1172
      %v1290 = vunpack.c.h.b16 %v1170
      %v1291 = vunpack.c.h.b16 %v1171
      %v1292 = vunpack.c.h.b16 %v1172
      %v1293 = vunpack.c.l.b16 %v1173
      %v1294 = vunpack.c.l.b16 %v1174
      %v1295 = vunpack.c.l.b16 %v1175
      %v1296 = vunpack.c.h.b16 %v1173
      %v1297 = vunpack.c.h.b16 %v1174
      %v1298 = vunpack.c.h.b16 %v1175
      %v1299 = vunpack.c.l.b16 %v1176
      %v1300 = vunpack.c.l.b16 %v1177
      %v1301 = vunpack.c.l.b16 %v1178
      %v1302 = vunpack.c.h.b16 %v1176
      %v1303 = vunpack.c.h.b16 %v1177
      %v1304 = vunpack.c.h.b16 %v1178
      %v1305 = vunpack.c.l.b16 %v1179
      %v1306 = vunpack.c.l.b16 %v1180
      %v1307 = vunpack.c.l.b16 %v1181
      %v1308 = vunpack.c.h.b16 %v1179
      %v1309 = vunpack.c.h.b16 %v1180
      %v1310 = vunpack.c.h.b16 %v1181
      %v1311 = vunpack.c.l.b16 %v1182
      %v1312 = vunpack.c.l.b16 %v1183
      %v1313 = vunpack.c.l.b16 %v1184
      %v1314 = vunpack.c.h.b16 %v1182
      %v1315 = vunpack.c.h.b16 %v1183
      %v1316 = vunpack.c.h.b16 %v1184
      %v1317 = vunpack.c.l.b16 %v1185
      %v1318 = vunpack.c.l.b16 %v1186
      %v1319 = vunpack.c.l.b16 %v1187
      %v1320 = vunpack.c.h.b16 %v1185
      %v1321 = vunpack.c.h.b16 %v1186
      %v1322 = vunpack.c.h.b16 %v1187
      %v1323 = vunpack.c.l.b16 %v1188
      %v1324 = vunpack.c.l.b16 %v1189
      %v1325 = vunpack.c.l.b16 %v1190
      %v1326 = vunpack.c.h.b16 %v1188
      %v1327 = vunpack.c.h.b16 %v1189
      %v1328 = vunpack.c.h.b16 %v1190
      %v1329 = vunpack.c.l.b16 %v1191
      %v1330 = vunpack.c.l.b16 %v1192
      %v1331 = vunpack.c.l.b16 %v1193
      %v1332 = vunpack.c.h.b16 %v1191
      %v1333 = vunpack.c.h.b16 %v1192
      %v1334 = vunpack.c.h.b16 %v1193
      %v1335 = vunpack.c.l.b16 %v1194
      %v1336 = vunpack.c.l.b16 %v1195
      %v1337 = vunpack.c.l.b16 %v1196
      %v1338 = vunpack.c.h.b16 %v1194
      %v1339 = vunpack.c.h.b16 %v1195
      %v1340 = vunpack.c.h.b16 %v1196
      %v1341 = vpack.c.b16 %v1246, %v1245
      %v1342 = vpack.c.b16 %v1247, %v1247
      %v1343 = vpack.c.b16 %v1249, %v1248
      %v1344 = vpack.c.b16 %v1250, %v1250
      %v1345 = vpack.c.b16 %v1252, %v1251
      %v1346 = vpack.c.b16 %v1253, %v1253
      %v1347 = vpack.c.b16 %v1255, %v1254
      %v1348 = vpack.c.b16 %v1256, %v1256
      %v1349 = vpack.c.b16 %v1258, %v1257
      %v1350 = vpack.c.b16 %v1259, %v1259
      %v1351 = vpack.c.b16 %v1261, %v1260
      %v1352 = vpack.c.b16 %v1262, %v1262
      %v1353 = vpack.c.b16 %v1264, %v1263
      %v1354 = vpack.c.b16 %v1265, %v1265
      %v1355 = vpack.c.b16 %v1267, %v1266
      %v1356 = vpack.c.b16 %v1268, %v1268
      %v1357 = vpack.c.b16 %v1270, %v1269
      %v1358 = vpack.c.b16 %v1271, %v1271
      %v1359 = vpack.c.b16 %v1273, %v1272
      %v1360 = vpack.c.b16 %v1274, %v1274
      %v1361 = vpack.c.b16 %v1276, %v1275
      %v1362 = vpack.c.b16 %v1277, %v1277
      %v1363 = vpack.c.b16 %v1279, %v1278
      %v1364 = vpack.c.b16 %v1280, %v1280
      %v1365 = vpack.c.b16 %v1282, %v1281
      %v1366 = vpack.c.b16 %v1283, %v1283
      %v1367 = vpack.c.b16 %v1285, %v1284
      %v1368 = vpack.c.b16 %v1286, %v1286
      %v1369 = vpack.c.b16 %v1288, %v1287
      %v1370 = vpack.c.b16 %v1289, %v1289
      %v1371 = vpack.c.b16 %v1291, %v1290
      %v1372 = vpack.c.b16 %v1292, %v1292
      %v1373 = vpack.c.b16 %v1294, %v1293
      %v1374 = vpack.c.b16 %v1295, %v1295
      %v1375 = vpack.c.b16 %v1297, %v1296
      %v1376 = vpack.c.b16 %v1298, %v1298
      %v1377 = vpack.c.b16 %v1300, %v1299
      %v1378 = vpack.c.b16 %v1301, %v1301
      %v1379 = vpack.c.b16 %v1303, %v1302
      %v1380 = vpack.c.b16 %v1304, %v1304
      %v1381 = vpack.c.b16 %v1306, %v1305
      %v1382 = vpack.c.b16 %v1307, %v1307
      %v1383 = vpack.c.b16 %v1309, %v1308
      %v1384 = vpack.c.b16 %v1310, %v1310
      %v1385 = vpack.c.b16 %v1312, %v1311
      %v1386 = vpack.c.b16 %v1313, %v1313
      %v1387 = vpack.c.b16 %v1315, %v1314
      %v1388 = vpack.c.b16 %v1316, %v1316
      %v1389 = vpack.c.b16 %v1318, %v1317
      %v1390 = vpack.c.b16 %v1319, %v1319
      %v1391 = vpack.c.b16 %v1321, %v1320
      %v1392 = vpack.c.b16 %v1322, %v1322
      %v1393 = vpack.c.b16 %v1324, %v1323
      %v1394 = vpack.c.b16 %v1325, %v1325
      %v1395 = vpack.c.b16 %v1327, %v1326
      %v1396 = vpack.c.b16 %v1328, %v1328
      %v1397 = vpack.c.b16 %v1330, %v1329
      %v1398 = vpack.c.b16 %v1331, %v1331
      %v1399 = vpack.c.b16 %v1333, %v1332
      %v1400 = vpack.c.b16 %v1334, %v1334
      %v1401 = vpack.c.b16 %v1336, %v1335
      %v1402 = vpack.c.b16 %v1337, %v1337
      %v1403 = vpack.c.b16 %v1339, %v1338
      %v1404 = vpack.c.b16 %v1340, %v1340
      %1469 = vst [vmem:[%s262] sm:$0xff] %v1341
      %1470 = vst [vmem:[%s262 + $0x8] sm:$0xf] %v1342
      %1471 = vst [vmem:[%s262 + $0xc] sm:$0xff] %v1343
      %1472 = vst [vmem:[%s262 + $0x14] sm:$0xf] %v1344
      %1473 = vst [vmem:[%s262 + $0x18] sm:$0xff] %v1345
      %1474 = vst [vmem:[%s262 + $0x20] sm:$0xf] %v1346
      %1475 = vst [vmem:[%s262 + $0x24] sm:$0xff] %v1347
      %1476 = vst [vmem:[%s262 + $0x2c] sm:$0xf] %v1348
      %1477 = vst [vmem:[%s262 + $0x30] sm:$0xff] %v1349
      %1478 = vst [vmem:[%s262 + $0x38] sm:$0xf] %v1350
      %1479 = vst [vmem:[%s262 + $0x3c] sm:$0xff] %v1351
      %1480 = vst [vmem:[%s262 + $0x44] sm:$0xf] %v1352
      %1481 = vst [vmem:[%s262 + $0x48] sm:$0xff] %v1353
      %1482 = vst [vmem:[%s262 + $0x50] sm:$0xf] %v1354
      %1483 = vst [vmem:[%s262 + $0x54] sm:$0xff] %v1355
      %1484 = vst [vmem:[%s262 + $0x5c] sm:$0xf] %v1356
      %1485 = vst [vmem:[%s262 + $0x60] sm:$0xff] %v1357
      %1486 = vst [vmem:[%s262 + $0x68] sm:$0xf] %v1358
      %1487 = vst [vmem:[%s262 + $0x6c] sm:$0xff] %v1359
      %1488 = vst [vmem:[%s262 + $0x74] sm:$0xf] %v1360
      %1489 = vst [vmem:[%s262 + $0x78] sm:$0xff] %v1361
      %1490 = vst [vmem:[%s262 + $0x80] sm:$0xf] %v1362
      %1491 = vst [vmem:[%s262 + $0x84] sm:$0xff] %v1363
      %1492 = vst [vmem:[%s262 + $0x8c] sm:$0xf] %v1364
      %1493 = vst [vmem:[%s262 + $0x90] sm:$0xff] %v1365
      %1494 = vst [vmem:[%s262 + $0x98] sm:$0xf] %v1366
      %1495 = vst [vmem:[%s262 + $0x9c] sm:$0xff] %v1367
      %1496 = vst [vmem:[%s262 + $0xa4] sm:$0xf] %v1368
      %1497 = vst [vmem:[%s262 + $0xa8] sm:$0xff] %v1369
      %1498 = vst [vmem:[%s262 + $0xb0] sm:$0xf] %v1370
      %1499 = vst [vmem:[%s262 + $0xb4] sm:$0xff] %v1371
      %1500 = vst [vmem:[%s262 + $0xbc] sm:$0xf] %v1372
      %1501 = vst [vmem:[%s262 + $0xc0] sm:$0xff] %v1373
      %1502 = vst [vmem:[%s262 + $0xc8] sm:$0xf] %v1374
      %1503 = vst [vmem:[%s262 + $0xcc] sm:$0xff] %v1375
      %1504 = vst [vmem:[%s262 + $0xd4] sm:$0xf] %v1376
      %1505 = vst [vmem:[%s262 + $0xd8] sm:$0xff] %v1377
      %1506 = vst [vmem:[%s262 + $0xe0] sm:$0xf] %v1378
      %1507 = vst [vmem:[%s262 + $0xe4] sm:$0xff] %v1379
      %1508 = vst [vmem:[%s262 + $0xec] sm:$0xf] %v1380
      %1509 = vst [vmem:[%s262 + $0xf0] sm:$0xff] %v1381
      %1510 = vst [vmem:[%s262 + $0xf8] sm:$0xf] %v1382
      %1511 = vst [vmem:[%s262 + $0xfc] sm:$0xff] %v1383
      %1512 = vst [vmem:[%s262 + $0x104] sm:$0xf] %v1384
      %1513 = vst [vmem:[%s262 + $0x108] sm:$0xff] %v1385
      %1514 = vst [vmem:[%s262 + $0x110] sm:$0xf] %v1386
      %1515 = vst [vmem:[%s262 + $0x114] sm:$0xff] %v1387
      %1516 = vst [vmem:[%s262 + $0x11c] sm:$0xf] %v1388
      %1517 = vst [vmem:[%s262 + $0x120] sm:$0xff] %v1389
      %1518 = vst [vmem:[%s262 + $0x128] sm:$0xf] %v1390
      %1519 = vst [vmem:[%s262 + $0x12c] sm:$0xff] %v1391
      %1520 = vst [vmem:[%s262 + $0x134] sm:$0xf] %v1392
      %1521 = vst [vmem:[%s262 + $0x138] sm:$0xff] %v1393
      %1522 = vst [vmem:[%s262 + $0x140] sm:$0xf] %v1394
      %1523 = vst [vmem:[%s262 + $0x144] sm:$0xff] %v1395
      %1524 = vst [vmem:[%s262 + $0x14c] sm:$0xf] %v1396
      %1525 = vst [vmem:[%s262 + $0x150] sm:$0xff] %v1397
      %1526 = vst [vmem:[%s262 + $0x158] sm:$0xf] %v1398
      %1527 = vst [vmem:[%s262 + $0x15c] sm:$0xff] %v1399
      %1528 = vst [vmem:[%s262 + $0x164] sm:$0xf] %v1400
      %1529 = vst [vmem:[%s262 + $0x168] sm:$0xff] %v1401
      %1530 = vst [vmem:[%s262 + $0x170] sm:$0xf] %v1402
      %1531 = vst [vmem:[%s262 + $0x174] sm:$0xff] %v1403
      %1532 = vst [vmem:[%s262 + $0x17c] sm:$0xf] %v1404
      %v1533 = vadd.f32 %v830, %v832
      %v1534 = vadd.f32 %v1533, %v1023
      %1535 = vadd.xlane.f32.xlu0 %v1534
      %v1536 = vpop.xlane.xlu0 %1535
      %v1537 = vadd.f32 %v834, %v836
      %v1538 = vadd.f32 %v1537, %v1026
      %1539 = vadd.xlane.f32.xlu0 %v1538
      %v1540 = vpop.xlane.xlu0 %1539
      %v1541 = vadd.f32 %v840, %v842
      %v1542 = vadd.f32 %v1541, %v1031
      %1543 = vadd.xlane.f32.xlu0 %v1542
      %v1544 = vpop.xlane.xlu0 %1543
      %v1545 = vadd.f32 %v844, %v846
      %v1546 = vadd.f32 %v1545, %v1034
      %1547 = vadd.xlane.f32.xlu0 %v1546
      %v1548 = vpop.xlane.xlu0 %1547
      %v1549 = vadd.f32 %v850, %v852
      %v1550 = vadd.f32 %v1549, %v1039
      %1551 = vadd.xlane.f32.xlu0 %v1550
      %v1552 = vpop.xlane.xlu0 %1551
      %v1553 = vadd.f32 %v854, %v856
      %v1554 = vadd.f32 %v1553, %v1042
      %1555 = vadd.xlane.f32.xlu0 %v1554
      %v1556 = vpop.xlane.xlu0 %1555
      %v1557 = vadd.f32 %v860, %v862
      %v1558 = vadd.f32 %v1557, %v1047
      %1559 = vadd.xlane.f32.xlu0 %v1558
      %v1560 = vpop.xlane.xlu0 %1559
      %v1561 = vadd.f32 %v864, %v866
      %v1562 = vadd.f32 %v1561, %v1050
      %1563 = vadd.xlane.f32.xlu0 %v1562
      %v1564 = vpop.xlane.xlu0 %1563
      %v1565 = vadd.f32 %v870, %v872
      %v1566 = vadd.f32 %v1565, %v1055
      %1567 = vadd.xlane.f32.xlu0 %v1566
      %v1568 = vpop.xlane.xlu0 %1567
      %v1569 = vadd.f32 %v874, %v876
      %v1570 = vadd.f32 %v1569, %v1058
      %1571 = vadd.xlane.f32.xlu0 %v1570
      %v1572 = vpop.xlane.xlu0 %1571
      %v1573 = vadd.f32 %v880, %v882
      %v1574 = vadd.f32 %v1573, %v1063
      %1575 = vadd.xlane.f32.xlu0 %v1574
      %v1576 = vpop.xlane.xlu0 %1575
      %v1577 = vadd.f32 %v884, %v886
      %v1578 = vadd.f32 %v1577, %v1066
      %1579 = vadd.xlane.f32.xlu0 %v1578
      %v1580 = vpop.xlane.xlu0 %1579
      %v1581 = vadd.f32 %v890, %v892
      %v1582 = vadd.f32 %v1581, %v1071
      %1583 = vadd.xlane.f32.xlu0 %v1582
      %v1584 = vpop.xlane.xlu0 %1583
      %v1585 = vadd.f32 %v894, %v896
      %v1586 = vadd.f32 %v1585, %v1074
      %1587 = vadd.xlane.f32.xlu0 %v1586
      %v1588 = vpop.xlane.xlu0 %1587
      %v1589 = vadd.f32 %v900, %v902
      %v1590 = vadd.f32 %v1589, %v1079
      %1591 = vadd.xlane.f32.xlu0 %v1590
      %v1592 = vpop.xlane.xlu0 %1591
      %v1593 = vadd.f32 %v904, %v906
      %v1594 = vadd.f32 %v1593, %v1082
      %1595 = vadd.xlane.f32.xlu0 %v1594
      %v1596 = vpop.xlane.xlu0 %1595
      %v1597 = vadd.f32 %v910, %v912
      %v1598 = vadd.f32 %v1597, %v1087
      %1599 = vadd.xlane.f32.xlu0 %v1598
      %v1600 = vpop.xlane.xlu0 %1599
      %v1601 = vadd.f32 %v914, %v916
      %v1602 = vadd.f32 %v1601, %v1090
      %1603 = vadd.xlane.f32.xlu0 %v1602
      %v1604 = vpop.xlane.xlu0 %1603
      %v1605 = vadd.f32 %v920, %v922
      %v1606 = vadd.f32 %v1605, %v1095
      %1607 = vadd.xlane.f32.xlu0 %v1606
      %v1608 = vpop.xlane.xlu0 %1607
      %v1609 = vadd.f32 %v924, %v926
      %v1610 = vadd.f32 %v1609, %v1098
      %1611 = vadd.xlane.f32.xlu0 %v1610
      %v1612 = vpop.xlane.xlu0 %1611
      %v1613 = vadd.f32 %v930, %v932
      %v1614 = vadd.f32 %v1613, %v1103
      %1615 = vadd.xlane.f32.xlu0 %v1614
      %v1616 = vpop.xlane.xlu0 %1615
      %v1617 = vadd.f32 %v934, %v936
      %v1618 = vadd.f32 %v1617, %v1106
      %1619 = vadd.xlane.f32.xlu0 %v1618
      %v1620 = vpop.xlane.xlu0 %1619
      %v1621 = vadd.f32 %v940, %v942
      %v1622 = vadd.f32 %v1621, %v1111
      %1623 = vadd.xlane.f32.xlu0 %v1622
      %v1624 = vpop.xlane.xlu0 %1623
      %v1625 = vadd.f32 %v944, %v946
      %v1626 = vadd.f32 %v1625, %v1114
      %1627 = vadd.xlane.f32.xlu0 %v1626
      %v1628 = vpop.xlane.xlu0 %1627
      %v1629 = vadd.f32 %v950, %v952
      %v1630 = vadd.f32 %v1629, %v1119
      %1631 = vadd.xlane.f32.xlu0 %v1630
      %v1632 = vpop.xlane.xlu0 %1631
      %v1633 = vadd.f32 %v954, %v956
      %v1634 = vadd.f32 %v1633, %v1122
      %1635 = vadd.xlane.f32.xlu0 %v1634
      %v1636 = vpop.xlane.xlu0 %1635
      %v1637 = vadd.f32 %v960, %v962
      %v1638 = vadd.f32 %v1637, %v1127
      %1639 = vadd.xlane.f32.xlu0 %v1638
      %v1640 = vpop.xlane.xlu0 %1639
      %v1641 = vadd.f32 %v964, %v966
      %v1642 = vadd.f32 %v1641, %v1130
      %1643 = vadd.xlane.f32.xlu0 %v1642
      %v1644 = vpop.xlane.xlu0 %1643
      %v1645 = vadd.f32 %v970, %v972
      %v1646 = vadd.f32 %v1645, %v1135
      %1647 = vadd.xlane.f32.xlu0 %v1646
      %v1648 = vpop.xlane.xlu0 %1647
      %v1649 = vadd.f32 %v974, %v976
      %v1650 = vadd.f32 %v1649, %v1138
      %1651 = vadd.xlane.f32.xlu0 %v1650
      %v1652 = vpop.xlane.xlu0 %1651
      %v1653 = vadd.f32 %v980, %v982
      %v1654 = vadd.f32 %v1653, %v1143
      %1655 = vadd.xlane.f32.xlu0 %v1654
      %v1656 = vpop.xlane.xlu0 %1655
      %v1657 = vadd.f32 %v984, %v986
      %v1658 = vadd.f32 %v1657, %v1146
      %1659 = vadd.xlane.f32.xlu0 %v1658
      %v1660 = vpop.xlane.xlu0 %1659
      %vm1661 = vcmask 7168
      %1662 = vst.msk [vmem:[%s272] sm:$0xff] %vm1661, %v1536
      %1663 = vst.msk [vmem:[%s272 + $0x8] sm:$0xff] %vm1661, %v1540
      %1664 = vst.msk [vmem:[%s272 + $0x10] sm:$0xff] %vm1661, %v1544
      %1665 = vst.msk [vmem:[%s272 + $0x18] sm:$0xff] %vm1661, %v1548
      %1666 = vst.msk [vmem:[%s272 + $0x20] sm:$0xff] %vm1661, %v1552
      %1667 = vst.msk [vmem:[%s272 + $0x28] sm:$0xff] %vm1661, %v1556
      %1668 = vst.msk [vmem:[%s272 + $0x30] sm:$0xff] %vm1661, %v1560
      %1669 = vst.msk [vmem:[%s272 + $0x38] sm:$0xff] %vm1661, %v1564
      %1670 = vst.msk [vmem:[%s272 + $0x40] sm:$0xff] %vm1661, %v1568
      %1671 = vst.msk [vmem:[%s272 + $0x48] sm:$0xff] %vm1661, %v1572
      %1672 = vst.msk [vmem:[%s272 + $0x50] sm:$0xff] %vm1661, %v1576
      %1673 = vst.msk [vmem:[%s272 + $0x58] sm:$0xff] %vm1661, %v1580
      %1674 = vst.msk [vmem:[%s272 + $0x60] sm:$0xff] %vm1661, %v1584
      %1675 = vst.msk [vmem:[%s272 + $0x68] sm:$0xff] %vm1661, %v1588
      %1676 = vst.msk [vmem:[%s272 + $0x70] sm:$0xff] %vm1661, %v1592
      %1677 = vst.msk [vmem:[%s272 + $0x78] sm:$0xff] %vm1661, %v1596
      %1678 = vst.msk [vmem:[%s272 + $0x80] sm:$0xff] %vm1661, %v1600
      %1679 = vst.msk [vmem:[%s272 + $0x88] sm:$0xff] %vm1661, %v1604
      %1680 = vst.msk [vmem:[%s272 + $0x90] sm:$0xff] %vm1661, %v1608
      %1681 = vst.msk [vmem:[%s272 + $0x98] sm:$0xff] %vm1661, %v1612
      %1682 = vst.msk [vmem:[%s272 + $0xa0] sm:$0xff] %vm1661, %v1616
      %1683 = vst.msk [vmem:[%s272 + $0xa8] sm:$0xff] %vm1661, %v1620
      %1684 = vst.msk [vmem:[%s272 + $0xb0] sm:$0xff] %vm1661, %v1624
      %1685 = vst.msk [vmem:[%s272 + $0xb8] sm:$0xff] %vm1661, %v1628
      %1686 = vst.msk [vmem:[%s272 + $0xc0] sm:$0xff] %vm1661, %v1632
      %1687 = vst.msk [vmem:[%s272 + $0xc8] sm:$0xff] %vm1661, %v1636
      %1688 = vst.msk [vmem:[%s272 + $0xd0] sm:$0xff] %vm1661, %v1640
      %1689 = vst.msk [vmem:[%s272 + $0xd8] sm:$0xff] %vm1661, %v1644
      %1690 = vst.msk [vmem:[%s272 + $0xe0] sm:$0xff] %vm1661, %v1648
      %1691 = vst.msk [vmem:[%s272 + $0xe8] sm:$0xff] %vm1661, %v1652
      %1692 = vst.msk [vmem:[%s272 + $0xf0] sm:$0xff] %vm1661, %v1656
      %1693 = vst.msk [vmem:[%s272 + $0xf8] sm:$0xff] %vm1661, %v1660
      %v1694 = vmul.f32 %v830, %v830
      %v1695 = vmul.f32 %v832, %v832
      %v1696 = vmul.f32 %v1023, %v1023
      %v1697 = vmul.f32 %v834, %v834
      %v1698 = vmul.f32 %v836, %v836
      %v1699 = vmul.f32 %v1026, %v1026
      %v1700 = vmul.f32 %v840, %v840
      %v1701 = vmul.f32 %v842, %v842
      %v1702 = vmul.f32 %v1031, %v1031
      %v1703 = vmul.f32 %v844, %v844
      %v1704 = vmul.f32 %v846, %v846
      %v1705 = vmul.f32 %v1034, %v1034
      %v1706 = vmul.f32 %v850, %v850
      %v1707 = vmul.f32 %v852, %v852
      %v1708 = vmul.f32 %v1039, %v1039
      %v1709 = vmul.f32 %v854, %v854
      %v1710 = vmul.f32 %v856, %v856
      %v1711 = vmul.f32 %v1042, %v1042
      %v1712 = vmul.f32 %v860, %v860
      %v1713 = vmul.f32 %v862, %v862
      %v1714 = vmul.f32 %v1047, %v1047
      %v1715 = vmul.f32 %v864, %v864
      %v1716 = vmul.f32 %v866, %v866
      %v1717 = vmul.f32 %v1050, %v1050
      %v1718 = vmul.f32 %v870, %v870
      %v1719 = vmul.f32 %v872, %v872
      %v1720 = vmul.f32 %v1055, %v1055
      %v1721 = vmul.f32 %v874, %v874
      %v1722 = vmul.f32 %v876, %v876
      %v1723 = vmul.f32 %v1058, %v1058
      %v1724 = vmul.f32 %v880, %v880
      %v1725 = vmul.f32 %v882, %v882
      %v1726 = vmul.f32 %v1063, %v1063
      %v1727 = vmul.f32 %v884, %v884
      %v1728 = vmul.f32 %v886, %v886
      %v1729 = vmul.f32 %v1066, %v1066
      %v1730 = vmul.f32 %v890, %v890
      %v1731 = vmul.f32 %v892, %v892
      %v1732 = vmul.f32 %v1071, %v1071
      %v1733 = vmul.f32 %v894, %v894
      %v1734 = vmul.f32 %v896, %v896
      %v1735 = vmul.f32 %v1074, %v1074
      %v1736 = vmul.f32 %v900, %v900
      %v1737 = vmul.f32 %v902, %v902
      %v1738 = vmul.f32 %v1079, %v1079
      %v1739 = vmul.f32 %v904, %v904
      %v1740 = vmul.f32 %v906, %v906
      %v1741 = vmul.f32 %v1082, %v1082
      %v1742 = vmul.f32 %v910, %v910
      %v1743 = vmul.f32 %v912, %v912
      %v1744 = vmul.f32 %v1087, %v1087
      %v1745 = vmul.f32 %v914, %v914
      %v1746 = vmul.f32 %v916, %v916
      %v1747 = vmul.f32 %v1090, %v1090
      %v1748 = vmul.f32 %v920, %v920
      %v1749 = vmul.f32 %v922, %v922
      %v1750 = vmul.f32 %v1095, %v1095
      %v1751 = vmul.f32 %v924, %v924
      %v1752 = vmul.f32 %v926, %v926
      %v1753 = vmul.f32 %v1098, %v1098
      %v1754 = vmul.f32 %v930, %v930
      %v1755 = vmul.f32 %v932, %v932
      %v1756 = vmul.f32 %v1103, %v1103
      %v1757 = vmul.f32 %v934, %v934
      %v1758 = vmul.f32 %v936, %v936
      %v1759 = vmul.f32 %v1106, %v1106
      %v1760 = vmul.f32 %v940, %v940
      %v1761 = vmul.f32 %v942, %v942
      %v1762 = vmul.f32 %v1111, %v1111
      %v1763 = vmul.f32 %v944, %v944
      %v1764 = vmul.f32 %v946, %v946
      %v1765 = vmul.f32 %v1114, %v1114
      %v1766 = vmul.f32 %v950, %v950
      %v1767 = vmul.f32 %v952, %v952
      %v1768 = vmul.f32 %v1119, %v1119
      %v1769 = vmul.f32 %v954, %v954
      %v1770 = vmul.f32 %v956, %v956
      %v1771 = vmul.f32 %v1122, %v1122
      %v1772 = vmul.f32 %v960, %v960
      %v1773 = vmul.f32 %v962, %v962
      %v1774 = vmul.f32 %v1127, %v1127
      %v1775 = vmul.f32 %v964, %v964
      %v1776 = vmul.f32 %v966, %v966
      %v1777 = vmul.f32 %v1130, %v1130
      %v1778 = vmul.f32 %v970, %v970
      %v1779 = vmul.f32 %v972, %v972
      %v1780 = vmul.f32 %v1135, %v1135
      %v1781 = vmul.f32 %v974, %v974
      %v1782 = vmul.f32 %v976, %v976
      %v1783 = vmul.f32 %v1138, %v1138
      %v1784 = vmul.f32 %v980, %v980
      %v1785 = vmul.f32 %v982, %v982
      %v1786 = vmul.f32 %v1143, %v1143
      %v1787 = vmul.f32 %v984, %v984
      %v1788 = vmul.f32 %v986, %v986
      %v1789 = vmul.f32 %v1146, %v1146
      %v1790 = vadd.f32 %v1694, %v1695
      %v1791 = vadd.f32 %v1790, %v1696
      %1792 = vadd.xlane.f32.xlu0 %v1791
      %v1793 = vpop.xlane.xlu0 %1792
      %v1794 = vadd.f32 %v1697, %v1698
      %v1795 = vadd.f32 %v1794, %v1699
      %1796 = vadd.xlane.f32.xlu0 %v1795
      %v1797 = vpop.xlane.xlu0 %1796
      %v1798 = vadd.f32 %v1700, %v1701
      %v1799 = vadd.f32 %v1798, %v1702
      %1800 = vadd.xlane.f32.xlu0 %v1799
      %v1801 = vpop.xlane.xlu0 %1800
      %v1802 = vadd.f32 %v1703, %v1704
      %v1803 = vadd.f32 %v1802, %v1705
      %1804 = vadd.xlane.f32.xlu0 %v1803
      %v1805 = vpop.xlane.xlu0 %1804
      %v1806 = vadd.f32 %v1706, %v1707
      %v1807 = vadd.f32 %v1806, %v1708
      %1808 = vadd.xlane.f32.xlu0 %v1807
      %v1809 = vpop.xlane.xlu0 %1808
      %v1810 = vadd.f32 %v1709, %v1710
      %v1811 = vadd.f32 %v1810, %v1711
      %1812 = vadd.xlane.f32.xlu0 %v1811
      %v1813 = vpop.xlane.xlu0 %1812
      %v1814 = vadd.f32 %v1712, %v1713
      %v1815 = vadd.f32 %v1814, %v1714
      %1816 = vadd.xlane.f32.xlu0 %v1815
      %v1817 = vpop.xlane.xlu0 %1816
      %v1818 = vadd.f32 %v1715, %v1716
      %v1819 = vadd.f32 %v1818, %v1717
      %1820 = vadd.xlane.f32.xlu0 %v1819
      %v1821 = vpop.xlane.xlu0 %1820
      %v1822 = vadd.f32 %v1718, %v1719
      %v1823 = vadd.f32 %v1822, %v1720
      %1824 = vadd.xlane.f32.xlu0 %v1823
      %v1825 = vpop.xlane.xlu0 %1824
      %v1826 = vadd.f32 %v1721, %v1722
      %v1827 = vadd.f32 %v1826, %v1723
      %1828 = vadd.xlane.f32.xlu0 %v1827
      %v1829 = vpop.xlane.xlu0 %1828
      %v1830 = vadd.f32 %v1724, %v1725
      %v1831 = vadd.f32 %v1830, %v1726
      %1832 = vadd.xlane.f32.xlu0 %v1831
      %v1833 = vpop.xlane.xlu0 %1832
      %v1834 = vadd.f32 %v1727, %v1728
      %v1835 = vadd.f32 %v1834, %v1729
      %1836 = vadd.xlane.f32.xlu0 %v1835
      %v1837 = vpop.xlane.xlu0 %1836
      %v1838 = vadd.f32 %v1730, %v1731
      %v1839 = vadd.f32 %v1838, %v1732
      %1840 = vadd.xlane.f32.xlu0 %v1839
      %v1841 = vpop.xlane.xlu0 %1840
      %v1842 = vadd.f32 %v1733, %v1734
      %v1843 = vadd.f32 %v1842, %v1735
      %1844 = vadd.xlane.f32.xlu0 %v1843
      %v1845 = vpop.xlane.xlu0 %1844
      %v1846 = vadd.f32 %v1736, %v1737
      %v1847 = vadd.f32 %v1846, %v1738
      %1848 = vadd.xlane.f32.xlu0 %v1847
      %v1849 = vpop.xlane.xlu0 %1848
      %v1850 = vadd.f32 %v1739, %v1740
      %v1851 = vadd.f32 %v1850, %v1741
      %1852 = vadd.xlane.f32.xlu0 %v1851
      %v1853 = vpop.xlane.xlu0 %1852
      %v1854 = vadd.f32 %v1742, %v1743
      %v1855 = vadd.f32 %v1854, %v1744
      %1856 = vadd.xlane.f32.xlu0 %v1855
      %v1857 = vpop.xlane.xlu0 %1856
      %v1858 = vadd.f32 %v1745, %v1746
      %v1859 = vadd.f32 %v1858, %v1747
      %1860 = vadd.xlane.f32.xlu0 %v1859
      %v1861 = vpop.xlane.xlu0 %1860
      %v1862 = vadd.f32 %v1748, %v1749
      %v1863 = vadd.f32 %v1862, %v1750
      %1864 = vadd.xlane.f32.xlu0 %v1863
      %v1865 = vpop.xlane.xlu0 %1864
      %v1866 = vadd.f32 %v1751, %v1752
      %v1867 = vadd.f32 %v1866, %v1753
      %1868 = vadd.xlane.f32.xlu0 %v1867
      %v1869 = vpop.xlane.xlu0 %1868
      %v1870 = vadd.f32 %v1754, %v1755
      %v1871 = vadd.f32 %v1870, %v1756
      %1872 = vadd.xlane.f32.xlu0 %v1871
      %v1873 = vpop.xlane.xlu0 %1872
      %v1874 = vadd.f32 %v1757, %v1758
      %v1875 = vadd.f32 %v1874, %v1759
      %1876 = vadd.xlane.f32.xlu0 %v1875
      %v1877 = vpop.xlane.xlu0 %1876
      %v1878 = vadd.f32 %v1760, %v1761
      %v1879 = vadd.f32 %v1878, %v1762
      %1880 = vadd.xlane.f32.xlu0 %v1879
      %v1881 = vpop.xlane.xlu0 %1880
      %v1882 = vadd.f32 %v1763, %v1764
      %v1883 = vadd.f32 %v1882, %v1765
      %1884 = vadd.xlane.f32.xlu0 %v1883
      %v1885 = vpop.xlane.xlu0 %1884
      %v1886 = vadd.f32 %v1766, %v1767
      %v1887 = vadd.f32 %v1886, %v1768
      %1888 = vadd.xlane.f32.xlu0 %v1887
      %v1889 = vpop.xlane.xlu0 %1888
      %v1890 = vadd.f32 %v1769, %v1770
      %v1891 = vadd.f32 %v1890, %v1771
      %1892 = vadd.xlane.f32.xlu0 %v1891
      %v1893 = vpop.xlane.xlu0 %1892
      %v1894 = vadd.f32 %v1772, %v1773
      %v1895 = vadd.f32 %v1894, %v1774
      %1896 = vadd.xlane.f32.xlu0 %v1895
      %v1897 = vpop.xlane.xlu0 %1896
      %v1898 = vadd.f32 %v1775, %v1776
      %v1899 = vadd.f32 %v1898, %v1777
      %1900 = vadd.xlane.f32.xlu0 %v1899
      %v1901 = vpop.xlane.xlu0 %1900
      %v1902 = vadd.f32 %v1778, %v1779
      %v1903 = vadd.f32 %v1902, %v1780
      %1904 = vadd.xlane.f32.xlu0 %v1903
      %v1905 = vpop.xlane.xlu0 %1904
      %v1906 = vadd.f32 %v1781, %v1782
      %v1907 = vadd.f32 %v1906, %v1783
      %1908 = vadd.xlane.f32.xlu0 %v1907
      %v1909 = vpop.xlane.xlu0 %1908
      %v1910 = vadd.f32 %v1784, %v1785
      %v1911 = vadd.f32 %v1910, %v1786
      %1912 = vadd.xlane.f32.xlu0 %v1911
      %v1913 = vpop.xlane.xlu0 %1912
      %v1914 = vadd.f32 %v1787, %v1788
      %v1915 = vadd.f32 %v1914, %v1789
      %1916 = vadd.xlane.f32.xlu0 %v1915
      %v1917 = vpop.xlane.xlu0 %1916
      %1918 = vst.msk [vmem:[%s281] sm:$0xff] %vm1661, %v1793
      %1919 = vst.msk [vmem:[%s281 + $0x8] sm:$0xff] %vm1661, %v1797
      %1920 = vst.msk [vmem:[%s281 + $0x10] sm:$0xff] %vm1661, %v1801
      %1921 = vst.msk [vmem:[%s281 + $0x18] sm:$0xff] %vm1661, %v1805
      %1922 = vst.msk [vmem:[%s281 + $0x20] sm:$0xff] %vm1661, %v1809
      %1923 = vst.msk [vmem:[%s281 + $0x28] sm:$0xff] %vm1661, %v1813
      %1924 = vst.msk [vmem:[%s281 + $0x30] sm:$0xff] %vm1661, %v1817
      %1925 = vst.msk [vmem:[%s281 + $0x38] sm:$0xff] %vm1661, %v1821
      %1926 = vst.msk [vmem:[%s281 + $0x40] sm:$0xff] %vm1661, %v1825
      %1927 = vst.msk [vmem:[%s281 + $0x48] sm:$0xff] %vm1661, %v1829
      %1928 = vst.msk [vmem:[%s281 + $0x50] sm:$0xff] %vm1661, %v1833
      %1929 = vst.msk [vmem:[%s281 + $0x58] sm:$0xff] %vm1661, %v1837
      %1930 = vst.msk [vmem:[%s281 + $0x60] sm:$0xff] %vm1661, %v1841
      %1931 = vst.msk [vmem:[%s281 + $0x68] sm:$0xff] %vm1661, %v1845
      %1932 = vst.msk [vmem:[%s281 + $0x70] sm:$0xff] %vm1661, %v1849
      %1933 = vst.msk [vmem:[%s281 + $0x78] sm:$0xff] %vm1661, %v1853
      %1934 = vst.msk [vmem:[%s281 + $0x80] sm:$0xff] %vm1661, %v1857
      %1935 = vst.msk [vmem:[%s281 + $0x88] sm:$0xff] %vm1661, %v1861
      %1936 = vst.msk [vmem:[%s281 + $0x90] sm:$0xff] %vm1661, %v1865
      %1937 = vst.msk [vmem:[%s281 + $0x98] sm:$0xff] %vm1661, %v1869
      %1938 = vst.msk [vmem:[%s281 + $0xa0] sm:$0xff] %vm1661, %v1873
      %1939 = vst.msk [vmem:[%s281 + $0xa8] sm:$0xff] %vm1661, %v1877
      %1940 = vst.msk [vmem:[%s281 + $0xb0] sm:$0xff] %vm1661, %v1881
      %1941 = vst.msk [vmem:[%s281 + $0xb8] sm:$0xff] %vm1661, %v1885
      %1942 = vst.msk [vmem:[%s281 + $0xc0] sm:$0xff] %vm1661, %v1889
      %1943 = vst.msk [vmem:[%s281 + $0xc8] sm:$0xff] %vm1661, %v1893
      %1944 = vst.msk [vmem:[%s281 + $0xd0] sm:$0xff] %vm1661, %v1897
      %1945 = vst.msk [vmem:[%s281 + $0xd8] sm:$0xff] %vm1661, %v1901
      %1946 = vst.msk [vmem:[%s281 + $0xe0] sm:$0xff] %vm1661, %v1905
      %1947 = vst.msk [vmem:[%s281 + $0xe8] sm:$0xff] %vm1661, %v1909
      %1948 = vst.msk [vmem:[%s281 + $0xf0] sm:$0xff] %vm1661, %v1913
      %1949 = vst.msk [vmem:[%s281 + $0xf8] sm:$0xff] %vm1661, %v1917
      %s1950 = smul.u32 3, %s21
      %p1951 = scmp.lt.s32.totalorder %s20, 1
      %s1952 = scalar_select %p1951, %s20, 1
      %p1953 = scmp.lt.s32.totalorder %s1950, 2
      %s1954 = scalar_select %p1953, %s1950, 2
      %s1955 = smul.addr %s1952, 96
      %s1956 = sadd.s32 %s1954, %s1955
      %s1957 = smul.addr %s1956, 4
      %s1958 = scalar_lea.vmem %s2, %s1957
      %p1959 = scmp.lt.s32.totalorder %s20, 1
      %s1960 = scalar_select %p1959, %s20, 1
      %p1961 = scmp.lt.s32.totalorder %s21, 0
      %s1962 = scalar_select %p1961, %s21, 0
      %s1963 = smul.addr %s1962, 32
      %s1964 = smul.addr %s1960, 32
      %s1965 = sadd.s32 %s1963, %s1964
      %s1966 = smul.addr %s1965, 8
      %s1967 = scalar_lea.vmem %s3, %s1966
      %p1968 = scmp.lt.s32.totalorder %s20, 1
      %s1969 = scalar_select %p1968, %s20, 1
      %p1970 = scmp.lt.s32.totalorder %s21, 0
      %s1971 = scalar_select %p1970, %s21, 0
      %s1972 = smul.addr %s1971, 32
      %s1973 = smul.addr %s1969, 32
      %s1974 = sadd.s32 %s1972, %s1973
      %s1975 = smul.addr %s1974, 8
      %s1976 = scalar_lea.vmem %s4, %s1975
      // Predicated region
      $region29: #{point_gen_con.4} parent=27 // pred_check
        %p1977 = pneg %p97
      $region30: #{point_gen_con.4} parent=27 // pred_check_branch
        %1979 = sbr.rel (%p1977) target = $region32
      $region31: #{point_gen_con.4} parent=27 // pred_region
        %s1980 = smul.u32 3, %s21
      $region32: #{point_gen_con.4} parent=27 // pred_fallthru
        _
      // Predicated region
      $region33: #{point_gen_con.4} parent=27 // pred_check
        %p1981 = pneg %p125
      $region34: #{point_gen_con.4} parent=27 // pred_check_branch
        %1983 = sbr.rel (%p1981) target = $region36
      $region35: #{point_gen_con.4} parent=27 // pred_region
        _
      $region36: #{point_gen_con.4} parent=27 // pred_fallthru
        _
      // Predicated region
      $region37: #{point_gen_con.4} parent=27 // pred_check
        %p1984 = pneg %p153
      $region38: #{point_gen_con.4} parent=27 // pred_check_branch
        %1986 = sbr.rel (%p1984) target = $region40
      $region39: #{point_gen_con.4} parent=27 // pred_region
        _
      $region40: #{point_gen_con.4} parent=27 // pred_fallthru
        _
    $region28: #{point_gen_con.4} parent=5 // pred_fallthru
      _
    %p1987 = scmp.le.s32.totalorder 2, %s11
    // Predicated region
    $region41: #{point_gen_con.4} parent=5 // pred_check
      %p1988 = pneg %p1987
    $region42: #{point_gen_con.4} parent=5 // pred_check_branch
      %1990 = sbr.rel (%p1988) target = $region44
    $region43: #{point_gen_con.4} parent=5 // pred_region
      %s1991 = ssub.s32 %s11, 2
      // Predicated region
      $region45: #{point_gen_con.4} parent=43 // pred_check
        %p1992 = pneg %p103
      $region46: #{point_gen_con.4} parent=43 // pred_check_branch
        %1994 = sbr.rel (%p1992) target = $region48
      $region47: #{point_gen_con.4} parent=43 // pred_region
        %s1995 = smul.u32 3, %s23
        %p1996 = scmp.lt.s32.totalorder %s22, 1
        %s1997 = scalar_select %p1996, %s22, 1
        %p1998 = scmp.lt.s32.totalorder %s1995, 2
        %s1999 = scalar_select %p1998, %s1995, 2
        %s2000 = smul.addr %s1997, 96
        %s2001 = sadd.s32 %s1999, %s2000
        %s2002 = smul.addr %s2001, 4
        %s2003 = scalar_lea.vmem %s2, %s2002
      $region48: #{point_gen_con.4} parent=43 // pred_fallthru
        _
      // Predicated region
      $region49: #{point_gen_con.4} parent=43 // pred_check
        %p2004 = pneg %p131
      $region50: #{point_gen_con.4} parent=43 // pred_check_branch
        %2006 = sbr.rel (%p2004) target = $region52
      $region51: #{point_gen_con.4} parent=43 // pred_region
        %p2007 = scmp.lt.s32.totalorder %s22, 1
        %s2008 = scalar_select %p2007, %s22, 1
        %p2009 = scmp.lt.s32.totalorder %s23, 0
        %s2010 = scalar_select %p2009, %s23, 0
        %s2011 = smul.addr %s2010, 32
        %s2012 = smul.addr %s2008, 32
        %s2013 = sadd.s32 %s2011, %s2012
        %s2014 = smul.addr %s2013, 8
        %s2015 = scalar_lea.vmem %s3, %s2014
      $region52: #{point_gen_con.4} parent=43 // pred_fallthru
        _
      // Predicated region
      $region53: #{point_gen_con.4} parent=43 // pred_check
        %p2016 = pneg %p159
      $region54: #{point_gen_con.4} parent=43 // pred_check_branch
        %2018 = sbr.rel (%p2016) target = $region56
      $region55: #{point_gen_con.4} parent=43 // pred_region
        %p2019 = scmp.lt.s32.totalorder %s22, 1
        %s2020 = scalar_select %p2019, %s22, 1
        %p2021 = scmp.lt.s32.totalorder %s23, 0
        %s2022 = scalar_select %p2021, %s23, 0
        %s2023 = smul.addr %s2022, 32
        %s2024 = smul.addr %s2020, 32
        %s2025 = sadd.s32 %s2023, %s2024
        %s2026 = smul.addr %s2025, 8
        %s2027 = scalar_lea.vmem %s4, %s2026
      $region56: #{point_gen_con.4} parent=43 // pred_fallthru
        _
    $region44: #{point_gen_con.4} parent=5 // pred_fallthru
      _
  $region6: #{point_gen_con.4} parent=0 // loop_footer
    %s15 = sadd.s32 1, %s11
  $region7: #{point_gen_con.4} parent=0 // loop_footer_branch
    %10 = sbr.rel target = $region3
  $region8: #{point_gen_con.4} parent=0 // loop_exit
    _

// kernel: point_gen_con.6
$region0: #{point_gen_con.6}
  #allocation0 [shape = 'u32[]', space=smem, size = 0x4, offset = 0x4, fixed_abs, tag = 'smem constant byte address 0x4 - core index']
  #allocation1 [shape = 'u32[144,128]{1,0:T(1,128)}', space=vmem, size = 0x12000, scoped, tag = 'internal scratch']
  %s0 = inlined_call_operand.vmem [shape: bf16[2,128,384], index: 0, kind: input, shape index: {}]
  %s1 = inlined_call_operand.vmem [shape: f32[128,1], index: 1, kind: input, shape index: {}]
  %s2 = inlined_call_operand.vmem [shape: f32[128,1], index: 2, kind: input, shape index: {}]
  %s3 = inlined_call_operand.vmem [shape: bf16[64,128], index: 3, kind: input, shape index: {}]
  %s4 = inlined_call_operand.vmem [shape: bf16[2,64,384], index: 4, kind: output, shape index: {0}]
  %s5 = inlined_call_operand.vmem [shape: f32[2,1,64,1], index: 5, kind: output, shape index: {1}]
  %s6 = inlined_call_operand.vmem [shape: f32[2,1,64,1], index: 6, kind: output, shape index: {2}]
  %7 = xla_tuple %s4, %s5, %s6
  %s8 = sld [smem:[#allocation0]]
  $region65: #{point_gen_con.6} parent=0
    _
  %s10 = ssub.s32 1, %s8
  %s11 = scalar_select 0, %s10, %s8
  loop: start=0, step=1, limit=4
  $region2: #{point_gen_con.6} parent=0 // loop_pre_header
    _
  $region3: #{point_gen_con.6} parent=0 // loop_header
    %s13 = sphi 0, %s17
    %p14 = scmp.ge.s32.totalorder %s13, 4
    %s20 = sphi 0, %s32
    %s21 = sphi 0, %s28
    %s22 = sphi 0, %s20
    %s23 = sphi 0, %s21
    %s24 = sphi 0, %s22
    %s25 = sphi 0, %s23
    %s37 = sphi 0, %s39
    %s40 = sphi 0, %s37
    %s41 = sphi 0, %s40
    %s57 = sphi 0, %s41
    %s61 = sphi 0, %s61
    %s63 = sphi 0, %s61
    %s64 = sphi 0, %s63
    %s78 = sphi 0, %s64
    %s82 = sphi 0, %s82
    %s84 = sphi 0, %s82
    %s85 = sphi 0, %s84
    %s99 = sphi 0, %s85
    %s103 = sphi 0, %s103
    %s105 = sphi 0, %s103
    %s106 = sphi 0, %s105
    %s120 = sphi 0, %s106
    %s128 = sphi 0, %s130
    %s131 = sphi 0, %s128
    %s132 = sphi 0, %s131
    %s148 = sphi 0, %s132
    %s156 = sphi 0, %s158
    %s159 = sphi 0, %s156
    %s160 = sphi 0, %s159
    %s176 = sphi 0, %s160
    %s184 = sphi 0, %s186
    %s187 = sphi 0, %s184
    %s188 = sphi 0, %s187
    %s204 = sphi 0, %s188
  $region4: #{point_gen_con.6} parent=0 // loop_header_branch
    %16 = sbr.rel (%p14) target = $region8
  $region5: #{point_gen_con.6} parent=0 // loop_body
    %s18 = ssub.s32 %s13, 1
    %s19 = ssub.s32 %s13, 2
    %s26 = sadd.s32 1, %s21
    %p27 = scmp.ge.s32.totalorder %s26, 1
    %s28 = scalar_select %p27, 0, %s26
    %s29 = sadd.s32 1, %s20
    %s30 = scalar_select %p27, %s29, %s20
    %p31 = scmp.ge.s32.totalorder %s30, 2
    %s32 = scalar_select %p31, 0, %s30
    %s33 = ssub.s32 %s20, %s32
    %s34 = ssub.s32 %s21, %s28
    %s35 = sor.u32 %s33, %s34
    %p36 = scmp.eq.s32.totalorder %s35, 0
    %s38 = sadd.s32 %s37, 1
    %s39 = scalar_select %p36, %s37, %s38
    %p42 = pneg %p36
    %p43 = scmp.eq.s32.totalorder %s13, 1
    %p44 = por %p42, %p43
    %p45 = scmp.ne.s32.totalorder %s37, %s40
    %p46 = scmp.eq.s32.totalorder %s13, 0
    %p47 = por %p45, %p46
    %p48 = scmp.ne.s32.totalorder %s37, %s40
    %p49 = scmp.eq.s32.totalorder %s18, 1
    %p50 = por %p48, %p49
    %p51 = scmp.ne.s32.totalorder %s40, %s41
    %p52 = scmp.eq.s32.totalorder %s18, 0
    %p53 = por %p51, %p52
    %p54 = scmp.ne.s32.totalorder %s40, %s41
    %p55 = scmp.eq.s32.totalorder %s19, 1
    %p56 = por %p54, %p55
    %p58 = scmp.ne.s32.totalorder %s41, %s57
    %p59 = scmp.eq.s32.totalorder %s19, 0
    %p60 = por %p58, %p59
    %s62 = sadd.s32 %s61, 1
    %p65 = scmp.eq.s32.totalorder %s13, 1
    %p66 = scmp.ne.s32.totalorder %s61, %s63
    %p67 = scmp.eq.s32.totalorder %s13, 0
    %p68 = por %p66, %p67
    %p69 = scmp.ne.s32.totalorder %s61, %s63
    %p70 = scmp.eq.s32.totalorder %s18, 1
    %p71 = por %p69, %p70
    %p72 = scmp.ne.s32.totalorder %s63, %s64
    %p73 = scmp.eq.s32.totalorder %s18, 0
    %p74 = por %p72, %p73
    %p75 = scmp.ne.s32.totalorder %s63, %s64
    %p76 = scmp.eq.s32.totalorder %s19, 1
    %p77 = por %p75, %p76
    %p79 = scmp.ne.s32.totalorder %s64, %s78
    %p80 = scmp.eq.s32.totalorder %s19, 0
    %p81 = por %p79, %p80
    %s83 = sadd.s32 %s82, 1
    %p86 = scmp.eq.s32.totalorder %s13, 1
    %p87 = scmp.ne.s32.totalorder %s82, %s84
    %p88 = scmp.eq.s32.totalorder %s13, 0
    %p89 = por %p87, %p88
    %p90 = scmp.ne.s32.totalorder %s82, %s84
    %p91 = scmp.eq.s32.totalorder %s18, 1
    %p92 = por %p90, %p91
    %p93 = scmp.ne.s32.totalorder %s84, %s85
    %p94 = scmp.eq.s32.totalorder %s18, 0
    %p95 = por %p93, %p94
    %p96 = scmp.ne.s32.totalorder %s84, %s85
    %p97 = scmp.eq.s32.totalorder %s19, 1
    %p98 = por %p96, %p97
    %p100 = scmp.ne.s32.totalorder %s85, %s99
    %p101 = scmp.eq.s32.totalorder %s19, 0
    %p102 = por %p100, %p101
    %s104 = sadd.s32 %s103, 1
    %p107 = scmp.eq.s32.totalorder %s13, 1
    %p108 = scmp.ne.s32.totalorder %s103, %s105
    %p109 = scmp.eq.s32.totalorder %s13, 0
    %p110 = por %p108, %p109
    %p111 = scmp.ne.s32.totalorder %s103, %s105
    %p112 = scmp.eq.s32.totalorder %s18, 1
    %p113 = por %p111, %p112
    %p114 = scmp.ne.s32.totalorder %s105, %s106
    %p115 = scmp.eq.s32.totalorder %s18, 0
    %p116 = por %p114, %p115
    %p117 = scmp.ne.s32.totalorder %s105, %s106
    %p118 = scmp.eq.s32.totalorder %s19, 1
    %p119 = por %p117, %p118
    %p121 = scmp.ne.s32.totalorder %s106, %s120
    %p122 = scmp.eq.s32.totalorder %s19, 0
    %p123 = por %p121, %p122
    %s124 = ssub.s32 %s20, %s32
    %s125 = ssub.s32 %s21, %s28
    %s126 = sor.u32 %s124, %s125
    %p127 = scmp.eq.s32.totalorder %s126, 0
    %s129 = sadd.s32 %s128, 1
    %s130 = scalar_select %p127, %s128, %s129
    %p133 = pneg %p127
    %p134 = scmp.eq.s32.totalorder %s13, 1
    %p135 = por %p133, %p134
    %p136 = scmp.ne.s32.totalorder %s128, %s131
    %p137 = scmp.eq.s32.totalorder %s13, 0
    %p138 = por %p136, %p137
    %p139 = scmp.ne.s32.totalorder %s128, %s131
    %p140 = scmp.eq.s32.totalorder %s18, 1
    %p141 = por %p139, %p140
    %p142 = scmp.ne.s32.totalorder %s131, %s132
    %p143 = scmp.eq.s32.totalorder %s18, 0
    %p144 = por %p142, %p143
    %p145 = scmp.ne.s32.totalorder %s131, %s132
    %p146 = scmp.eq.s32.totalorder %s19, 1
    %p147 = por %p145, %p146
    %p149 = scmp.ne.s32.totalorder %s132, %s148
    %p150 = scmp.eq.s32.totalorder %s19, 0
    %p151 = por %p149, %p150
    %s152 = ssub.s32 %s20, %s32
    %s153 = ssub.s32 %s21, %s28
    %s154 = sor.u32 %s152, %s153
    %p155 = scmp.eq.s32.totalorder %s154, 0
    %s157 = sadd.s32 %s156, 1
    %s158 = scalar_select %p155, %s156, %s157
    %p161 = pneg %p155
    %p162 = scmp.eq.s32.totalorder %s13, 1
    %p163 = por %p161, %p162
    %p164 = scmp.ne.s32.totalorder %s156, %s159
    %p165 = scmp.eq.s32.totalorder %s13, 0
    %p166 = por %p164, %p165
    %p167 = scmp.ne.s32.totalorder %s156, %s159
    %p168 = scmp.eq.s32.totalorder %s18, 1
    %p169 = por %p167, %p168
    %p170 = scmp.ne.s32.totalorder %s159, %s160
    %p171 = scmp.eq.s32.totalorder %s18, 0
    %p172 = por %p170, %p171
    %p173 = scmp.ne.s32.totalorder %s159, %s160
    %p174 = scmp.eq.s32.totalorder %s19, 1
    %p175 = por %p173, %p174
    %p177 = scmp.ne.s32.totalorder %s160, %s176
    %p178 = scmp.eq.s32.totalorder %s19, 0
    %p179 = por %p177, %p178
    %s180 = ssub.s32 %s20, %s32
    %s181 = ssub.s32 %s21, %s28
    %s182 = sor.u32 %s180, %s181
    %p183 = scmp.eq.s32.totalorder %s182, 0
    %s185 = sadd.s32 %s184, 1
    %s186 = scalar_select %p183, %s184, %s185
    %p189 = pneg %p183
    %p190 = scmp.eq.s32.totalorder %s13, 1
    %p191 = por %p189, %p190
    %p192 = scmp.ne.s32.totalorder %s184, %s187
    %p193 = scmp.eq.s32.totalorder %s13, 0
    %p194 = por %p192, %p193
    %p195 = scmp.ne.s32.totalorder %s184, %s187
    %p196 = scmp.eq.s32.totalorder %s18, 1
    %p197 = por %p195, %p196
    %p198 = scmp.ne.s32.totalorder %s187, %s188
    %p199 = scmp.eq.s32.totalorder %s18, 0
    %p200 = por %p198, %p199
    %p201 = scmp.ne.s32.totalorder %s187, %s188
    %p202 = scmp.eq.s32.totalorder %s19, 1
    %p203 = por %p201, %p202
    %p205 = scmp.ne.s32.totalorder %s188, %s204
    %p206 = scmp.eq.s32.totalorder %s19, 0
    %p207 = por %p205, %p206
    %p208 = scmp.le.s32.totalorder 1, %s13
    %p209 = scmp.lt.s32.totalorder %s13, 3
    %p210 = pnand %p208, %p209
    %p211 = pneg %p210
    // Predicated region
    $region9: #{point_gen_con.6} parent=5 // pred_check
      _
    $region10: #{point_gen_con.6} parent=5 // pred_check_branch
      %213 = sbr.rel (%p210) target = $region12
    $region11: #{point_gen_con.6} parent=5 // pred_region
      %s214 = ssub.s32 %s13, 1
      // Predicated region
      $region13: #{point_gen_con.6} parent=11 // pred_check
        %p215 = pneg %p74
      $region14: #{point_gen_con.6} parent=11 // pred_check_branch
        %217 = sbr.rel (%p215) target = $region16
      $region15: #{point_gen_con.6} parent=11 // pred_region
        _
      $region16: #{point_gen_con.6} parent=11 // pred_fallthru
        _
      // Predicated region
      $region17: #{point_gen_con.6} parent=11 // pred_check
        %p218 = pneg %p95
      $region18: #{point_gen_con.6} parent=11 // pred_check_branch
        %220 = sbr.rel (%p218) target = $region20
      $region19: #{point_gen_con.6} parent=11 // pred_region
        _
      $region20: #{point_gen_con.6} parent=11 // pred_fallthru
        _
      // Predicated region
      $region21: #{point_gen_con.6} parent=11 // pred_check
        %p221 = pneg %p116
      $region22: #{point_gen_con.6} parent=11 // pred_check_branch
        %223 = sbr.rel (%p221) target = $region24
      $region23: #{point_gen_con.6} parent=11 // pred_region
        _
      $region24: #{point_gen_con.6} parent=11 // pred_fallthru
        _
    $region12: #{point_gen_con.6} parent=5 // pred_fallthru
      _
    %p224 = scmp.lt.s32.totalorder %s13, 2
    // Predicated region
    $region25: #{point_gen_con.6} parent=5 // pred_check
      %p225 = pneg %p224
    $region26: #{point_gen_con.6} parent=5 // pred_check_branch
      %227 = sbr.rel (%p225) target = $region28
    $region27: #{point_gen_con.6} parent=5 // pred_region
      // Predicated region
      $region29: #{point_gen_con.6} parent=27 // pred_check
        %p228 = pneg %p47
      $region30: #{point_gen_con.6} parent=27 // pred_check_branch
        %230 = sbr.rel (%p228) target = $region32
      $region31: #{point_gen_con.6} parent=27 // pred_region
        %s231 = smul.u32 3, %s21
        %p232 = scmp.lt.s32.totalorder %s20, 1
        %s233 = scalar_select %p232, %s20, 1
        %p234 = scmp.lt.s32.totalorder %s231, 2
        %s235 = scalar_select %p234, %s231, 2
        %s236 = smul.addr %s233, 48
        %s237 = sadd.s32 %s235, %s236
        %s238 = smul.addr %s237, 4
        %s239 = scalar_lea.vmem %s0, %s238
        %s240 = smul.u32 3, %s21
      $region32: #{point_gen_con.6} parent=27 // pred_fallthru
        _
    $region28: #{point_gen_con.6} parent=5 // pred_fallthru
      _
    %p241 = scmp.le.s32.totalorder 1, %s13
    %p242 = scmp.lt.s32.totalorder %s13, 3
    %p243 = pnand %p241, %p242
    %p244 = pneg %p243
    // Predicated region
    $region33: #{point_gen_con.6} parent=5 // pred_check
      _
    $region34: #{point_gen_con.6} parent=5 // pred_check_branch
      %246 = sbr.rel (%p243) target = $region36
    $region35: #{point_gen_con.6} parent=5 // pred_region
      %s247 = ssub.s32 %s13, 1
      %s248 = smul.u32 3, %s23
      %p249 = scmp.lt.s32.totalorder %s22, 1
      %s250 = scalar_select %p249, %s22, 1
      %p251 = scmp.lt.s32.totalorder %s248, 2
      %s252 = scalar_select %p251, %s248, 2
      %s253 = smul.addr %s250, 48
      %s254 = sadd.s32 %s252, %s253
      %s255 = smul.addr %s254, 4
      %s256 = scalar_lea.vmem %s0, %s255
      %p257 = pneg %p53
      %p258 = pneg %p50
      %p259 = pneg %p74
      %p260 = pneg %p71
      %p261 = pneg %p95
      %p262 = pneg %p92
      %p263 = pneg %p116
      %p264 = pneg %p113
      %p265 = pneg %p144
      %p266 = pneg %p141
      %s267 = smul.u32 3, %s23
      %p268 = scmp.lt.s32.totalorder %s22, 1
      %s269 = scalar_select %p268, %s22, 1
      %p270 = scmp.lt.s32.totalorder %s267, 2
      %s271 = scalar_select %p270, %s267, 2
      %s272 = smul.addr %s269, 24
      %s273 = sadd.s32 %s271, %s272
      %s274 = smul.addr %s273, 4
      %s275 = scalar_lea.vmem %s4, %s274
      %p276 = pneg %p172
      %p277 = pneg %p169
      %p278 = scmp.lt.s32.totalorder %s22, 1
      %s279 = scalar_select %p278, %s22, 1
      %p280 = scmp.lt.s32.totalorder %s23, 0
      %s281 = scalar_select %p280, %s23, 0
      %s282 = smul.addr %s281, 8
      %s283 = smul.addr %s279, 8
      %s284 = sadd.s32 %s282, %s283
      %s285 = smul.addr %s284, 8
      %s286 = scalar_lea.vmem %s5, %s285
      %p287 = pneg %p200
      %p288 = pneg %p197
      %p289 = scmp.lt.s32.totalorder %s22, 1
      %s290 = scalar_select %p289, %s22, 1
      %p291 = scmp.lt.s32.totalorder %s23, 0
      %s292 = scalar_select %p291, %s23, 0
      %s293 = smul.addr %s292, 8
      %s294 = smul.addr %s290, 8
      %s295 = sadd.s32 %s293, %s294
      %s296 = smul.addr %s295, 8
      %s297 = scalar_lea.vmem %s6, %s296
      %s298 = smul.u32 3, %s23
      %p299 = scmp.lt.s32.totalorder %s22, 1
      %s300 = scalar_select %p299, %s22, 1
      %p301 = scmp.lt.s32.totalorder %s298, 2
      %s302 = scalar_select %p301, %s298, 2
      %s303 = smul.addr %s300, 48
      %s304 = sadd.s32 %s302, %s303
      %s305 = smul.addr %s304, 4
      %s306 = scalar_lea.vmem %s0, %s305
      %s307 = smul.u32 3, %s23
      %s308 = smul.u32 3, %s23
      %p309 = scmp.lt.s32.totalorder %s22, 1
      %s310 = scalar_select %p309, %s22, 1
      %p311 = scmp.lt.s32.totalorder %s308, 2
      %s312 = scalar_select %p311, %s308, 2
      %s313 = smul.addr %s310, 24
      %s314 = sadd.s32 %s312, %s313
      %s315 = smul.addr %s314, 4
      %s316 = scalar_lea.vmem %s4, %s315
      %s317 = smul.u32 3, %s23
      %p318 = scmp.lt.s32.totalorder %s22, 1
      %s319 = scalar_select %p318, %s22, 1
      %p320 = scmp.lt.s32.totalorder %s23, 0
      %s321 = scalar_select %p320, %s23, 0
      %s322 = smul.addr %s321, 8
      %s323 = smul.addr %s319, 8
      %s324 = sadd.s32 %s322, %s323
      %s325 = smul.addr %s324, 8
      %s326 = scalar_lea.vmem %s5, %s325
      %p327 = scmp.lt.s32.totalorder %s22, 1
      %s328 = scalar_select %p327, %s22, 1
      %p329 = scmp.lt.s32.totalorder %s23, 0
      %s330 = scalar_select %p329, %s23, 0
      %s331 = smul.addr %s330, 8
      %s332 = smul.addr %s328, 8
      %s333 = sadd.s32 %s331, %s332
      %s334 = smul.addr %s333, 8
      %s335 = scalar_lea.vmem %s6, %s334
      %v337 = vld [vmem:[%s306] sm:$0xff]
      %v338 = vld [vmem:[%s306 + $0x8] sm:$0xf]
      %v339 = vld [vmem:[%s306 + $0xc] sm:$0xff]
      %v340 = vld [vmem:[%s306 + $0x14] sm:$0xf]
      %v341 = vld [vmem:[%s306 + $0x18] sm:$0xff]
      %v342 = vld [vmem:[%s306 + $0x20] sm:$0xf]
      %v343 = vld [vmem:[%s306 + $0x24] sm:$0xff]
      %v344 = vld [vmem:[%s306 + $0x2c] sm:$0xf]
      %v345 = vld [vmem:[%s306 + $0x30] sm:$0xff]
      %v346 = vld [vmem:[%s306 + $0x38] sm:$0xf]
      %v347 = vld [vmem:[%s306 + $0x3c] sm:$0xff]
      %v348 = vld [vmem:[%s306 + $0x44] sm:$0xf]
      %v349 = vld [vmem:[%s306 + $0x48] sm:$0xff]
      %v350 = vld [vmem:[%s306 + $0x50] sm:$0xf]
      %v351 = vld [vmem:[%s306 + $0x54] sm:$0xff]
      %v352 = vld [vmem:[%s306 + $0x5c] sm:$0xf]
      %v353 = vld [vmem:[%s306 + $0x60] sm:$0xff]
      %v354 = vld [vmem:[%s306 + $0x68] sm:$0xf]
      %v355 = vld [vmem:[%s306 + $0x6c] sm:$0xff]
      %v356 = vld [vmem:[%s306 + $0x74] sm:$0xf]
      %v357 = vld [vmem:[%s306 + $0x78] sm:$0xff]
      %v358 = vld [vmem:[%s306 + $0x80] sm:$0xf]
      %v359 = vld [vmem:[%s306 + $0x84] sm:$0xff]
      %v360 = vld [vmem:[%s306 + $0x8c] sm:$0xf]
      %v361 = vld [vmem:[%s306 + $0x90] sm:$0xff]
      %v362 = vld [vmem:[%s306 + $0x98] sm:$0xf]
      %v363 = vld [vmem:[%s306 + $0x9c] sm:$0xff]
      %v364 = vld [vmem:[%s306 + $0xa4] sm:$0xf]
      %v365 = vld [vmem:[%s306 + $0xa8] sm:$0xff]
      %v366 = vld [vmem:[%s306 + $0xb0] sm:$0xf]
      %v367 = vld [vmem:[%s306 + $0xb4] sm:$0xff]
      %v368 = vld [vmem:[%s306 + $0xbc] sm:$0xf]
      %v369 = vunpack.c.l.bf16 %v337
      %v370 = vunpack.c.h.bf16 %v337
      %v371 = vunpack.c.l.bf16 %v338
      %v372 = vunpack.c.l.bf16 %v339
      %v373 = vunpack.c.h.bf16 %v339
      %v374 = vunpack.c.l.bf16 %v340
      %v375 = vunpack.c.l.bf16 %v341
      %v376 = vunpack.c.h.bf16 %v341
      %v377 = vunpack.c.l.bf16 %v342
      %v378 = vunpack.c.l.bf16 %v343
      %v379 = vunpack.c.h.bf16 %v343
      %v380 = vunpack.c.l.bf16 %v344
      %v381 = vunpack.c.l.bf16 %v345
      %v382 = vunpack.c.h.bf16 %v345
      %v383 = vunpack.c.l.bf16 %v346
      %v384 = vunpack.c.l.bf16 %v347
      %v385 = vunpack.c.h.bf16 %v347
      %v386 = vunpack.c.l.bf16 %v348
      %v387 = vunpack.c.l.bf16 %v349
      %v388 = vunpack.c.h.bf16 %v349
      %v389 = vunpack.c.l.bf16 %v350
      %v390 = vunpack.c.l.bf16 %v351
      %v391 = vunpack.c.h.bf16 %v351
      %v392 = vunpack.c.l.bf16 %v352
      %v393 = vunpack.c.l.bf16 %v353
      %v394 = vunpack.c.h.bf16 %v353
      %v395 = vunpack.c.l.bf16 %v354
      %v396 = vunpack.c.l.bf16 %v355
      %v397 = vunpack.c.h.bf16 %v355
      %v398 = vunpack.c.l.bf16 %v356
      %v399 = vunpack.c.l.bf16 %v357
      %v400 = vunpack.c.h.bf16 %v357
      %v401 = vunpack.c.l.bf16 %v358
      %v402 = vunpack.c.l.bf16 %v359
      %v403 = vunpack.c.h.bf16 %v359
      %v404 = vunpack.c.l.bf16 %v360
      %v405 = vunpack.c.l.bf16 %v361
      %v406 = vunpack.c.h.bf16 %v361
      %v407 = vunpack.c.l.bf16 %v362
      %v408 = vunpack.c.l.bf16 %v363
      %v409 = vunpack.c.h.bf16 %v363
      %v410 = vunpack.c.l.bf16 %v364
      %v411 = vunpack.c.l.bf16 %v365
      %v412 = vunpack.c.h.bf16 %v365
      %v413 = vunpack.c.l.bf16 %v366
      %v414 = vunpack.c.l.bf16 %v367
      %v415 = vunpack.c.h.bf16 %v367
      %v416 = vunpack.c.l.bf16 %v368
      %v417 = vld [vmem:[%s1] sm:$0xff]
      %v418 = vld [vmem:[%s1 + $0x8] sm:$0xff]
      %v419 = vld [vmem:[%s1 + $0x10] sm:$0xff]
      %v420 = vld [vmem:[%s1 + $0x18] sm:$0xff]
      %v421 = vld [vmem:[%s1 + $0x20] sm:$0xff]
      %v422 = vld [vmem:[%s1 + $0x28] sm:$0xff]
      %v423 = vld [vmem:[%s1 + $0x30] sm:$0xff]
      %v424 = vld [vmem:[%s1 + $0x38] sm:$0xff]
      %v425 = vld [vmem:[%s1 + $0x40] sm:$0xff]
      %v426 = vld [vmem:[%s1 + $0x48] sm:$0xff]
      %v427 = vld [vmem:[%s1 + $0x50] sm:$0xff]
      %v428 = vld [vmem:[%s1 + $0x58] sm:$0xff]
      %v429 = vld [vmem:[%s1 + $0x60] sm:$0xff]
      %v430 = vld [vmem:[%s1 + $0x68] sm:$0xff]
      %v431 = vld [vmem:[%s1 + $0x70] sm:$0xff]
      %v432 = vld [vmem:[%s1 + $0x78] sm:$0xff]
      %434 = vset.pattern.permute.xlu0 0
      %435 = vperm.xlu0 %434, %v417
      %v436 = vpop.permute.xlu0 %435
      %439 = vset.pattern.permute.xlu0 0
      %440 = vperm.xlu0 %439, %v418
      %v441 = vpop.permute.xlu0 %440
      %444 = vset.pattern.permute.xlu0 0
      %445 = vperm.xlu0 %444, %v419
      %v446 = vpop.permute.xlu0 %445
      %449 = vset.pattern.permute.xlu0 0
      %450 = vperm.xlu0 %449, %v420
      %v451 = vpop.permute.xlu0 %450
      %454 = vset.pattern.permute.xlu0 0
      %455 = vperm.xlu0 %454, %v421
      %v456 = vpop.permute.xlu0 %455
      %459 = vset.pattern.permute.xlu0 0
      %460 = vperm.xlu0 %459, %v422
      %v461 = vpop.permute.xlu0 %460
      %464 = vset.pattern.permute.xlu0 0
      %465 = vperm.xlu0 %464, %v423
      %v466 = vpop.permute.xlu0 %465
      %469 = vset.pattern.permute.xlu0 0
      %470 = vperm.xlu0 %469, %v424
      %v471 = vpop.permute.xlu0 %470
      %474 = vset.pattern.permute.xlu0 0
      %475 = vperm.xlu0 %474, %v425
      %v476 = vpop.permute.xlu0 %475
      %479 = vset.pattern.permute.xlu0 0
      %480 = vperm.xlu0 %479, %v426
      %v481 = vpop.permute.xlu0 %480
      %484 = vset.pattern.permute.xlu0 0
      %485 = vperm.xlu0 %484, %v427
      %v486 = vpop.permute.xlu0 %485
      %489 = vset.pattern.permute.xlu0 0
      %490 = vperm.xlu0 %489, %v428
      %v491 = vpop.permute.xlu0 %490
      %494 = vset.pattern.permute.xlu0 0
      %495 = vperm.xlu0 %494, %v429
      %v496 = vpop.permute.xlu0 %495
      %499 = vset.pattern.permute.xlu0 0
      %500 = vperm.xlu0 %499, %v430
      %v501 = vpop.permute.xlu0 %500
      %504 = vset.pattern.permute.xlu0 0
      %505 = vperm.xlu0 %504, %v431
      %v506 = vpop.permute.xlu0 %505
      %509 = vset.pattern.permute.xlu0 0
      %510 = vperm.xlu0 %509, %v432
      %v511 = vpop.permute.xlu0 %510
      %v513 = vmul.f32 %v369, %v436
      %v514 = vmul.f32 %v370, %v436
      %v515 = vmul.f32 %v371, %v436
      %v516 = vmul.f32 %v372, %v441
      %v517 = vmul.f32 %v373, %v441
      %v518 = vmul.f32 %v374, %v441
      %v519 = vmul.f32 %v375, %v446
      %v520 = vmul.f32 %v376, %v446
      %v521 = vmul.f32 %v377, %v446
      %v522 = vmul.f32 %v378, %v451
      %v523 = vmul.f32 %v379, %v451
      %v524 = vmul.f32 %v380, %v451
      %v525 = vmul.f32 %v381, %v456
      %v526 = vmul.f32 %v382, %v456
      %v527 = vmul.f32 %v383, %v456
      %v528 = vmul.f32 %v384, %v461
      %v529 = vmul.f32 %v385, %v461
      %v530 = vmul.f32 %v386, %v461
      %v531 = vmul.f32 %v387, %v466
      %v532 = vmul.f32 %v388, %v466
      %v533 = vmul.f32 %v389, %v466
      %v534 = vmul.f32 %v390, %v471
      %v535 = vmul.f32 %v391, %v471
      %v536 = vmul.f32 %v392, %v471
      %v537 = vmul.f32 %v393, %v476
      %v538 = vmul.f32 %v394, %v476
      %v539 = vmul.f32 %v395, %v476
      %v540 = vmul.f32 %v396, %v481
      %v541 = vmul.f32 %v397, %v481
      %v542 = vmul.f32 %v398, %v481
      %v543 = vmul.f32 %v399, %v486
      %v544 = vmul.f32 %v400, %v486
      %v545 = vmul.f32 %v401, %v486
      %v546 = vmul.f32 %v402, %v491
      %v547 = vmul.f32 %v403, %v491
      %v548 = vmul.f32 %v404, %v491
      %v549 = vmul.f32 %v405, %v496
      %v550 = vmul.f32 %v406, %v496
      %v551 = vmul.f32 %v407, %v496
      %v552 = vmul.f32 %v408, %v501
      %v553 = vmul.f32 %v409, %v501
      %v554 = vmul.f32 %v410, %v501
      %v555 = vmul.f32 %v411, %v506
      %v556 = vmul.f32 %v412, %v506
      %v557 = vmul.f32 %v413, %v506
      %v558 = vmul.f32 %v414, %v511
      %v559 = vmul.f32 %v415, %v511
      %v560 = vmul.f32 %v416, %v511
      %v561 = vld [vmem:[%s2] sm:$0xff]
      %v562 = vld [vmem:[%s2 + $0x8] sm:$0xff]
      %v563 = vld [vmem:[%s2 + $0x10] sm:$0xff]
      %v564 = vld [vmem:[%s2 + $0x18] sm:$0xff]
      %v565 = vld [vmem:[%s2 + $0x20] sm:$0xff]
      %v566 = vld [vmem:[%s2 + $0x28] sm:$0xff]
      %v567 = vld [vmem:[%s2 + $0x30] sm:$0xff]
      %v568 = vld [vmem:[%s2 + $0x38] sm:$0xff]
      %v569 = vld [vmem:[%s2 + $0x40] sm:$0xff]
      %v570 = vld [vmem:[%s2 + $0x48] sm:$0xff]
      %v571 = vld [vmem:[%s2 + $0x50] sm:$0xff]
      %v572 = vld [vmem:[%s2 + $0x58] sm:$0xff]
      %v573 = vld [vmem:[%s2 + $0x60] sm:$0xff]
      %v574 = vld [vmem:[%s2 + $0x68] sm:$0xff]
      %v575 = vld [vmem:[%s2 + $0x70] sm:$0xff]
      %v576 = vld [vmem:[%s2 + $0x78] sm:$0xff]
      %578 = vset.pattern.permute.xlu0 0
      %579 = vperm.xlu0 %578, %v561
      %v580 = vpop.permute.xlu0 %579
      %583 = vset.pattern.permute.xlu0 0
      %584 = vperm.xlu0 %583, %v562
      %v585 = vpop.permute.xlu0 %584
      %588 = vset.pattern.permute.xlu0 0
      %589 = vperm.xlu0 %588, %v563
      %v590 = vpop.permute.xlu0 %589
      %593 = vset.pattern.permute.xlu0 0
      %594 = vperm.xlu0 %593, %v564
      %v595 = vpop.permute.xlu0 %594
      %598 = vset.pattern.permute.xlu0 0
      %599 = vperm.xlu0 %598, %v565
      %v600 = vpop.permute.xlu0 %599
      %603 = vset.pattern.permute.xlu0 0
      %604 = vperm.xlu0 %603, %v566
      %v605 = vpop.permute.xlu0 %604
      %608 = vset.pattern.permute.xlu0 0
      %609 = vperm.xlu0 %608, %v567
      %v610 = vpop.permute.xlu0 %609
      %613 = vset.pattern.permute.xlu0 0
      %614 = vperm.xlu0 %613, %v568
      %v615 = vpop.permute.xlu0 %614
      %618 = vset.pattern.permute.xlu0 0
      %619 = vperm.xlu0 %618, %v569
      %v620 = vpop.permute.xlu0 %619
      %623 = vset.pattern.permute.xlu0 0
      %624 = vperm.xlu0 %623, %v570
      %v625 = vpop.permute.xlu0 %624
      %628 = vset.pattern.permute.xlu0 0
      %629 = vperm.xlu0 %628, %v571
      %v630 = vpop.permute.xlu0 %629
      %633 = vset.pattern.permute.xlu0 0
      %634 = vperm.xlu0 %633, %v572
      %v635 = vpop.permute.xlu0 %634
      %638 = vset.pattern.permute.xlu0 0
      %639 = vperm.xlu0 %638, %v573
      %v640 = vpop.permute.xlu0 %639
      %643 = vset.pattern.permute.xlu0 0
      %644 = vperm.xlu0 %643, %v574
      %v645 = vpop.permute.xlu0 %644
      %648 = vset.pattern.permute.xlu0 0
      %649 = vperm.xlu0 %648, %v575
      %v650 = vpop.permute.xlu0 %649
      %653 = vset.pattern.permute.xlu0 0
      %654 = vperm.xlu0 %653, %v576
      %v655 = vpop.permute.xlu0 %654
      %v657 = vadd.f32 %v513, %v580
      %v658 = vadd.f32 %v514, %v580
      %v659 = vadd.f32 %v515, %v580
      %v660 = vadd.f32 %v516, %v585
      %v661 = vadd.f32 %v517, %v585
      %v662 = vadd.f32 %v518, %v585
      %v663 = vadd.f32 %v519, %v590
      %v664 = vadd.f32 %v520, %v590
      %v665 = vadd.f32 %v521, %v590
      %v666 = vadd.f32 %v522, %v595
      %v667 = vadd.f32 %v523, %v595
      %v668 = vadd.f32 %v524, %v595
      %v669 = vadd.f32 %v525, %v600
      %v670 = vadd.f32 %v526, %v600
      %v671 = vadd.f32 %v527, %v600
      %v672 = vadd.f32 %v528, %v605
      %v673 = vadd.f32 %v529, %v605
      %v674 = vadd.f32 %v530, %v605
      %v675 = vadd.f32 %v531, %v610
      %v676 = vadd.f32 %v532, %v610
      %v677 = vadd.f32 %v533, %v610
      %v678 = vadd.f32 %v534, %v615
      %v679 = vadd.f32 %v535, %v615
      %v680 = vadd.f32 %v536, %v615
      %v681 = vadd.f32 %v537, %v620
      %v682 = vadd.f32 %v538, %v620
      %v683 = vadd.f32 %v539, %v620
      %v684 = vadd.f32 %v540, %v625
      %v685 = vadd.f32 %v541, %v625
      %v686 = vadd.f32 %v542, %v625
      %v687 = vadd.f32 %v543, %v630
      %v688 = vadd.f32 %v544, %v630
      %v689 = vadd.f32 %v545, %v630
      %v690 = vadd.f32 %v546, %v635
      %v691 = vadd.f32 %v547, %v635
      %v692 = vadd.f32 %v548, %v635
      %v693 = vadd.f32 %v549, %v640
      %v694 = vadd.f32 %v550, %v640
      %v695 = vadd.f32 %v551, %v640
      %v696 = vadd.f32 %v552, %v645
      %v697 = vadd.f32 %v553, %v645
      %v698 = vadd.f32 %v554, %v645
      %v699 = vadd.f32 %v555, %v650
      %v700 = vadd.f32 %v556, %v650
      %v701 = vadd.f32 %v557, %v650
      %v702 = vadd.f32 %v558, %v655
      %v703 = vadd.f32 %v559, %v655
      %v704 = vadd.f32 %v560, %v655
      %v705 = vmax.f32 %v657, 0.0
      %v706 = vmax.f32 %v658, 0.0
      %v707 = vmax.f32 %v659, 0.0
      %v708 = vmax.f32 %v660, 0.0
      %v709 = vmax.f32 %v661, 0.0
      %v710 = vmax.f32 %v662, 0.0
      %v711 = vmax.f32 %v663, 0.0
      %v712 = vmax.f32 %v664, 0.0
      %v713 = vmax.f32 %v665, 0.0
      %v714 = vmax.f32 %v666, 0.0
      %v715 = vmax.f32 %v667, 0.0
      %v716 = vmax.f32 %v668, 0.0
      %v717 = vmax.f32 %v669, 0.0
      %v718 = vmax.f32 %v670, 0.0
      %v719 = vmax.f32 %v671, 0.0
      %v720 = vmax.f32 %v672, 0.0
      %v721 = vmax.f32 %v673, 0.0
      %v722 = vmax.f32 %v674, 0.0
      %v723 = vmax.f32 %v675, 0.0
      %v724 = vmax.f32 %v676, 0.0
      %v725 = vmax.f32 %v677, 0.0
      %v726 = vmax.f32 %v678, 0.0
      %v727 = vmax.f32 %v679, 0.0
      %v728 = vmax.f32 %v680, 0.0
      %v729 = vmax.f32 %v681, 0.0
      %v730 = vmax.f32 %v682, 0.0
      %v731 = vmax.f32 %v683, 0.0
      %v732 = vmax.f32 %v684, 0.0
      %v733 = vmax.f32 %v685, 0.0
      %v734 = vmax.f32 %v686, 0.0
      %v735 = vmax.f32 %v687, 0.0
      %v736 = vmax.f32 %v688, 0.0
      %v737 = vmax.f32 %v689, 0.0
      %v738 = vmax.f32 %v690, 0.0
      %v739 = vmax.f32 %v691, 0.0
      %v740 = vmax.f32 %v692, 0.0
      %v741 = vmax.f32 %v693, 0.0
      %v742 = vmax.f32 %v694, 0.0
      %v743 = vmax.f32 %v695, 0.0
      %v744 = vmax.f32 %v696, 0.0
      %v745 = vmax.f32 %v697, 0.0
      %v746 = vmax.f32 %v698, 0.0
      %v747 = vmax.f32 %v699, 0.0
      %v748 = vmax.f32 %v700, 0.0
      %v749 = vmax.f32 %v701, 0.0
      %v750 = vmax.f32 %v702, 0.0
      %v751 = vmax.f32 %v703, 0.0
      %v752 = vmax.f32 %v704, 0.0
      %s753 = smul.u32 %s23, 384
      %v754 = vlaneseq
      %v755 = vand.u32 %v754, 127
      %v756 = vadd.s32 %v755, 128
      %v757 = vadd.s32 %v755, 256
      %v758 = vstv %s753
      %v759 = vadd.s32 %v758, %v755
      %v760 = vadd.s32 %v758, %v756
      %v761 = vadd.s32 %v758, %v757
      %vm762 = vcmp.lt.s32.totalorder %v759, 300
      %vm763 = vcmp.lt.s32.totalorder %v760, 300
      %vm764 = vcmp.lt.s32.totalorder %v761, 300
      %v765 = vsel %vm762, 1, 0
      %v766 = vsel %vm763, 1, 0
      %v767 = vsel %vm764, 1, 0
      %vm768 = vcmp.eq.s32.totalorder %v765, 1
      %vm769 = vcmp.eq.s32.totalorder %v766, 1
      %vm770 = vcmp.eq.s32.totalorder %v767, 1
      %v771 = vsel %vm768, %v705, 0.0
      %v772 = vsel %vm769, %v706, 0.0
      %v773 = vsel %vm770, %v707, 0.0
      %v774 = vsel %vm768, %v708, 0.0
      %v775 = vsel %vm769, %v709, 0.0
      %v776 = vsel %vm770, %v710, 0.0
      %v777 = vsel %vm768, %v711, 0.0
      %v778 = vsel %vm769, %v712, 0.0
      %v779 = vsel %vm770, %v713, 0.0
      %v780 = vsel %vm768, %v714, 0.0
      %v781 = vsel %vm769, %v715, 0.0
      %v782 = vsel %vm770, %v716, 0.0
      %v783 = vsel %vm768, %v717, 0.0
      %v784 = vsel %vm769, %v718, 0.0
      %v785 = vsel %vm770, %v719, 0.0
      %v786 = vsel %vm768, %v720, 0.0
      %v787 = vsel %vm769, %v721, 0.0
      %v788 = vsel %vm770, %v722, 0.0
      %v789 = vsel %vm768, %v723, 0.0
      %v790 = vsel %vm769, %v724, 0.0
      %v791 = vsel %vm770, %v725, 0.0
      %v792 = vsel %vm768, %v726, 0.0
      %v793 = vsel %vm769, %v727, 0.0
      %v794 = vsel %vm770, %v728, 0.0
      %v795 = vsel %vm768, %v729, 0.0
      %v796 = vsel %vm769, %v730, 0.0
      %v797 = vsel %vm770, %v731, 0.0
      %v798 = vsel %vm768, %v732, 0.0
      %v799 = vsel %vm769, %v733, 0.0
      %v800 = vsel %vm770, %v734, 0.0
      %v801 = vsel %vm768, %v735, 0.0
      %v802 = vsel %vm769, %v736, 0.0
      %v803 = vsel %vm770, %v737, 0.0
      %v804 = vsel %vm768, %v738, 0.0
      %v805 = vsel %vm769, %v739, 0.0
      %v806 = vsel %vm770, %v740, 0.0
      %v807 = vsel %vm768, %v741, 0.0
      %v808 = vsel %vm769, %v742, 0.0
      %v809 = vsel %vm770, %v743, 0.0
      %v810 = vsel %vm768, %v744, 0.0
      %v811 = vsel %vm769, %v745, 0.0
      %v812 = vsel %vm770, %v746, 0.0
      %v813 = vsel %vm768, %v747, 0.0
      %v814 = vsel %vm769, %v748, 0.0
      %v815 = vsel %vm770, %v749, 0.0
      %v816 = vsel %vm768, %v750, 0.0
      %v817 = vsel %vm769, %v751, 0.0
      %v818 = vsel %vm770, %v752, 0.0
      %v819 = vld [vmem:[%s3] sm:$0xf]
      %v820 = vld [vmem:[%s3 + $0x4] sm:$0xf]
      %v821 = vld [vmem:[%s3 + $0x8] sm:$0xf]
      %v822 = vld [vmem:[%s3 + $0xc] sm:$0xf]
      %v823 = vld [vmem:[%s3 + $0x10] sm:$0xf]
      %v824 = vld [vmem:[%s3 + $0x14] sm:$0xf]
      %v825 = vld [vmem:[%s3 + $0x18] sm:$0xf]
      %v826 = vld [vmem:[%s3 + $0x1c] sm:$0xf]
      %v827 = vpack.c.bf16 %v774, %v771
      %v828 = vpack.c.bf16 %v775, %v772
      %v829 = vpack.c.bf16 %v776, %v773
      %v830 = vpack.c.bf16 %v780, %v777
      %v831 = vpack.c.bf16 %v781, %v778
      %v832 = vpack.c.bf16 %v782, %v779
      %v833 = vpack.c.bf16 %v786, %v783
      %v834 = vpack.c.bf16 %v787, %v784
      %v835 = vpack.c.bf16 %v788, %v785
      %v836 = vpack.c.bf16 %v792, %v789
      %v837 = vpack.c.bf16 %v793, %v790
      %v838 = vpack.c.bf16 %v794, %v791
      %v839 = vpack.c.bf16 %v798, %v795
      %v840 = vpack.c.bf16 %v799, %v796
      %v841 = vpack.c.bf16 %v800, %v797
      %v842 = vpack.c.bf16 %v804, %v801
      %v843 = vpack.c.bf16 %v805, %v802
      %v844 = vpack.c.bf16 %v806, %v803
      %v845 = vpack.c.bf16 %v810, %v807
      %v846 = vpack.c.bf16 %v811, %v808
      %v847 = vpack.c.bf16 %v812, %v809
      %v848 = vpack.c.bf16 %v816, %v813
      %v849 = vpack.c.bf16 %v817, %v814
      %v850 = vpack.c.bf16 %v818, %v815
      %v859 = vunpack.c.l.b16 %v819
      %v860 = vunpack.c.l.b16 %v820
      %v861 = vunpack.c.l.b16 %v821
      %v862 = vunpack.c.l.b16 %v822
      %v863 = vunpack.c.l.b16 %v823
      %v864 = vunpack.c.l.b16 %v824
      %v865 = vunpack.c.l.b16 %v825
      %v866 = vunpack.c.l.b16 %v826
      %v867 = vpack.c.b16 %v860, %v859
      %v868 = vpack.c.b16 %v862, %v861
      %v869 = vpack.c.b16 %v864, %v863
      %v870 = vpack.c.b16 %v866, %v865
      %875 = vmatprep.subr.bf16.mxu0 %v828
      %876 = vmatpush1.bf16.msra.mxu0 %v827
      %877 = vmatprep.subr.bf16.mxu0 %v831
      %878 = vmatpush1.bf16.msra.mxu0 %v830
      %879 = vmatprep.subr.bf16.mxu0 %v834
      %880 = vmatpush1.bf16.msra.mxu0 %v833
      %881 = vmatprep.subr.bf16.mxu0 %v837
      %882 = vmatpush1.bf16.msra.mxu0 %v836
      %883 = vmatprep.subr.bf16.mxu0 %v840
      %884 = vmatpush1.bf16.msra.mxu0 %v839
      %885 = vmatprep.subr.bf16.mxu0 %v843
      %886 = vmatpush1.bf16.msra.mxu0 %v842
      %887 = vmatprep.subr.bf16.mxu0 %v846
      %888 = vmatpush1.bf16.msra.mxu0 %v845
      %889 = vmatprep.subr.bf16.mxu0 %v849
      %890 = vmatpush1.bf16.msra.mxu0 %v848
      %891 = vmatprep.subr.bf16.mxu0 0
      %892 = vmatpush1.bf16.msra.mxu0 0
      %893 = vmatprep.subr.bf16.mxu0 0
      %894 = vmatpush1.bf16.msra.mxu0 0
      %895 = vmatprep.subr.bf16.mxu0 0
      %896 = vmatpush1.bf16.msra.mxu0 0
      %897 = vmatprep.subr.bf16.mxu0 0
      %898 = vmatpush1.bf16.msra.mxu0 0
      %899 = vmatprep.subr.bf16.mxu0 0
      %900 = vmatpush1.bf16.msra.mxu0 0
      %901 = vmatprep.subr.bf16.mxu0 0
      %902 = vmatpush1.bf16.msra.mxu0 0
      %903 = vmatprep.subr.bf16.mxu0 0
      %904 = vmatpush1.bf16.msra.mxu0 0
      %905 = vmatprep.subr.bf16.mxu0 0
      %906 = vmatpush1.bf16.msra.mxu0 0
      %907 = vmatprep.mubr.bf16.mxu0 0
      %908 = vmatmul.mubr.bf16.gmra.mrb[0].mxu0 %v867
      %v909 = vpop.f32.mrb[0].mxu0
      %v910 = vadd.f32 0.0, %v909
      %v911 = vpop.f32.mrb[0].mxu0
      %v912 = vadd.f32 0.0, %v911
      %v913 = vpop.f32.mrb[0].mxu0
      %v914 = vadd.f32 0.0, %v913
      %v915 = vpop.f32.mrb[0].mxu0
      %v916 = vadd.f32 0.0, %v915
      %917 = vmatprep.mubr.bf16.mxu0 0
      %918 = vmatmul.mubr.bf16.gmra.mrb[0].mxu0 %v868
      %v919 = vpop.f32.mrb[0].mxu0
      %v920 = vadd.f32 0.0, %v919
      %v921 = vpop.f32.mrb[0].mxu0
      %v922 = vadd.f32 0.0, %v921
      %v923 = vpop.f32.mrb[0].mxu0
      %v924 = vadd.f32 0.0, %v923
      %v925 = vpop.f32.mrb[0].mxu0
      %v926 = vadd.f32 0.0, %v925
      %927 = vmatprep.mubr.bf16.mxu0 0
      %928 = vmatmul.mubr.bf16.gmra.mrb[0].mxu0 %v869
      %v929 = vpop.f32.mrb[0].mxu0
      %v930 = vadd.f32 0.0, %v929
      %v931 = vpop.f32.mrb[0].mxu0
      %v932 = vadd.f32 0.0, %v931
      %v933 = vpop.f32.mrb[0].mxu0
      %v934 = vadd.f32 0.0, %v933
      %v935 = vpop.f32.mrb[0].mxu0
      %v936 = vadd.f32 0.0, %v935
      %937 = vmatprep.mubr.bf16.mxu0 0
      %938 = vmatmul.mubr.bf16.gmra.mrb[0].mxu0 %v870
      %v939 = vpop.f32.mrb[0].mxu0
      %v940 = vadd.f32 0.0, %v939
      %v941 = vpop.f32.mrb[0].mxu0
      %v942 = vadd.f32 0.0, %v941
      %v943 = vpop.f32.mrb[0].mxu0
      %v944 = vadd.f32 0.0, %v943
      %v945 = vpop.f32.mrb[0].mxu0
      %v946 = vadd.f32 0.0, %v945
      %947 = vdwg.mxu0
      %948 = vmatprep.subr.bf16.mxu0 0
      %949 = vmatpush1.bf16.msra.mxu0 %v829
      %950 = vmatprep.subr.bf16.mxu0 0
      %951 = vmatpush1.bf16.msra.mxu0 %v832
      %952 = vmatprep.subr.bf16.mxu0 0
      %953 = vmatpush1.bf16.msra.mxu0 %v835
      %954 = vmatprep.subr.bf16.mxu0 0
      %955 = vmatpush1.bf16.msra.mxu0 %v838
      %956 = vmatprep.subr.bf16.mxu0 0
      %957 = vmatpush1.bf16.msra.mxu0 %v841
      %958 = vmatprep.subr.bf16.mxu0 0
      %959 = vmatpush1.bf16.msra.mxu0 %v844
      %960 = vmatprep.subr.bf16.mxu0 0
      %961 = vmatpush1.bf16.msra.mxu0 %v847
      %962 = vmatprep.subr.bf16.mxu0 0
      %963 = vmatpush1.bf16.msra.mxu0 %v850
      %964 = vmatprep.subr.bf16.mxu0 0
      %965 = vmatpush1.bf16.msra.mxu0 0
      %966 = vmatprep.subr.bf16.mxu0 0
      %967 = vmatpush1.bf16.msra.mxu0 0
      %968 = vmatprep.subr.bf16.mxu0 0
      %969 = vmatpush1.bf16.msra.mxu0 0
      %970 = vmatprep.subr.bf16.mxu0 0
      %971 = vmatpush1.bf16.msra.mxu0 0
      %972 = vmatprep.subr.bf16.mxu0 0
      %973 = vmatpush1.bf16.msra.mxu0 0
      %974 = vmatprep.subr.bf16.mxu0 0
      %975 = vmatpush1.bf16.msra.mxu0 0
      %976 = vmatprep.subr.bf16.mxu0 0
      %977 = vmatpush1.bf16.msra.mxu0 0
      %978 = vmatprep.subr.bf16.mxu0 0
      %979 = vmatpush1.bf16.msra.mxu0 0
      %980 = vmatprep.mubr.bf16.mxu0 0
      %981 = vmatmul.mubr.bf16.gmra.mrb[0].mxu0 %v867
      %v982 = vpop.f32.mrb[0].mxu0
      %v983 = vadd.f32 0.0, %v982
      %v984 = vpop.f32.mrb[0].mxu0
      %v985 = vpop.f32.mrb[0].mxu0
      %v986 = vadd.f32 0.0, %v985
      %v987 = vpop.f32.mrb[0].mxu0
      %988 = vmatprep.mubr.bf16.mxu0 0
      %989 = vmatmul.mubr.bf16.gmra.mrb[0].mxu0 %v868
      %v990 = vpop.f32.mrb[0].mxu0
      %v991 = vadd.f32 0.0, %v990
      %v992 = vpop.f32.mrb[0].mxu0
      %v993 = vpop.f32.mrb[0].mxu0
      %v994 = vadd.f32 0.0, %v993
      %v995 = vpop.f32.mrb[0].mxu0
      %996 = vmatprep.mubr.bf16.mxu0 0
      %997 = vmatmul.mubr.bf16.gmra.mrb[0].mxu0 %v869
      %v998 = vpop.f32.mrb[0].mxu0
      %v999 = vadd.f32 0.0, %v998
      %v1000 = vpop.f32.mrb[0].mxu0
      %v1001 = vpop.f32.mrb[0].mxu0
      %v1002 = vadd.f32 0.0, %v1001
      %v1003 = vpop.f32.mrb[0].mxu0
      %1004 = vmatprep.mubr.bf16.mxu0 0
      %1005 = vmatmul.mubr.bf16.gmra.mrb[0].mxu0 %v870
      %v1006 = vpop.f32.mrb[0].mxu0
      %v1007 = vadd.f32 0.0, %v1006
      %v1008 = vpop.f32.mrb[0].mxu0
      %v1009 = vpop.f32.mrb[0].mxu0
      %v1010 = vadd.f32 0.0, %v1009
      %v1011 = vpop.f32.mrb[0].mxu0
      %1012 = vdwg.mxu0
      %v1013 = vpack.c.bf16 %v914, %v910
      %v1014 = vpack.c.bf16 %v916, %v912
      %v1015 = vpack.c.bf16 %v986, %v983
      %v1016 = vpack.c.bf16 %v924, %v920
      %v1017 = vpack.c.bf16 %v926, %v922
      %v1018 = vpack.c.bf16 %v994, %v991
      %v1019 = vpack.c.bf16 %v934, %v930
      %v1020 = vpack.c.bf16 %v936, %v932
      %v1021 = vpack.c.bf16 %v1002, %v999
      %v1022 = vpack.c.bf16 %v944, %v940
      %v1023 = vpack.c.bf16 %v946, %v942
      %v1024 = vpack.c.bf16 %v1010, %v1007
      %v1037 = vunpack.c.l.b16 %v1013
      %v1038 = vunpack.c.l.b16 %v1014
      %v1039 = vunpack.c.l.b16 %v1015
      %v1040 = vunpack.c.h.b16 %v1013
      %v1041 = vunpack.c.h.b16 %v1014
      %v1042 = vunpack.c.h.b16 %v1015
      %v1043 = vunpack.c.l.b16 %v1016
      %v1044 = vunpack.c.l.b16 %v1017
      %v1045 = vunpack.c.l.b16 %v1018
      %v1046 = vunpack.c.h.b16 %v1016
      %v1047 = vunpack.c.h.b16 %v1017
      %v1048 = vunpack.c.h.b16 %v1018
      %v1049 = vunpack.c.l.b16 %v1019
      %v1050 = vunpack.c.l.b16 %v1020
      %v1051 = vunpack.c.l.b16 %v1021
      %v1052 = vunpack.c.h.b16 %v1019
      %v1053 = vunpack.c.h.b16 %v1020
      %v1054 = vunpack.c.h.b16 %v1021
      %v1055 = vunpack.c.l.b16 %v1022
      %v1056 = vunpack.c.l.b16 %v1023
      %v1057 = vunpack.c.l.b16 %v1024
      %v1058 = vunpack.c.h.b16 %v1022
      %v1059 = vunpack.c.h.b16 %v1023
      %v1060 = vunpack.c.h.b16 %v1024
      %v1061 = vpack.c.b16 %v1038, %v1037
      %v1062 = vpack.c.b16 %v1039, %v1039
      %v1063 = vpack.c.b16 %v1041, %v1040
      %v1064 = vpack.c.b16 %v1042, %v1042
      %v1065 = vpack.c.b16 %v1044, %v1043
      %v1066 = vpack.c.b16 %v1045, %v1045
      %v1067 = vpack.c.b16 %v1047, %v1046
      %v1068 = vpack.c.b16 %v1048, %v1048
      %v1069 = vpack.c.b16 %v1050, %v1049
      %v1070 = vpack.c.b16 %v1051, %v1051
      %v1071 = vpack.c.b16 %v1053, %v1052
      %v1072 = vpack.c.b16 %v1054, %v1054
      %v1073 = vpack.c.b16 %v1056, %v1055
      %v1074 = vpack.c.b16 %v1057, %v1057
      %v1075 = vpack.c.b16 %v1059, %v1058
      %v1076 = vpack.c.b16 %v1060, %v1060
      %1093 = vst [vmem:[%s316] sm:$0xff] %v1061
      %1094 = vst [vmem:[%s316 + $0x8] sm:$0xf] %v1062
      %1095 = vst [vmem:[%s316 + $0xc] sm:$0xff] %v1063
      %1096 = vst [vmem:[%s316 + $0x14] sm:$0xf] %v1064
      %1097 = vst [vmem:[%s316 + $0x18] sm:$0xff] %v1065
      %1098 = vst [vmem:[%s316 + $0x20] sm:$0xf] %v1066
      %1099 = vst [vmem:[%s316 + $0x24] sm:$0xff] %v1067
      %1100 = vst [vmem:[%s316 + $0x2c] sm:$0xf] %v1068
      %1101 = vst [vmem:[%s316 + $0x30] sm:$0xff] %v1069
      %1102 = vst [vmem:[%s316 + $0x38] sm:$0xf] %v1070
      %1103 = vst [vmem:[%s316 + $0x3c] sm:$0xff] %v1071
      %1104 = vst [vmem:[%s316 + $0x44] sm:$0xf] %v1072
      %1105 = vst [vmem:[%s316 + $0x48] sm:$0xff] %v1073
      %1106 = vst [vmem:[%s316 + $0x50] sm:$0xf] %v1074
      %1107 = vst [vmem:[%s316 + $0x54] sm:$0xff] %v1075
      %1108 = vst [vmem:[%s316 + $0x5c] sm:$0xf] %v1076
      %v1109 = vadd.f32 %v910, %v912
      %v1110 = vadd.f32 %v1109, %v983
      %1111 = vadd.xlane.f32.xlu0 %v1110
      %v1112 = vpop.xlane.xlu0 %1111
      %v1113 = vadd.f32 %v914, %v916
      %v1114 = vadd.f32 %v1113, %v986
      %1115 = vadd.xlane.f32.xlu0 %v1114
      %v1116 = vpop.xlane.xlu0 %1115
      %v1117 = vadd.f32 %v920, %v922
      %v1118 = vadd.f32 %v1117, %v991
      %1119 = vadd.xlane.f32.xlu0 %v1118
      %v1120 = vpop.xlane.xlu0 %1119
      %v1121 = vadd.f32 %v924, %v926
      %v1122 = vadd.f32 %v1121, %v994
      %1123 = vadd.xlane.f32.xlu0 %v1122
      %v1124 = vpop.xlane.xlu0 %1123
      %v1125 = vadd.f32 %v930, %v932
      %v1126 = vadd.f32 %v1125, %v999
      %1127 = vadd.xlane.f32.xlu0 %v1126
      %v1128 = vpop.xlane.xlu0 %1127
      %v1129 = vadd.f32 %v934, %v936
      %v1130 = vadd.f32 %v1129, %v1002
      %1131 = vadd.xlane.f32.xlu0 %v1130
      %v1132 = vpop.xlane.xlu0 %1131
      %v1133 = vadd.f32 %v940, %v942
      %v1134 = vadd.f32 %v1133, %v1007
      %1135 = vadd.xlane.f32.xlu0 %v1134
      %v1136 = vpop.xlane.xlu0 %1135
      %v1137 = vadd.f32 %v944, %v946
      %v1138 = vadd.f32 %v1137, %v1010
      %1139 = vadd.xlane.f32.xlu0 %v1138
      %v1140 = vpop.xlane.xlu0 %1139
      %vm1141 = vcmask 7168
      %1142 = vst.msk [vmem:[%s326] sm:$0xff] %vm1141, %v1112
      %1143 = vst.msk [vmem:[%s326 + $0x8] sm:$0xff] %vm1141, %v1116
      %1144 = vst.msk [vmem:[%s326 + $0x10] sm:$0xff] %vm1141, %v1120
      %1145 = vst.msk [vmem:[%s326 + $0x18] sm:$0xff] %vm1141, %v1124
      %1146 = vst.msk [vmem:[%s326 + $0x20] sm:$0xff] %vm1141, %v1128
      %1147 = vst.msk [vmem:[%s326 + $0x28] sm:$0xff] %vm1141, %v1132
      %1148 = vst.msk [vmem:[%s326 + $0x30] sm:$0xff] %vm1141, %v1136
      %1149 = vst.msk [vmem:[%s326 + $0x38] sm:$0xff] %vm1141, %v1140
      %v1150 = vmul.f32 %v910, %v910
      %v1151 = vmul.f32 %v912, %v912
      %v1152 = vmul.f32 %v983, %v983
      %v1153 = vmul.f32 %v914, %v914
      %v1154 = vmul.f32 %v916, %v916
      %v1155 = vmul.f32 %v986, %v986
      %v1156 = vmul.f32 %v920, %v920
      %v1157 = vmul.f32 %v922, %v922
      %v1158 = vmul.f32 %v991, %v991
      %v1159 = vmul.f32 %v924, %v924
      %v1160 = vmul.f32 %v926, %v926
      %v1161 = vmul.f32 %v994, %v994
      %v1162 = vmul.f32 %v930, %v930
      %v1163 = vmul.f32 %v932, %v932
      %v1164 = vmul.f32 %v999, %v999
      %v1165 = vmul.f32 %v934, %v934
      %v1166 = vmul.f32 %v936, %v936
      %v1167 = vmul.f32 %v1002, %v1002
      %v1168 = vmul.f32 %v940, %v940
      %v1169 = vmul.f32 %v942, %v942
      %v1170 = vmul.f32 %v1007, %v1007
      %v1171 = vmul.f32 %v944, %v944
      %v1172 = vmul.f32 %v946, %v946
      %v1173 = vmul.f32 %v1010, %v1010
      %v1174 = vadd.f32 %v1150, %v1151
      %v1175 = vadd.f32 %v1174, %v1152
      %1176 = vadd.xlane.f32.xlu0 %v1175
      %v1177 = vpop.xlane.xlu0 %1176
      %v1178 = vadd.f32 %v1153, %v1154
      %v1179 = vadd.f32 %v1178, %v1155
      %1180 = vadd.xlane.f32.xlu0 %v1179
      %v1181 = vpop.xlane.xlu0 %1180
      %v1182 = vadd.f32 %v1156, %v1157
      %v1183 = vadd.f32 %v1182, %v1158
      %1184 = vadd.xlane.f32.xlu0 %v1183
      %v1185 = vpop.xlane.xlu0 %1184
      %v1186 = vadd.f32 %v1159, %v1160
      %v1187 = vadd.f32 %v1186, %v1161
      %1188 = vadd.xlane.f32.xlu0 %v1187
      %v1189 = vpop.xlane.xlu0 %1188
      %v1190 = vadd.f32 %v1162, %v1163
      %v1191 = vadd.f32 %v1190, %v1164
      %1192 = vadd.xlane.f32.xlu0 %v1191
      %v1193 = vpop.xlane.xlu0 %1192
      %v1194 = vadd.f32 %v1165, %v1166
      %v1195 = vadd.f32 %v1194, %v1167
      %1196 = vadd.xlane.f32.xlu0 %v1195
      %v1197 = vpop.xlane.xlu0 %1196
      %v1198 = vadd.f32 %v1168, %v1169
      %v1199 = vadd.f32 %v1198, %v1170
      %1200 = vadd.xlane.f32.xlu0 %v1199
      %v1201 = vpop.xlane.xlu0 %1200
      %v1202 = vadd.f32 %v1171, %v1172
      %v1203 = vadd.f32 %v1202, %v1173
      %1204 = vadd.xlane.f32.xlu0 %v1203
      %v1205 = vpop.xlane.xlu0 %1204
      %1206 = vst.msk [vmem:[%s335] sm:$0xff] %vm1141, %v1177
      %1207 = vst.msk [vmem:[%s335 + $0x8] sm:$0xff] %vm1141, %v1181
      %1208 = vst.msk [vmem:[%s335 + $0x10] sm:$0xff] %vm1141, %v1185
      %1209 = vst.msk [vmem:[%s335 + $0x18] sm:$0xff] %vm1141, %v1189
      %1210 = vst.msk [vmem:[%s335 + $0x20] sm:$0xff] %vm1141, %v1193
      %1211 = vst.msk [vmem:[%s335 + $0x28] sm:$0xff] %vm1141, %v1197
      %1212 = vst.msk [vmem:[%s335 + $0x30] sm:$0xff] %vm1141, %v1201
      %1213 = vst.msk [vmem:[%s335 + $0x38] sm:$0xff] %vm1141, %v1205
      %s1214 = smul.u32 3, %s23
      %p1215 = scmp.lt.s32.totalorder %s22, 1
      %s1216 = scalar_select %p1215, %s22, 1
      %p1217 = scmp.lt.s32.totalorder %s1214, 2
      %s1218 = scalar_select %p1217, %s1214, 2
      %s1219 = smul.addr %s1216, 24
      %s1220 = sadd.s32 %s1218, %s1219
      %s1221 = smul.addr %s1220, 4
      %s1222 = scalar_lea.vmem %s4, %s1221
      %p1223 = scmp.lt.s32.totalorder %s22, 1
      %s1224 = scalar_select %p1223, %s22, 1
      %p1225 = scmp.lt.s32.totalorder %s23, 0
      %s1226 = scalar_select %p1225, %s23, 0
      %s1227 = smul.addr %s1226, 8
      %s1228 = smul.addr %s1224, 8
      %s1229 = sadd.s32 %s1227, %s1228
      %s1230 = smul.addr %s1229, 8
      %s1231 = scalar_lea.vmem %s5, %s1230
      %p1232 = scmp.lt.s32.totalorder %s22, 1
      %s1233 = scalar_select %p1232, %s22, 1
      %p1234 = scmp.lt.s32.totalorder %s23, 0
      %s1235 = scalar_select %p1234, %s23, 0
      %s1236 = smul.addr %s1235, 8
      %s1237 = smul.addr %s1233, 8
      %s1238 = sadd.s32 %s1236, %s1237
      %s1239 = smul.addr %s1238, 8
      %s1240 = scalar_lea.vmem %s6, %s1239
      // Predicated region
      $region37: #{point_gen_con.6} parent=35 // pred_check
        %p1241 = pneg %p141
      $region38: #{point_gen_con.6} parent=35 // pred_check_branch
        %1243 = sbr.rel (%p1241) target = $region40
      $region39: #{point_gen_con.6} parent=35 // pred_region
        %s1244 = smul.u32 3, %s23
      $region40: #{point_gen_con.6} parent=35 // pred_fallthru
        _
      // Predicated region
      $region41: #{point_gen_con.6} parent=35 // pred_check
        %p1245 = pneg %p169
      $region42: #{point_gen_con.6} parent=35 // pred_check_branch
        %1247 = sbr.rel (%p1245) target = $region44
      $region43: #{point_gen_con.6} parent=35 // pred_region
        _
      $region44: #{point_gen_con.6} parent=35 // pred_fallthru
        _
      // Predicated region
      $region45: #{point_gen_con.6} parent=35 // pred_check
        %p1248 = pneg %p197
      $region46: #{point_gen_con.6} parent=35 // pred_check_branch
        %1250 = sbr.rel (%p1248) target = $region48
      $region47: #{point_gen_con.6} parent=35 // pred_region
        _
      $region48: #{point_gen_con.6} parent=35 // pred_fallthru
        _
    $region36: #{point_gen_con.6} parent=5 // pred_fallthru
      _
    %p1251 = scmp.le.s32.totalorder 2, %s13
    // Predicated region
    $region49: #{point_gen_con.6} parent=5 // pred_check
      %p1252 = pneg %p1251
    $region50: #{point_gen_con.6} parent=5 // pred_check_branch
      %1254 = sbr.rel (%p1252) target = $region52
    $region51: #{point_gen_con.6} parent=5 // pred_region
      %s1255 = ssub.s32 %s13, 2
      // Predicated region
      $region53: #{point_gen_con.6} parent=51 // pred_check
        %p1256 = pneg %p147
      $region54: #{point_gen_con.6} parent=51 // pred_check_branch
        %1258 = sbr.rel (%p1256) target = $region56
      $region55: #{point_gen_con.6} parent=51 // pred_region
        %s1259 = smul.u32 3, %s25
        %p1260 = scmp.lt.s32.totalorder %s24, 1
        %s1261 = scalar_select %p1260, %s24, 1
        %p1262 = scmp.lt.s32.totalorder %s1259, 2
        %s1263 = scalar_select %p1262, %s1259, 2
        %s1264 = smul.addr %s1261, 24
        %s1265 = sadd.s32 %s1263, %s1264
        %s1266 = smul.addr %s1265, 4
        %s1267 = scalar_lea.vmem %s4, %s1266
      $region56: #{point_gen_con.6} parent=51 // pred_fallthru
        _
      // Predicated region
      $region57: #{point_gen_con.6} parent=51 // pred_check
        %p1268 = pneg %p175
      $region58: #{point_gen_con.6} parent=51 // pred_check_branch
        %1270 = sbr.rel (%p1268) target = $region60
      $region59: #{point_gen_con.6} parent=51 // pred_region
        %p1271 = scmp.lt.s32.totalorder %s24, 1
        %s1272 = scalar_select %p1271, %s24, 1
        %p1273 = scmp.lt.s32.totalorder %s25, 0
        %s1274 = scalar_select %p1273, %s25, 0
        %s1275 = smul.addr %s1274, 8
        %s1276 = smul.addr %s1272, 8
        %s1277 = sadd.s32 %s1275, %s1276
        %s1278 = smul.addr %s1277, 8
        %s1279 = scalar_lea.vmem %s5, %s1278
      $region60: #{point_gen_con.6} parent=51 // pred_fallthru
        _
      // Predicated region
      $region61: #{point_gen_con.6} parent=51 // pred_check
        %p1280 = pneg %p203
      $region62: #{point_gen_con.6} parent=51 // pred_check_branch
        %1282 = sbr.rel (%p1280) target = $region64
      $region63: #{point_gen_con.6} parent=51 // pred_region
        %p1283 = scmp.lt.s32.totalorder %s24, 1
        %s1284 = scalar_select %p1283, %s24, 1
        %p1285 = scmp.lt.s32.totalorder %s25, 0
        %s1286 = scalar_select %p1285, %s25, 0
        %s1287 = smul.addr %s1286, 8
        %s1288 = smul.addr %s1284, 8
        %s1289 = sadd.s32 %s1287, %s1288
        %s1290 = smul.addr %s1289, 8
        %s1291 = scalar_lea.vmem %s6, %s1290
      $region64: #{point_gen_con.6} parent=51 // pred_fallthru
        _
    $region52: #{point_gen_con.6} parent=5 // pred_fallthru
      _
  $region6: #{point_gen_con.6} parent=0 // loop_footer
    %s17 = sadd.s32 1, %s13
  $region7: #{point_gen_con.6} parent=0 // loop_footer_branch
    %12 = sbr.rel target = $region3
  $region8: #{point_gen_con.6} parent=0 // loop_exit
    _

// kernel: point_gen_con.7
$region0: #{point_gen_con.7}
  #allocation0 [shape = 'u32[]', space=smem, size = 0x4, offset = 0x4, fixed_abs, tag = 'smem constant byte address 0x4 - core index']
  #allocation1 [shape = 'u32[144,128]{1,0:T(1,128)}', space=vmem, size = 0x12000, scoped, tag = 'internal scratch']
  %s0 = inlined_call_operand.vmem [shape: bf16[2,64,384], index: 0, kind: input, shape index: {}]
  %s1 = inlined_call_operand.vmem [shape: f32[64,1], index: 1, kind: input, shape index: {}]
  %s2 = inlined_call_operand.vmem [shape: f32[64,1], index: 2, kind: input, shape index: {}]
  %s3 = inlined_call_operand.vmem [shape: bf16[8,64], index: 3, kind: input, shape index: {}]
  %s4 = inlined_call_operand.vmem [shape: f32[8,1], index: 4, kind: input, shape index: {}]
  %s5 = inlined_call_operand.vmem [shape: f32[2,8,384], index: 5, kind: output, shape index: {}]
  %s6 = sld [smem:[#allocation0]]
  $region53: #{point_gen_con.7} parent=0
    _
  %s8 = ssub.s32 1, %s6
  %s9 = scalar_select 0, %s8, %s6
  loop: start=0, step=1, limit=4
  $region2: #{point_gen_con.7} parent=0 // loop_pre_header
    _
  $region3: #{point_gen_con.7} parent=0 // loop_header
    %s11 = sphi 0, %s15
    %p12 = scmp.ge.s32.totalorder %s11, 4
    %s18 = sphi 0, %s30
    %s19 = sphi 0, %s26
    %s20 = sphi 0, %s18
    %s21 = sphi 0, %s19
    %s22 = sphi 0, %s20
    %s23 = sphi 0, %s21
    %s35 = sphi 0, %s37
    %s38 = sphi 0, %s35
    %s39 = sphi 0, %s38
    %s55 = sphi 0, %s39
    %s59 = sphi 0, %s59
    %s61 = sphi 0, %s59
    %s62 = sphi 0, %s61
    %s76 = sphi 0, %s62
    %s80 = sphi 0, %s80
    %s82 = sphi 0, %s80
    %s83 = sphi 0, %s82
    %s97 = sphi 0, %s83
    %s101 = sphi 0, %s101
    %s103 = sphi 0, %s101
    %s104 = sphi 0, %s103
    %s118 = sphi 0, %s104
    %s122 = sphi 0, %s122
    %s124 = sphi 0, %s122
    %s125 = sphi 0, %s124
    %s139 = sphi 0, %s125
    %s147 = sphi 0, %s149
    %s150 = sphi 0, %s147
    %s151 = sphi 0, %s150
    %s167 = sphi 0, %s151
  $region4: #{point_gen_con.7} parent=0 // loop_header_branch
    %14 = sbr.rel (%p12) target = $region8
  $region5: #{point_gen_con.7} parent=0 // loop_body
    %s16 = ssub.s32 %s11, 1
    %s17 = ssub.s32 %s11, 2
    %s24 = sadd.s32 1, %s19
    %p25 = scmp.ge.s32.totalorder %s24, 1
    %s26 = scalar_select %p25, 0, %s24
    %s27 = sadd.s32 1, %s18
    %s28 = scalar_select %p25, %s27, %s18
    %p29 = scmp.ge.s32.totalorder %s28, 2
    %s30 = scalar_select %p29, 0, %s28
    %s31 = ssub.s32 %s18, %s30
    %s32 = ssub.s32 %s19, %s26
    %s33 = sor.u32 %s31, %s32
    %p34 = scmp.eq.s32.totalorder %s33, 0
    %s36 = sadd.s32 %s35, 1
    %s37 = scalar_select %p34, %s35, %s36
    %p40 = pneg %p34
    %p41 = scmp.eq.s32.totalorder %s11, 1
    %p42 = por %p40, %p41
    %p43 = scmp.ne.s32.totalorder %s35, %s38
    %p44 = scmp.eq.s32.totalorder %s11, 0
    %p45 = por %p43, %p44
    %p46 = scmp.ne.s32.totalorder %s35, %s38
    %p47 = scmp.eq.s32.totalorder %s16, 1
    %p48 = por %p46, %p47
    %p49 = scmp.ne.s32.totalorder %s38, %s39
    %p50 = scmp.eq.s32.totalorder %s16, 0
    %p51 = por %p49, %p50
    %p52 = scmp.ne.s32.totalorder %s38, %s39
    %p53 = scmp.eq.s32.totalorder %s17, 1
    %p54 = por %p52, %p53
    %p56 = scmp.ne.s32.totalorder %s39, %s55
    %p57 = scmp.eq.s32.totalorder %s17, 0
    %p58 = por %p56, %p57
    %s60 = sadd.s32 %s59, 1
    %p63 = scmp.eq.s32.totalorder %s11, 1
    %p64 = scmp.ne.s32.totalorder %s59, %s61
    %p65 = scmp.eq.s32.totalorder %s11, 0
    %p66 = por %p64, %p65
    %p67 = scmp.ne.s32.totalorder %s59, %s61
    %p68 = scmp.eq.s32.totalorder %s16, 1
    %p69 = por %p67, %p68
    %p70 = scmp.ne.s32.totalorder %s61, %s62
    %p71 = scmp.eq.s32.totalorder %s16, 0
    %p72 = por %p70, %p71
    %p73 = scmp.ne.s32.totalorder %s61, %s62
    %p74 = scmp.eq.s32.totalorder %s17, 1
    %p75 = por %p73, %p74
    %p77 = scmp.ne.s32.totalorder %s62, %s76
    %p78 = scmp.eq.s32.totalorder %s17, 0
    %p79 = por %p77, %p78
    %s81 = sadd.s32 %s80, 1
    %p84 = scmp.eq.s32.totalorder %s11, 1
    %p85 = scmp.ne.s32.totalorder %s80, %s82
    %p86 = scmp.eq.s32.totalorder %s11, 0
    %p87 = por %p85, %p86
    %p88 = scmp.ne.s32.totalorder %s80, %s82
    %p89 = scmp.eq.s32.totalorder %s16, 1
    %p90 = por %p88, %p89
    %p91 = scmp.ne.s32.totalorder %s82, %s83
    %p92 = scmp.eq.s32.totalorder %s16, 0
    %p93 = por %p91, %p92
    %p94 = scmp.ne.s32.totalorder %s82, %s83
    %p95 = scmp.eq.s32.totalorder %s17, 1
    %p96 = por %p94, %p95
    %p98 = scmp.ne.s32.totalorder %s83, %s97
    %p99 = scmp.eq.s32.totalorder %s17, 0
    %p100 = por %p98, %p99
    %s102 = sadd.s32 %s101, 1
    %p105 = scmp.eq.s32.totalorder %s11, 1
    %p106 = scmp.ne.s32.totalorder %s101, %s103
    %p107 = scmp.eq.s32.totalorder %s11, 0
    %p108 = por %p106, %p107
    %p109 = scmp.ne.s32.totalorder %s101, %s103
    %p110 = scmp.eq.s32.totalorder %s16, 1
    %p111 = por %p109, %p110
    %p112 = scmp.ne.s32.totalorder %s103, %s104
    %p113 = scmp.eq.s32.totalorder %s16, 0
    %p114 = por %p112, %p113
    %p115 = scmp.ne.s32.totalorder %s103, %s104
    %p116 = scmp.eq.s32.totalorder %s17, 1
    %p117 = por %p115, %p116
    %p119 = scmp.ne.s32.totalorder %s104, %s118
    %p120 = scmp.eq.s32.totalorder %s17, 0
    %p121 = por %p119, %p120
    %s123 = sadd.s32 %s122, 1
    %p126 = scmp.eq.s32.totalorder %s11, 1
    %p127 = scmp.ne.s32.totalorder %s122, %s124
    %p128 = scmp.eq.s32.totalorder %s11, 0
    %p129 = por %p127, %p128
    %p130 = scmp.ne.s32.totalorder %s122, %s124
    %p131 = scmp.eq.s32.totalorder %s16, 1
    %p132 = por %p130, %p131
    %p133 = scmp.ne.s32.totalorder %s124, %s125
    %p134 = scmp.eq.s32.totalorder %s16, 0
    %p135 = por %p133, %p134
    %p136 = scmp.ne.s32.totalorder %s124, %s125
    %p137 = scmp.eq.s32.totalorder %s17, 1
    %p138 = por %p136, %p137
    %p140 = scmp.ne.s32.totalorder %s125, %s139
    %p141 = scmp.eq.s32.totalorder %s17, 0
    %p142 = por %p140, %p141
    %s143 = ssub.s32 %s18, %s30
    %s144 = ssub.s32 %s19, %s26
    %s145 = sor.u32 %s143, %s144
    %p146 = scmp.eq.s32.totalorder %s145, 0
    %s148 = sadd.s32 %s147, 1
    %s149 = scalar_select %p146, %s147, %s148
    %p152 = pneg %p146
    %p153 = scmp.eq.s32.totalorder %s11, 1
    %p154 = por %p152, %p153
    %p155 = scmp.ne.s32.totalorder %s147, %s150
    %p156 = scmp.eq.s32.totalorder %s11, 0
    %p157 = por %p155, %p156
    %p158 = scmp.ne.s32.totalorder %s147, %s150
    %p159 = scmp.eq.s32.totalorder %s16, 1
    %p160 = por %p158, %p159
    %p161 = scmp.ne.s32.totalorder %s150, %s151
    %p162 = scmp.eq.s32.totalorder %s16, 0
    %p163 = por %p161, %p162
    %p164 = scmp.ne.s32.totalorder %s150, %s151
    %p165 = scmp.eq.s32.totalorder %s17, 1
    %p166 = por %p164, %p165
    %p168 = scmp.ne.s32.totalorder %s151, %s167
    %p169 = scmp.eq.s32.totalorder %s17, 0
    %p170 = por %p168, %p169
    %p171 = scmp.le.s32.totalorder 1, %s11
    %p172 = scmp.lt.s32.totalorder %s11, 3
    %p173 = pnand %p171, %p172
    %p174 = pneg %p173
    // Predicated region
    $region9: #{point_gen_con.7} parent=5 // pred_check
      _
    $region10: #{point_gen_con.7} parent=5 // pred_check_branch
      %176 = sbr.rel (%p173) target = $region12
    $region11: #{point_gen_con.7} parent=5 // pred_region
      %s177 = ssub.s32 %s11, 1
      // Predicated region
      $region13: #{point_gen_con.7} parent=11 // pred_check
        %p178 = pneg %p72
      $region14: #{point_gen_con.7} parent=11 // pred_check_branch
        %180 = sbr.rel (%p178) target = $region16
      $region15: #{point_gen_con.7} parent=11 // pred_region
        _
      $region16: #{point_gen_con.7} parent=11 // pred_fallthru
        _
      // Predicated region
      $region17: #{point_gen_con.7} parent=11 // pred_check
        %p181 = pneg %p93
      $region18: #{point_gen_con.7} parent=11 // pred_check_branch
        %183 = sbr.rel (%p181) target = $region20
      $region19: #{point_gen_con.7} parent=11 // pred_region
        _
      $region20: #{point_gen_con.7} parent=11 // pred_fallthru
        _
      // Predicated region
      $region21: #{point_gen_con.7} parent=11 // pred_check
        %p184 = pneg %p114
      $region22: #{point_gen_con.7} parent=11 // pred_check_branch
        %186 = sbr.rel (%p184) target = $region24
      $region23: #{point_gen_con.7} parent=11 // pred_region
        _
      $region24: #{point_gen_con.7} parent=11 // pred_fallthru
        _
      // Predicated region
      $region25: #{point_gen_con.7} parent=11 // pred_check
        %p187 = pneg %p135
      $region26: #{point_gen_con.7} parent=11 // pred_check_branch
        %189 = sbr.rel (%p187) target = $region28
      $region27: #{point_gen_con.7} parent=11 // pred_region
        _
      $region28: #{point_gen_con.7} parent=11 // pred_fallthru
        _
    $region12: #{point_gen_con.7} parent=5 // pred_fallthru
      _
    %p190 = scmp.lt.s32.totalorder %s11, 2
    // Predicated region
    $region29: #{point_gen_con.7} parent=5 // pred_check
      %p191 = pneg %p190
    $region30: #{point_gen_con.7} parent=5 // pred_check_branch
      %193 = sbr.rel (%p191) target = $region32
    $region31: #{point_gen_con.7} parent=5 // pred_region
      // Predicated region
      $region33: #{point_gen_con.7} parent=31 // pred_check
        %p194 = pneg %p45
      $region34: #{point_gen_con.7} parent=31 // pred_check_branch
        %196 = sbr.rel (%p194) target = $region36
      $region35: #{point_gen_con.7} parent=31 // pred_region
        %s197 = smul.u32 3, %s19
        %p198 = scmp.lt.s32.totalorder %s18, 1
        %s199 = scalar_select %p198, %s18, 1
        %p200 = scmp.lt.s32.totalorder %s197, 2
        %s201 = scalar_select %p200, %s197, 2
        %s202 = smul.addr %s199, 24
        %s203 = sadd.s32 %s201, %s202
        %s204 = smul.addr %s203, 4
        %s205 = scalar_lea.vmem %s0, %s204
        %s206 = smul.u32 3, %s19
      $region36: #{point_gen_con.7} parent=31 // pred_fallthru
        _
    $region32: #{point_gen_con.7} parent=5 // pred_fallthru
      _
    %p207 = scmp.le.s32.totalorder 1, %s11
    %p208 = scmp.lt.s32.totalorder %s11, 3
    %p209 = pnand %p207, %p208
    %p210 = pneg %p209
    // Predicated region
    $region37: #{point_gen_con.7} parent=5 // pred_check
      _
    $region38: #{point_gen_con.7} parent=5 // pred_check_branch
      %212 = sbr.rel (%p209) target = $region40
    $region39: #{point_gen_con.7} parent=5 // pred_region
      %s213 = ssub.s32 %s11, 1
      %s214 = smul.u32 3, %s21
      %p215 = scmp.lt.s32.totalorder %s20, 1
      %s216 = scalar_select %p215, %s20, 1
      %p217 = scmp.lt.s32.totalorder %s214, 2
      %s218 = scalar_select %p217, %s214, 2
      %s219 = smul.addr %s216, 24
      %s220 = sadd.s32 %s218, %s219
      %s221 = smul.addr %s220, 4
      %s222 = scalar_lea.vmem %s0, %s221
      %p223 = pneg %p51
      %p224 = pneg %p48
      %p225 = pneg %p72
      %p226 = pneg %p69
      %p227 = pneg %p93
      %p228 = pneg %p90
      %p229 = pneg %p114
      %p230 = pneg %p111
      %p231 = pneg %p135
      %p232 = pneg %p132
      %p233 = pneg %p163
      %p234 = pneg %p160
      %s235 = smul.u32 3, %s21
      %p236 = scmp.lt.s32.totalorder %s20, 1
      %s237 = scalar_select %p236, %s20, 1
      %p238 = scmp.lt.s32.totalorder %s235, 2
      %s239 = scalar_select %p238, %s235, 2
      %s240 = smul.addr %s237, 3
      %s241 = sadd.s32 %s239, %s240
      %s242 = smul.addr %s241, 8
      %s243 = scalar_lea.vmem %s5, %s242
      %s244 = smul.u32 3, %s21
      %p245 = scmp.lt.s32.totalorder %s20, 1
      %s246 = scalar_select %p245, %s20, 1
      %p247 = scmp.lt.s32.totalorder %s244, 2
      %s248 = scalar_select %p247, %s244, 2
      %s249 = smul.addr %s246, 24
      %s250 = sadd.s32 %s248, %s249
      %s251 = smul.addr %s250, 4
      %s252 = scalar_lea.vmem %s0, %s251
      %s253 = smul.u32 3, %s21
      %s254 = smul.u32 3, %s21
      %p255 = scmp.lt.s32.totalorder %s20, 1
      %s256 = scalar_select %p255, %s20, 1
      %p257 = scmp.lt.s32.totalorder %s254, 2
      %s258 = scalar_select %p257, %s254, 2
      %s259 = smul.addr %s256, 3
      %s260 = sadd.s32 %s258, %s259
      %s261 = smul.addr %s260, 8
      %s262 = scalar_lea.vmem %s5, %s261
      %s263 = smul.u32 3, %s21
      %v265 = vld [vmem:[%s252] sm:$0xff]
      %v266 = vld [vmem:[%s252 + $0x8] sm:$0xf]
      %v267 = vld [vmem:[%s252 + $0xc] sm:$0xff]
      %v268 = vld [vmem:[%s252 + $0x14] sm:$0xf]
      %v269 = vld [vmem:[%s252 + $0x18] sm:$0xff]
      %v270 = vld [vmem:[%s252 + $0x20] sm:$0xf]
      %v271 = vld [vmem:[%s252 + $0x24] sm:$0xff]
      %v272 = vld [vmem:[%s252 + $0x2c] sm:$0xf]
      %v273 = vld [vmem:[%s252 + $0x30] sm:$0xff]
      %v274 = vld [vmem:[%s252 + $0x38] sm:$0xf]
      %v275 = vld [vmem:[%s252 + $0x3c] sm:$0xff]
      %v276 = vld [vmem:[%s252 + $0x44] sm:$0xf]
      %v277 = vld [vmem:[%s252 + $0x48] sm:$0xff]
      %v278 = vld [vmem:[%s252 + $0x50] sm:$0xf]
      %v279 = vld [vmem:[%s252 + $0x54] sm:$0xff]
      %v280 = vld [vmem:[%s252 + $0x5c] sm:$0xf]
      %v281 = vunpack.c.l.bf16 %v265
      %v282 = vunpack.c.h.bf16 %v265
      %v283 = vunpack.c.l.bf16 %v266
      %v284 = vunpack.c.l.bf16 %v267
      %v285 = vunpack.c.h.bf16 %v267
      %v286 = vunpack.c.l.bf16 %v268
      %v287 = vunpack.c.l.bf16 %v269
      %v288 = vunpack.c.h.bf16 %v269
      %v289 = vunpack.c.l.bf16 %v270
      %v290 = vunpack.c.l.bf16 %v271
      %v291 = vunpack.c.h.bf16 %v271
      %v292 = vunpack.c.l.bf16 %v272
      %v293 = vunpack.c.l.bf16 %v273
      %v294 = vunpack.c.h.bf16 %v273
      %v295 = vunpack.c.l.bf16 %v274
      %v296 = vunpack.c.l.bf16 %v275
      %v297 = vunpack.c.h.bf16 %v275
      %v298 = vunpack.c.l.bf16 %v276
      %v299 = vunpack.c.l.bf16 %v277
      %v300 = vunpack.c.h.bf16 %v277
      %v301 = vunpack.c.l.bf16 %v278
      %v302 = vunpack.c.l.bf16 %v279
      %v303 = vunpack.c.h.bf16 %v279
      %v304 = vunpack.c.l.bf16 %v280
      %v305 = vld [vmem:[%s1] sm:$0xff]
      %v306 = vld [vmem:[%s1 + $0x8] sm:$0xff]
      %v307 = vld [vmem:[%s1 + $0x10] sm:$0xff]
      %v308 = vld [vmem:[%s1 + $0x18] sm:$0xff]
      %v309 = vld [vmem:[%s1 + $0x20] sm:$0xff]
      %v310 = vld [vmem:[%s1 + $0x28] sm:$0xff]
      %v311 = vld [vmem:[%s1 + $0x30] sm:$0xff]
      %v312 = vld [vmem:[%s1 + $0x38] sm:$0xff]
      %314 = vset.pattern.permute.xlu0 0
      %315 = vperm.xlu0 %314, %v305
      %v316 = vpop.permute.xlu0 %315
      %319 = vset.pattern.permute.xlu0 0
      %320 = vperm.xlu0 %319, %v306
      %v321 = vpop.permute.xlu0 %320
      %324 = vset.pattern.permute.xlu0 0
      %325 = vperm.xlu0 %324, %v307
      %v326 = vpop.permute.xlu0 %325
      %329 = vset.pattern.permute.xlu0 0
      %330 = vperm.xlu0 %329, %v308
      %v331 = vpop.permute.xlu0 %330
      %334 = vset.pattern.permute.xlu0 0
      %335 = vperm.xlu0 %334, %v309
      %v336 = vpop.permute.xlu0 %335
      %339 = vset.pattern.permute.xlu0 0
      %340 = vperm.xlu0 %339, %v310
      %v341 = vpop.permute.xlu0 %340
      %344 = vset.pattern.permute.xlu0 0
      %345 = vperm.xlu0 %344, %v311
      %v346 = vpop.permute.xlu0 %345
      %349 = vset.pattern.permute.xlu0 0
      %350 = vperm.xlu0 %349, %v312
      %v351 = vpop.permute.xlu0 %350
      %v353 = vmul.f32 %v281, %v316
      %v354 = vmul.f32 %v282, %v316
      %v355 = vmul.f32 %v283, %v316
      %v356 = vmul.f32 %v284, %v321
      %v357 = vmul.f32 %v285, %v321
      %v358 = vmul.f32 %v286, %v321
      %v359 = vmul.f32 %v287, %v326
      %v360 = vmul.f32 %v288, %v326
      %v361 = vmul.f32 %v289, %v326
      %v362 = vmul.f32 %v290, %v331
      %v363 = vmul.f32 %v291, %v331
      %v364 = vmul.f32 %v292, %v331
      %v365 = vmul.f32 %v293, %v336
      %v366 = vmul.f32 %v294, %v336
      %v367 = vmul.f32 %v295, %v336
      %v368 = vmul.f32 %v296, %v341
      %v369 = vmul.f32 %v297, %v341
      %v370 = vmul.f32 %v298, %v341
      %v371 = vmul.f32 %v299, %v346
      %v372 = vmul.f32 %v300, %v346
      %v373 = vmul.f32 %v301, %v346
      %v374 = vmul.f32 %v302, %v351
      %v375 = vmul.f32 %v303, %v351
      %v376 = vmul.f32 %v304, %v351
      %v377 = vld [vmem:[%s2] sm:$0xff]
      %v378 = vld [vmem:[%s2 + $0x8] sm:$0xff]
      %v379 = vld [vmem:[%s2 + $0x10] sm:$0xff]
      %v380 = vld [vmem:[%s2 + $0x18] sm:$0xff]
      %v381 = vld [vmem:[%s2 + $0x20] sm:$0xff]
      %v382 = vld [vmem:[%s2 + $0x28] sm:$0xff]
      %v383 = vld [vmem:[%s2 + $0x30] sm:$0xff]
      %v384 = vld [vmem:[%s2 + $0x38] sm:$0xff]
      %386 = vset.pattern.permute.xlu0 0
      %387 = vperm.xlu0 %386, %v377
      %v388 = vpop.permute.xlu0 %387
      %391 = vset.pattern.permute.xlu0 0
      %392 = vperm.xlu0 %391, %v378
      %v393 = vpop.permute.xlu0 %392
      %396 = vset.pattern.permute.xlu0 0
      %397 = vperm.xlu0 %396, %v379
      %v398 = vpop.permute.xlu0 %397
      %401 = vset.pattern.permute.xlu0 0
      %402 = vperm.xlu0 %401, %v380
      %v403 = vpop.permute.xlu0 %402
      %406 = vset.pattern.permute.xlu0 0
      %407 = vperm.xlu0 %406, %v381
      %v408 = vpop.permute.xlu0 %407
      %411 = vset.pattern.permute.xlu0 0
      %412 = vperm.xlu0 %411, %v382
      %v413 = vpop.permute.xlu0 %412
      %416 = vset.pattern.permute.xlu0 0
      %417 = vperm.xlu0 %416, %v383
      %v418 = vpop.permute.xlu0 %417
      %421 = vset.pattern.permute.xlu0 0
      %422 = vperm.xlu0 %421, %v384
      %v423 = vpop.permute.xlu0 %422
      %v425 = vadd.f32 %v353, %v388
      %v426 = vadd.f32 %v354, %v388
      %v427 = vadd.f32 %v355, %v388
      %v428 = vadd.f32 %v356, %v393
      %v429 = vadd.f32 %v357, %v393
      %v430 = vadd.f32 %v358, %v393
      %v431 = vadd.f32 %v359, %v398
      %v432 = vadd.f32 %v360, %v398
      %v433 = vadd.f32 %v361, %v398
      %v434 = vadd.f32 %v362, %v403
      %v435 = vadd.f32 %v363, %v403
      %v436 = vadd.f32 %v364, %v403
      %v437 = vadd.f32 %v365, %v408
      %v438 = vadd.f32 %v366, %v408
      %v439 = vadd.f32 %v367, %v408
      %v440 = vadd.f32 %v368, %v413
      %v441 = vadd.f32 %v369, %v413
      %v442 = vadd.f32 %v370, %v413
      %v443 = vadd.f32 %v371, %v418
      %v444 = vadd.f32 %v372, %v418
      %v445 = vadd.f32 %v373, %v418
      %v446 = vadd.f32 %v374, %v423
      %v447 = vadd.f32 %v375, %v423
      %v448 = vadd.f32 %v376, %v423
      %v449 = vmax.f32 %v425, 0.0
      %v450 = vmax.f32 %v426, 0.0
      %v451 = vmax.f32 %v427, 0.0
      %v452 = vmax.f32 %v428, 0.0
      %v453 = vmax.f32 %v429, 0.0
      %v454 = vmax.f32 %v430, 0.0
      %v455 = vmax.f32 %v431, 0.0
      %v456 = vmax.f32 %v432, 0.0
      %v457 = vmax.f32 %v433, 0.0
      %v458 = vmax.f32 %v434, 0.0
      %v459 = vmax.f32 %v435, 0.0
      %v460 = vmax.f32 %v436, 0.0
      %v461 = vmax.f32 %v437, 0.0
      %v462 = vmax.f32 %v438, 0.0
      %v463 = vmax.f32 %v439, 0.0
      %v464 = vmax.f32 %v440, 0.0
      %v465 = vmax.f32 %v441, 0.0
      %v466 = vmax.f32 %v442, 0.0
      %v467 = vmax.f32 %v443, 0.0
      %v468 = vmax.f32 %v444, 0.0
      %v469 = vmax.f32 %v445, 0.0
      %v470 = vmax.f32 %v446, 0.0
      %v471 = vmax.f32 %v447, 0.0
      %v472 = vmax.f32 %v448, 0.0
      %v473 = vld [vmem:[%s3] sm:$0xf]
      %v474 = vpack.c.bf16 %v452, %v449
      %v475 = vpack.c.bf16 %v453, %v450
      %v476 = vpack.c.bf16 %v454, %v451
      %v477 = vpack.c.bf16 %v458, %v455
      %v478 = vpack.c.bf16 %v459, %v456
      %v479 = vpack.c.bf16 %v460, %v457
      %v480 = vpack.c.bf16 %v464, %v461
      %v481 = vpack.c.bf16 %v465, %v462
      %v482 = vpack.c.bf16 %v466, %v463
      %v483 = vpack.c.bf16 %v470, %v467
      %v484 = vpack.c.bf16 %v471, %v468
      %v485 = vpack.c.bf16 %v472, %v469
      %v486 = vld [vmem:[%s4] sm:$0xff]
      %488 = vset.pattern.permute.xlu0 0
      %489 = vperm.xlu0 %488, %v486
      %v490 = vpop.permute.xlu0 %489
      %vm492 = vcmask 523264
      %v494 = vsel %vm492, %v473, 0
      %496 = vmatprep.subr.bf16.mxu0 %v475
      %497 = vmatpush1.bf16.msra.mxu0 %v474
      %498 = vmatprep.subr.bf16.mxu0 %v478
      %499 = vmatpush1.bf16.msra.mxu0 %v477
      %500 = vmatprep.subr.bf16.mxu0 %v481
      %501 = vmatpush1.bf16.msra.mxu0 %v480
      %502 = vmatprep.subr.bf16.mxu0 %v484
      %503 = vmatpush1.bf16.msra.mxu0 %v483
      %504 = vmatprep.subr.bf16.mxu0 0
      %505 = vmatpush1.bf16.msra.mxu0 0
      %506 = vmatprep.subr.bf16.mxu0 0
      %507 = vmatpush1.bf16.msra.mxu0 0
      %508 = vmatprep.subr.bf16.mxu0 0
      %509 = vmatpush1.bf16.msra.mxu0 0
      %510 = vmatprep.subr.bf16.mxu0 0
      %511 = vmatpush1.bf16.msra.mxu0 0
      %512 = vmatprep.subr.bf16.mxu0 0
      %513 = vmatpush1.bf16.msra.mxu0 0
      %514 = vmatprep.subr.bf16.mxu0 0
      %515 = vmatpush1.bf16.msra.mxu0 0
      %516 = vmatprep.subr.bf16.mxu0 0
      %517 = vmatpush1.bf16.msra.mxu0 0
      %518 = vmatprep.subr.bf16.mxu0 0
      %519 = vmatpush1.bf16.msra.mxu0 0
      %520 = vmatprep.subr.bf16.mxu0 0
      %521 = vmatpush1.bf16.msra.mxu0 0
      %522 = vmatprep.subr.bf16.mxu0 0
      %523 = vmatpush1.bf16.msra.mxu0 0
      %524 = vmatprep.subr.bf16.mxu0 0
      %525 = vmatpush1.bf16.msra.mxu0 0
      %526 = vmatprep.subr.bf16.mxu0 0
      %527 = vmatpush1.bf16.msra.mxu0 0
      %528 = vmatprep.mubr.bf16.mxu0 0
      %529 = vmatmul.mubr.bf16.gmra.mrb[0].mxu0 %v494
      %v530 = vpop.f32.mrb[0].mxu0
      %v531 = vadd.f32 %v490, %v530
      %v532 = vpop.f32.mrb[0].mxu0
      %v533 = vadd.f32 %v490, %v532
      %v534 = vpop.f32.mrb[0].mxu0
      %v535 = vpop.f32.mrb[0].mxu0
      %536 = vdwg.mxu0
      %537 = vmatprep.subr.bf16.mxu0 0
      %538 = vmatpush1.bf16.msra.mxu0 %v476
      %539 = vmatprep.subr.bf16.mxu0 0
      %540 = vmatpush1.bf16.msra.mxu0 %v479
      %541 = vmatprep.subr.bf16.mxu0 0
      %542 = vmatpush1.bf16.msra.mxu0 %v482
      %543 = vmatprep.subr.bf16.mxu0 0
      %544 = vmatpush1.bf16.msra.mxu0 %v485
      %545 = vmatprep.subr.bf16.mxu0 0
      %546 = vmatpush1.bf16.msra.mxu0 0
      %547 = vmatprep.subr.bf16.mxu0 0
      %548 = vmatpush1.bf16.msra.mxu0 0
      %549 = vmatprep.subr.bf16.mxu0 0
      %550 = vmatpush1.bf16.msra.mxu0 0
      %551 = vmatprep.subr.bf16.mxu0 0
      %552 = vmatpush1.bf16.msra.mxu0 0
      %553 = vmatprep.subr.bf16.mxu0 0
      %554 = vmatpush1.bf16.msra.mxu0 0
      %555 = vmatprep.subr.bf16.mxu0 0
      %556 = vmatpush1.bf16.msra.mxu0 0
      %557 = vmatprep.subr.bf16.mxu0 0
      %558 = vmatpush1.bf16.msra.mxu0 0
      %559 = vmatprep.subr.bf16.mxu0 0
      %560 = vmatpush1.bf16.msra.mxu0 0
      %561 = vmatprep.subr.bf16.mxu0 0
      %562 = vmatpush1.bf16.msra.mxu0 0
      %563 = vmatprep.subr.bf16.mxu0 0
      %564 = vmatpush1.bf16.msra.mxu0 0
      %565 = vmatprep.subr.bf16.mxu0 0
      %566 = vmatpush1.bf16.msra.mxu0 0
      %567 = vmatprep.subr.bf16.mxu0 0
      %568 = vmatpush1.bf16.msra.mxu0 0
      %569 = vmatprep.mubr.bf16.mxu0 0
      %570 = vmatmul.mubr.bf16.gmra.mrb[0].mxu0 %v494
      %v571 = vpop.f32.mrb[0].mxu0
      %v572 = vadd.f32 %v490, %v571
      %v573 = vpop.f32.mrb[0].mxu0
      %v574 = vpop.f32.mrb[0].mxu0
      %v575 = vpop.f32.mrb[0].mxu0
      %576 = vdwg.mxu0
      %v577 = vtanh.pop %v531
      %v578 = vtanh.pop %v533
      %v579 = vtanh.pop %v572
      %580 = vst [vmem:[%s262] sm:$0xff] %v577
      %581 = vst [vmem:[%s262 + $0x8] sm:$0xff] %v578
      %582 = vst [vmem:[%s262 + $0x10] sm:$0xff] %v579
      %s583 = smul.u32 3, %s21
      %p584 = scmp.lt.s32.totalorder %s20, 1
      %s585 = scalar_select %p584, %s20, 1
      %p586 = scmp.lt.s32.totalorder %s583, 2
      %s587 = scalar_select %p586, %s583, 2
      %s588 = smul.addr %s585, 3
      %s589 = sadd.s32 %s587, %s588
      %s590 = smul.addr %s589, 8
      %s591 = scalar_lea.vmem %s5, %s590
      // Predicated region
      $region41: #{point_gen_con.7} parent=39 // pred_check
        %p592 = pneg %p160
      $region42: #{point_gen_con.7} parent=39 // pred_check_branch
        %594 = sbr.rel (%p592) target = $region44
      $region43: #{point_gen_con.7} parent=39 // pred_region
        %s595 = smul.u32 3, %s21
      $region44: #{point_gen_con.7} parent=39 // pred_fallthru
        _
    $region40: #{point_gen_con.7} parent=5 // pred_fallthru
      _
    %p596 = scmp.le.s32.totalorder 2, %s11
    // Predicated region
    $region45: #{point_gen_con.7} parent=5 // pred_check
      %p597 = pneg %p596
    $region46: #{point_gen_con.7} parent=5 // pred_check_branch
      %599 = sbr.rel (%p597) target = $region48
    $region47: #{point_gen_con.7} parent=5 // pred_region
      %s600 = ssub.s32 %s11, 2
      // Predicated region
      $region49: #{point_gen_con.7} parent=47 // pred_check
        %p601 = pneg %p166
      $region50: #{point_gen_con.7} parent=47 // pred_check_branch
        %603 = sbr.rel (%p601) target = $region52
      $region51: #{point_gen_con.7} parent=47 // pred_region
        %s604 = smul.u32 3, %s23
        %p605 = scmp.lt.s32.totalorder %s22, 1
        %s606 = scalar_select %p605, %s22, 1
        %p607 = scmp.lt.s32.totalorder %s604, 2
        %s608 = scalar_select %p607, %s604, 2
        %s609 = smul.addr %s606, 3
        %s610 = sadd.s32 %s608, %s609
        %s611 = smul.addr %s610, 8
        %s612 = scalar_lea.vmem %s5, %s611
      $region52: #{point_gen_con.7} parent=47 // pred_fallthru
        _
    $region48: #{point_gen_con.7} parent=5 // pred_fallthru
      _
  $region6: #{point_gen_con.7} parent=0 // loop_footer
    %s15 = sadd.s32 1, %s11
  $region7: #{point_gen_con.7} parent=0 // loop_footer_branch
    %10 = sbr.rel target = $region3
  $region8: #{point_gen_con.7} parent=0 // loop_exit
    _

// kernel: point_gen_con.5
$region0: #{point_gen_con.5}
  #allocation0 [shape = 'u32[]', space=smem, size = 0x4, offset = 0x4, fixed_abs, tag = 'smem constant byte address 0x4 - core index']
  #allocation1 [shape = 'u32[144,128]{1,0:T(1,128)}', space=vmem, size = 0x12000, scoped, tag = 'internal scratch']
  %s0 = inlined_call_operand.vmem [shape: bf16[2,256,384], index: 0, kind: input, shape index: {}]
  %s1 = inlined_call_operand.vmem [shape: f32[256,1], index: 1, kind: input, shape index: {}]
  %s2 = inlined_call_operand.vmem [shape: f32[256,1], index: 2, kind: input, shape index: {}]
  %s3 = inlined_call_operand.vmem [shape: bf16[128,256], index: 3, kind: input, shape index: {}]
  %s4 = inlined_call_operand.vmem [shape: bf16[2,128,384], index: 4, kind: output, shape index: {0}]
  %s5 = inlined_call_operand.vmem [shape: f32[2,1,128,1], index: 5, kind: output, shape index: {1}]
  %s6 = inlined_call_operand.vmem [shape: f32[2,1,128,1], index: 6, kind: output, shape index: {2}]
  %7 = xla_tuple %s4, %s5, %s6
  %s8 = sld [smem:[#allocation0]]
  $region65: #{point_gen_con.5} parent=0
    _
  %s10 = ssub.s32 1, %s8
  %s11 = scalar_select 0, %s10, %s8
  loop: start=0, step=1, limit=4
  $region2: #{point_gen_con.5} parent=0 // loop_pre_header
    _
  $region3: #{point_gen_con.5} parent=0 // loop_header
    %s13 = sphi 0, %s17
    %p14 = scmp.ge.s32.totalorder %s13, 4
    %s20 = sphi 0, %s32
    %s21 = sphi 0, %s28
    %s22 = sphi 0, %s20
    %s23 = sphi 0, %s21
    %s24 = sphi 0, %s22
    %s25 = sphi 0, %s23
    %s37 = sphi 0, %s39
    %s40 = sphi 0, %s37
    %s41 = sphi 0, %s40
    %s57 = sphi 0, %s41
    %s61 = sphi 0, %s61
    %s63 = sphi 0, %s61
    %s64 = sphi 0, %s63
    %s78 = sphi 0, %s64
    %s82 = sphi 0, %s82
    %s84 = sphi 0, %s82
    %s85 = sphi 0, %s84
    %s99 = sphi 0, %s85
    %s103 = sphi 0, %s103
    %s105 = sphi 0, %s103
    %s106 = sphi 0, %s105
    %s120 = sphi 0, %s106
    %s128 = sphi 0, %s130
    %s131 = sphi 0, %s128
    %s132 = sphi 0, %s131
    %s148 = sphi 0, %s132
    %s156 = sphi 0, %s158
    %s159 = sphi 0, %s156
    %s160 = sphi 0, %s159
    %s176 = sphi 0, %s160
    %s184 = sphi 0, %s186
    %s187 = sphi 0, %s184
    %s188 = sphi 0, %s187
    %s204 = sphi 0, %s188
  $region4: #{point_gen_con.5} parent=0 // loop_header_branch
    %16 = sbr.rel (%p14) target = $region8
  $region5: #{point_gen_con.5} parent=0 // loop_body
    %s18 = ssub.s32 %s13, 1
    %s19 = ssub.s32 %s13, 2
    %s26 = sadd.s32 1, %s21
    %p27 = scmp.ge.s32.totalorder %s26, 1
    %s28 = scalar_select %p27, 0, %s26
    %s29 = sadd.s32 1, %s20
    %s30 = scalar_select %p27, %s29, %s20
    %p31 = scmp.ge.s32.totalorder %s30, 2
    %s32 = scalar_select %p31, 0, %s30
    %s33 = ssub.s32 %s20, %s32
    %s34 = ssub.s32 %s21, %s28
    %s35 = sor.u32 %s33, %s34
    %p36 = scmp.eq.s32.totalorder %s35, 0
    %s38 = sadd.s32 %s37, 1
    %s39 = scalar_select %p36, %s37, %s38
    %p42 = pneg %p36
    %p43 = scmp.eq.s32.totalorder %s13, 1
    %p44 = por %p42, %p43
    %p45 = scmp.ne.s32.totalorder %s37, %s40
    %p46 = scmp.eq.s32.totalorder %s13, 0
    %p47 = por %p45, %p46
    %p48 = scmp.ne.s32.totalorder %s37, %s40
    %p49 = scmp.eq.s32.totalorder %s18, 1
    %p50 = por %p48, %p49
    %p51 = scmp.ne.s32.totalorder %s40, %s41
    %p52 = scmp.eq.s32.totalorder %s18, 0
    %p53 = por %p51, %p52
    %p54 = scmp.ne.s32.totalorder %s40, %s41
    %p55 = scmp.eq.s32.totalorder %s19, 1
    %p56 = por %p54, %p55
    %p58 = scmp.ne.s32.totalorder %s41, %s57
    %p59 = scmp.eq.s32.totalorder %s19, 0
    %p60 = por %p58, %p59
    %s62 = sadd.s32 %s61, 1
    %p65 = scmp.eq.s32.totalorder %s13, 1
    %p66 = scmp.ne.s32.totalorder %s61, %s63
    %p67 = scmp.eq.s32.totalorder %s13, 0
    %p68 = por %p66, %p67
    %p69 = scmp.ne.s32.totalorder %s61, %s63
    %p70 = scmp.eq.s32.totalorder %s18, 1
    %p71 = por %p69, %p70
    %p72 = scmp.ne.s32.totalorder %s63, %s64
    %p73 = scmp.eq.s32.totalorder %s18, 0
    %p74 = por %p72, %p73
    %p75 = scmp.ne.s32.totalorder %s63, %s64
    %p76 = scmp.eq.s32.totalorder %s19, 1
    %p77 = por %p75, %p76
    %p79 = scmp.ne.s32.totalorder %s64, %s78
    %p80 = scmp.eq.s32.totalorder %s19, 0
    %p81 = por %p79, %p80
    %s83 = sadd.s32 %s82, 1
    %p86 = scmp.eq.s32.totalorder %s13, 1
    %p87 = scmp.ne.s32.totalorder %s82, %s84
    %p88 = scmp.eq.s32.totalorder %s13, 0
    %p89 = por %p87, %p88
    %p90 = scmp.ne.s32.totalorder %s82, %s84
    %p91 = scmp.eq.s32.totalorder %s18, 1
    %p92 = por %p90, %p91
    %p93 = scmp.ne.s32.totalorder %s84, %s85
    %p94 = scmp.eq.s32.totalorder %s18, 0
    %p95 = por %p93, %p94
    %p96 = scmp.ne.s32.totalorder %s84, %s85
    %p97 = scmp.eq.s32.totalorder %s19, 1
    %p98 = por %p96, %p97
    %p100 = scmp.ne.s32.totalorder %s85, %s99
    %p101 = scmp.eq.s32.totalorder %s19, 0
    %p102 = por %p100, %p101
    %s104 = sadd.s32 %s103, 1
    %p107 = scmp.eq.s32.totalorder %s13, 1
    %p108 = scmp.ne.s32.totalorder %s103, %s105
    %p109 = scmp.eq.s32.totalorder %s13, 0
    %p110 = por %p108, %p109
    %p111 = scmp.ne.s32.totalorder %s103, %s105
    %p112 = scmp.eq.s32.totalorder %s18, 1
    %p113 = por %p111, %p112
    %p114 = scmp.ne.s32.totalorder %s105, %s106
    %p115 = scmp.eq.s32.totalorder %s18, 0
    %p116 = por %p114, %p115
    %p117 = scmp.ne.s32.totalorder %s105, %s106
    %p118 = scmp.eq.s32.totalorder %s19, 1
    %p119 = por %p117, %p118
    %p121 = scmp.ne.s32.totalorder %s106, %s120
    %p122 = scmp.eq.s32.totalorder %s19, 0
    %p123 = por %p121, %p122
    %s124 = ssub.s32 %s20, %s32
    %s125 = ssub.s32 %s21, %s28
    %s126 = sor.u32 %s124, %s125
    %p127 = scmp.eq.s32.totalorder %s126, 0
    %s129 = sadd.s32 %s128, 1
    %s130 = scalar_select %p127, %s128, %s129
    %p133 = pneg %p127
    %p134 = scmp.eq.s32.totalorder %s13, 1
    %p135 = por %p133, %p134
    %p136 = scmp.ne.s32.totalorder %s128, %s131
    %p137 = scmp.eq.s32.totalorder %s13, 0
    %p138 = por %p136, %p137
    %p139 = scmp.ne.s32.totalorder %s128, %s131
    %p140 = scmp.eq.s32.totalorder %s18, 1
    %p141 = por %p139, %p140
    %p142 = scmp.ne.s32.totalorder %s131, %s132
    %p143 = scmp.eq.s32.totalorder %s18, 0
    %p144 = por %p142, %p143
    %p145 = scmp.ne.s32.totalorder %s131, %s132
    %p146 = scmp.eq.s32.totalorder %s19, 1
    %p147 = por %p145, %p146
    %p149 = scmp.ne.s32.totalorder %s132, %s148
    %p150 = scmp.eq.s32.totalorder %s19, 0
    %p151 = por %p149, %p150
    %s152 = ssub.s32 %s20, %s32
    %s153 = ssub.s32 %s21, %s28
    %s154 = sor.u32 %s152, %s153
    %p155 = scmp.eq.s32.totalorder %s154, 0
    %s157 = sadd.s32 %s156, 1
    %s158 = scalar_select %p155, %s156, %s157
    %p161 = pneg %p155
    %p162 = scmp.eq.s32.totalorder %s13, 1
    %p163 = por %p161, %p162
    %p164 = scmp.ne.s32.totalorder %s156, %s159
    %p165 = scmp.eq.s32.totalorder %s13, 0
    %p166 = por %p164, %p165
    %p167 = scmp.ne.s32.totalorder %s156, %s159
    %p168 = scmp.eq.s32.totalorder %s18, 1
    %p169 = por %p167, %p168
    %p170 = scmp.ne.s32.totalorder %s159, %s160
    %p171 = scmp.eq.s32.totalorder %s18, 0
    %p172 = por %p170, %p171
    %p173 = scmp.ne.s32.totalorder %s159, %s160
    %p174 = scmp.eq.s32.totalorder %s19, 1
    %p175 = por %p173, %p174
    %p177 = scmp.ne.s32.totalorder %s160, %s176
    %p178 = scmp.eq.s32.totalorder %s19, 0
    %p179 = por %p177, %p178
    %s180 = ssub.s32 %s20, %s32
    %s181 = ssub.s32 %s21, %s28
    %s182 = sor.u32 %s180, %s181
    %p183 = scmp.eq.s32.totalorder %s182, 0
    %s185 = sadd.s32 %s184, 1
    %s186 = scalar_select %p183, %s184, %s185
    %p189 = pneg %p183
    %p190 = scmp.eq.s32.totalorder %s13, 1
    %p191 = por %p189, %p190
    %p192 = scmp.ne.s32.totalorder %s184, %s187
    %p193 = scmp.eq.s32.totalorder %s13, 0
    %p194 = por %p192, %p193
    %p195 = scmp.ne.s32.totalorder %s184, %s187
    %p196 = scmp.eq.s32.totalorder %s18, 1
    %p197 = por %p195, %p196
    %p198 = scmp.ne.s32.totalorder %s187, %s188
    %p199 = scmp.eq.s32.totalorder %s18, 0
    %p200 = por %p198, %p199
    %p201 = scmp.ne.s32.totalorder %s187, %s188
    %p202 = scmp.eq.s32.totalorder %s19, 1
    %p203 = por %p201, %p202
    %p205 = scmp.ne.s32.totalorder %s188, %s204
    %p206 = scmp.eq.s32.totalorder %s19, 0
    %p207 = por %p205, %p206
    %p208 = scmp.le.s32.totalorder 1, %s13
    %p209 = scmp.lt.s32.totalorder %s13, 3
    %p210 = pnand %p208, %p209
    %p211 = pneg %p210
    // Predicated region
    $region9: #{point_gen_con.5} parent=5 // pred_check
      _
    $region10: #{point_gen_con.5} parent=5 // pred_check_branch
      %213 = sbr.rel (%p210) target = $region12
    $region11: #{point_gen_con.5} parent=5 // pred_region
      %s214 = ssub.s32 %s13, 1
      // Predicated region
      $region13: #{point_gen_con.5} parent=11 // pred_check
        %p215 = pneg %p74
      $region14: #{point_gen_con.5} parent=11 // pred_check_branch
        %217 = sbr.rel (%p215) target = $region16
      $region15: #{point_gen_con.5} parent=11 // pred_region
        _
      $region16: #{point_gen_con.5} parent=11 // pred_fallthru
        _
      // Predicated region
      $region17: #{point_gen_con.5} parent=11 // pred_check
        %p218 = pneg %p95
      $region18: #{point_gen_con.5} parent=11 // pred_check_branch
        %220 = sbr.rel (%p218) target = $region20
      $region19: #{point_gen_con.5} parent=11 // pred_region
        _
      $region20: #{point_gen_con.5} parent=11 // pred_fallthru
        _
      // Predicated region
      $region21: #{point_gen_con.5} parent=11 // pred_check
        %p221 = pneg %p116
      $region22: #{point_gen_con.5} parent=11 // pred_check_branch
        %223 = sbr.rel (%p221) target = $region24
      $region23: #{point_gen_con.5} parent=11 // pred_region
        _
      $region24: #{point_gen_con.5} parent=11 // pred_fallthru
        _
    $region12: #{point_gen_con.5} parent=5 // pred_fallthru
      _
    %p224 = scmp.lt.s32.totalorder %s13, 2
    // Predicated region
    $region25: #{point_gen_con.5} parent=5 // pred_check
      %p225 = pneg %p224
    $region26: #{point_gen_con.5} parent=5 // pred_check_branch
      %227 = sbr.rel (%p225) target = $region28
    $region27: #{point_gen_con.5} parent=5 // pred_region
      // Predicated region
      $region29: #{point_gen_con.5} parent=27 // pred_check
        %p228 = pneg %p47
      $region30: #{point_gen_con.5} parent=27 // pred_check_branch
        %230 = sbr.rel (%p228) target = $region32
      $region31: #{point_gen_con.5} parent=27 // pred_region
        %s231 = smul.u32 3, %s21
        %p232 = scmp.lt.s32.totalorder %s20, 1
        %s233 = scalar_select %p232, %s20, 1
        %p234 = scmp.lt.s32.totalorder %s231, 2
        %s235 = scalar_select %p234, %s231, 2
        %s236 = smul.addr %s233, 96
        %s237 = sadd.s32 %s235, %s236
        %s238 = smul.addr %s237, 4
        %s239 = scalar_lea.vmem %s0, %s238
        %s240 = smul.u32 3, %s21
      $region32: #{point_gen_con.5} parent=27 // pred_fallthru
        _
    $region28: #{point_gen_con.5} parent=5 // pred_fallthru
      _
    %p241 = scmp.le.s32.totalorder 1, %s13
    %p242 = scmp.lt.s32.totalorder %s13, 3
    %p243 = pnand %p241, %p242
    %p244 = pneg %p243
    // Predicated region
    $region33: #{point_gen_con.5} parent=5 // pred_check
      _
    $region34: #{point_gen_con.5} parent=5 // pred_check_branch
      %246 = sbr.rel (%p243) target = $region36
    $region35: #{point_gen_con.5} parent=5 // pred_region
      %s247 = ssub.s32 %s13, 1
      %s248 = smul.u32 3, %s23
      %p249 = scmp.lt.s32.totalorder %s22, 1
      %s250 = scalar_select %p249, %s22, 1
      %p251 = scmp.lt.s32.totalorder %s248, 2
      %s252 = scalar_select %p251, %s248, 2
      %s253 = smul.addr %s250, 96
      %s254 = sadd.s32 %s252, %s253
      %s255 = smul.addr %s254, 4
      %s256 = scalar_lea.vmem %s0, %s255
      %p257 = pneg %p53
      %p258 = pneg %p50
      %p259 = pneg %p74
      %p260 = pneg %p71
      %p261 = pneg %p95
      %p262 = pneg %p92
      %p263 = pneg %p116
      %p264 = pneg %p113
      %p265 = pneg %p144
      %p266 = pneg %p141
      %s267 = smul.u32 3, %s23
      %p268 = scmp.lt.s32.totalorder %s22, 1
      %s269 = scalar_select %p268, %s22, 1
      %p270 = scmp.lt.s32.totalorder %s267, 2
      %s271 = scalar_select %p270, %s267, 2
      %s272 = smul.addr %s269, 48
      %s273 = sadd.s32 %s271, %s272
      %s274 = smul.addr %s273, 4
      %s275 = scalar_lea.vmem %s4, %s274
      %p276 = pneg %p172
      %p277 = pneg %p169
      %p278 = scmp.lt.s32.totalorder %s22, 1
      %s279 = scalar_select %p278, %s22, 1
      %p280 = scmp.lt.s32.totalorder %s23, 0
      %s281 = scalar_select %p280, %s23, 0
      %s282 = smul.addr %s281, 16
      %s283 = smul.addr %s279, 16
      %s284 = sadd.s32 %s282, %s283
      %s285 = smul.addr %s284, 8
      %s286 = scalar_lea.vmem %s5, %s285
      %p287 = pneg %p200
      %p288 = pneg %p197
      %p289 = scmp.lt.s32.totalorder %s22, 1
      %s290 = scalar_select %p289, %s22, 1
      %p291 = scmp.lt.s32.totalorder %s23, 0
      %s292 = scalar_select %p291, %s23, 0
      %s293 = smul.addr %s292, 16
      %s294 = smul.addr %s290, 16
      %s295 = sadd.s32 %s293, %s294
      %s296 = smul.addr %s295, 8
      %s297 = scalar_lea.vmem %s6, %s296
      %s298 = smul.u32 3, %s23
      %p299 = scmp.lt.s32.totalorder %s22, 1
      %s300 = scalar_select %p299, %s22, 1
      %p301 = scmp.lt.s32.totalorder %s298, 2
      %s302 = scalar_select %p301, %s298, 2
      %s303 = smul.addr %s300, 96
      %s304 = sadd.s32 %s302, %s303
      %s305 = smul.addr %s304, 4
      %s306 = scalar_lea.vmem %s0, %s305
      %s307 = smul.u32 3, %s23
      %s308 = smul.u32 3, %s23
      %p309 = scmp.lt.s32.totalorder %s22, 1
      %s310 = scalar_select %p309, %s22, 1
      %p311 = scmp.lt.s32.totalorder %s308, 2
      %s312 = scalar_select %p311, %s308, 2
      %s313 = smul.addr %s310, 48
      %s314 = sadd.s32 %s312, %s313
      %s315 = smul.addr %s314, 4
      %s316 = scalar_lea.vmem %s4, %s315
      %s317 = smul.u32 3, %s23
      %p318 = scmp.lt.s32.totalorder %s22, 1
      %s319 = scalar_select %p318, %s22, 1
      %p320 = scmp.lt.s32.totalorder %s23, 0
      %s321 = scalar_select %p320, %s23, 0
      %s322 = smul.addr %s321, 16
      %s323 = smul.addr %s319, 16
      %s324 = sadd.s32 %s322, %s323
      %s325 = smul.addr %s324, 8
      %s326 = scalar_lea.vmem %s5, %s325
      %p327 = scmp.lt.s32.totalorder %s22, 1
      %s328 = scalar_select %p327, %s22, 1
      %p329 = scmp.lt.s32.totalorder %s23, 0
      %s330 = scalar_select %p329, %s23, 0
      %s331 = smul.addr %s330, 16
      %s332 = smul.addr %s328, 16
      %s333 = sadd.s32 %s331, %s332
      %s334 = smul.addr %s333, 8
      %s335 = scalar_lea.vmem %s6, %s334
      %v337 = vld [vmem:[%s306] sm:$0xff]
      %v338 = vld [vmem:[%s306 + $0x8] sm:$0xf]
      %v339 = vld [vmem:[%s306 + $0xc] sm:$0xff]
      %v340 = vld [vmem:[%s306 + $0x14] sm:$0xf]
      %v341 = vld [vmem:[%s306 + $0x18] sm:$0xff]
      %v342 = vld [vmem:[%s306 + $0x20] sm:$0xf]
      %v343 = vld [vmem:[%s306 + $0x24] sm:$0xff]
      %v344 = vld [vmem:[%s306 + $0x2c] sm:$0xf]
      %v345 = vld [vmem:[%s306 + $0x30] sm:$0xff]
      %v346 = vld [vmem:[%s306 + $0x38] sm:$0xf]
      %v347 = vld [vmem:[%s306 + $0x3c] sm:$0xff]
      %v348 = vld [vmem:[%s306 + $0x44] sm:$0xf]
      %v349 = vld [vmem:[%s306 + $0x48] sm:$0xff]
      %v350 = vld [vmem:[%s306 + $0x50] sm:$0xf]
      %v351 = vld [vmem:[%s306 + $0x54] sm:$0xff]
      %v352 = vld [vmem:[%s306 + $0x5c] sm:$0xf]
      %v353 = vld [vmem:[%s306 + $0x60] sm:$0xff]
      %v354 = vld [vmem:[%s306 + $0x68] sm:$0xf]
      %v355 = vld [vmem:[%s306 + $0x6c] sm:$0xff]
      %v356 = vld [vmem:[%s306 + $0x74] sm:$0xf]
      %v357 = vld [vmem:[%s306 + $0x78] sm:$0xff]
      %v358 = vld [vmem:[%s306 + $0x80] sm:$0xf]
      %v359 = vld [vmem:[%s306 + $0x84] sm:$0xff]
      %v360 = vld [vmem:[%s306 + $0x8c] sm:$0xf]
      %v361 = vld [vmem:[%s306 + $0x90] sm:$0xff]
      %v362 = vld [vmem:[%s306 + $0x98] sm:$0xf]
      %v363 = vld [vmem:[%s306 + $0x9c] sm:$0xff]
      %v364 = vld [vmem:[%s306 + $0xa4] sm:$0xf]
      %v365 = vld [vmem:[%s306 + $0xa8] sm:$0xff]
      %v366 = vld [vmem:[%s306 + $0xb0] sm:$0xf]
      %v367 = vld [vmem:[%s306 + $0xb4] sm:$0xff]
      %v368 = vld [vmem:[%s306 + $0xbc] sm:$0xf]
      %v369 = vld [vmem:[%s306 + $0xc0] sm:$0xff]
      %v370 = vld [vmem:[%s306 + $0xc8] sm:$0xf]
      %v371 = vld [vmem:[%s306 + $0xcc] sm:$0xff]
      %v372 = vld [vmem:[%s306 + $0xd4] sm:$0xf]
      %v373 = vld [vmem:[%s306 + $0xd8] sm:$0xff]
      %v374 = vld [vmem:[%s306 + $0xe0] sm:$0xf]
      %v375 = vld [vmem:[%s306 + $0xe4] sm:$0xff]
      %v376 = vld [vmem:[%s306 + $0xec] sm:$0xf]
      %v377 = vld [vmem:[%s306 + $0xf0] sm:$0xff]
      %v378 = vld [vmem:[%s306 + $0xf8] sm:$0xf]
      %v379 = vld [vmem:[%s306 + $0xfc] sm:$0xff]
      %v380 = vld [vmem:[%s306 + $0x104] sm:$0xf]
      %v381 = vld [vmem:[%s306 + $0x108] sm:$0xff]
      %v382 = vld [vmem:[%s306 + $0x110] sm:$0xf]
      %v383 = vld [vmem:[%s306 + $0x114] sm:$0xff]
      %v384 = vld [vmem:[%s306 + $0x11c] sm:$0xf]
      %v385 = vld [vmem:[%s306 + $0x120] sm:$0xff]
      %v386 = vld [vmem:[%s306 + $0x128] sm:$0xf]
      %v387 = vld [vmem:[%s306 + $0x12c] sm:$0xff]
      %v388 = vld [vmem:[%s306 + $0x134] sm:$0xf]
      %v389 = vld [vmem:[%s306 + $0x138] sm:$0xff]
      %v390 = vld [vmem:[%s306 + $0x140] sm:$0xf]
      %v391 = vld [vmem:[%s306 + $0x144] sm:$0xff]
      %v392 = vld [vmem:[%s306 + $0x14c] sm:$0xf]
      %v393 = vld [vmem:[%s306 + $0x150] sm:$0xff]
      %v394 = vld [vmem:[%s306 + $0x158] sm:$0xf]
      %v395 = vld [vmem:[%s306 + $0x15c] sm:$0xff]
      %v396 = vld [vmem:[%s306 + $0x164] sm:$0xf]
      %v397 = vld [vmem:[%s306 + $0x168] sm:$0xff]
      %v398 = vld [vmem:[%s306 + $0x170] sm:$0xf]
      %v399 = vld [vmem:[%s306 + $0x174] sm:$0xff]
      %v400 = vld [vmem:[%s306 + $0x17c] sm:$0xf]
      %v401 = vunpack.c.l.bf16 %v337
      %v402 = vunpack.c.h.bf16 %v337
      %v403 = vunpack.c.l.bf16 %v338
      %v404 = vunpack.c.l.bf16 %v339
      %v405 = vunpack.c.h.bf16 %v339
      %v406 = vunpack.c.l.bf16 %v340
      %v407 = vunpack.c.l.bf16 %v341
      %v408 = vunpack.c.h.bf16 %v341
      %v409 = vunpack.c.l.bf16 %v342
      %v410 = vunpack.c.l.bf16 %v343
      %v411 = vunpack.c.h.bf16 %v343
      %v412 = vunpack.c.l.bf16 %v344
      %v413 = vunpack.c.l.bf16 %v345
      %v414 = vunpack.c.h.bf16 %v345
      %v415 = vunpack.c.l.bf16 %v346
      %v416 = vunpack.c.l.bf16 %v347
      %v417 = vunpack.c.h.bf16 %v347
      %v418 = vunpack.c.l.bf16 %v348
      %v419 = vunpack.c.l.bf16 %v349
      %v420 = vunpack.c.h.bf16 %v349
      %v421 = vunpack.c.l.bf16 %v350
      %v422 = vunpack.c.l.bf16 %v351
      %v423 = vunpack.c.h.bf16 %v351
      %v424 = vunpack.c.l.bf16 %v352
      %v425 = vunpack.c.l.bf16 %v353
      %v426 = vunpack.c.h.bf16 %v353
      %v427 = vunpack.c.l.bf16 %v354
      %v428 = vunpack.c.l.bf16 %v355
      %v429 = vunpack.c.h.bf16 %v355
      %v430 = vunpack.c.l.bf16 %v356
      %v431 = vunpack.c.l.bf16 %v357
      %v432 = vunpack.c.h.bf16 %v357
      %v433 = vunpack.c.l.bf16 %v358
      %v434 = vunpack.c.l.bf16 %v359
      %v435 = vunpack.c.h.bf16 %v359
      %v436 = vunpack.c.l.bf16 %v360
      %v437 = vunpack.c.l.bf16 %v361
      %v438 = vunpack.c.h.bf16 %v361
      %v439 = vunpack.c.l.bf16 %v362
      %v440 = vunpack.c.l.bf16 %v363
      %v441 = vunpack.c.h.bf16 %v363
      %v442 = vunpack.c.l.bf16 %v364
      %v443 = vunpack.c.l.bf16 %v365
      %v444 = vunpack.c.h.bf16 %v365
      %v445 = vunpack.c.l.bf16 %v366
      %v446 = vunpack.c.l.bf16 %v367
      %v447 = vunpack.c.h.bf16 %v367
      %v448 = vunpack.c.l.bf16 %v368
      %v449 = vunpack.c.l.bf16 %v369
      %v450 = vunpack.c.h.bf16 %v369
      %v451 = vunpack.c.l.bf16 %v370
      %v452 = vunpack.c.l.bf16 %v371
      %v453 = vunpack.c.h.bf16 %v371
      %v454 = vunpack.c.l.bf16 %v372
      %v455 = vunpack.c.l.bf16 %v373
      %v456 = vunpack.c.h.bf16 %v373
      %v457 = vunpack.c.l.bf16 %v374
      %v458 = vunpack.c.l.bf16 %v375
      %v459 = vunpack.c.h.bf16 %v375
      %v460 = vunpack.c.l.bf16 %v376
      %v461 = vunpack.c.l.bf16 %v377
      %v462 = vunpack.c.h.bf16 %v377
      %v463 = vunpack.c.l.bf16 %v378
      %v464 = vunpack.c.l.bf16 %v379
      %v465 = vunpack.c.h.bf16 %v379
      %v466 = vunpack.c.l.bf16 %v380
      %v467 = vunpack.c.l.bf16 %v381
      %v468 = vunpack.c.h.bf16 %v381
      %v469 = vunpack.c.l.bf16 %v382
      %v470 = vunpack.c.l.bf16 %v383
      %v471 = vunpack.c.h.bf16 %v383
      %v472 = vunpack.c.l.bf16 %v384
      %v473 = vunpack.c.l.bf16 %v385
      %v474 = vunpack.c.h.bf16 %v385
      %v475 = vunpack.c.l.bf16 %v386
      %v476 = vunpack.c.l.bf16 %v387
      %v477 = vunpack.c.h.bf16 %v387
      %v478 = vunpack.c.l.bf16 %v388
      %v479 = vunpack.c.l.bf16 %v389
      %v480 = vunpack.c.h.bf16 %v389
      %v481 = vunpack.c.l.bf16 %v390
      %v482 = vunpack.c.l.bf16 %v391
      %v483 = vunpack.c.h.bf16 %v391
      %v484 = vunpack.c.l.bf16 %v392
      %v485 = vunpack.c.l.bf16 %v393
      %v486 = vunpack.c.h.bf16 %v393
      %v487 = vunpack.c.l.bf16 %v394
      %v488 = vunpack.c.l.bf16 %v395
      %v489 = vunpack.c.h.bf16 %v395
      %v490 = vunpack.c.l.bf16 %v396
      %v491 = vunpack.c.l.bf16 %v397
      %v492 = vunpack.c.h.bf16 %v397
      %v493 = vunpack.c.l.bf16 %v398
      %v494 = vunpack.c.l.bf16 %v399
      %v495 = vunpack.c.h.bf16 %v399
      %v496 = vunpack.c.l.bf16 %v400
      %v497 = vld [vmem:[%s1] sm:$0xff]
      %v498 = vld [vmem:[%s1 + $0x8] sm:$0xff]
      %v499 = vld [vmem:[%s1 + $0x10] sm:$0xff]
      %v500 = vld [vmem:[%s1 + $0x18] sm:$0xff]
      %v501 = vld [vmem:[%s1 + $0x20] sm:$0xff]
      %v502 = vld [vmem:[%s1 + $0x28] sm:$0xff]
      %v503 = vld [vmem:[%s1 + $0x30] sm:$0xff]
      %v504 = vld [vmem:[%s1 + $0x38] sm:$0xff]
      %v505 = vld [vmem:[%s1 + $0x40] sm:$0xff]
      %v506 = vld [vmem:[%s1 + $0x48] sm:$0xff]
      %v507 = vld [vmem:[%s1 + $0x50] sm:$0xff]
      %v508 = vld [vmem:[%s1 + $0x58] sm:$0xff]
      %v509 = vld [vmem:[%s1 + $0x60] sm:$0xff]
      %v510 = vld [vmem:[%s1 + $0x68] sm:$0xff]
      %v511 = vld [vmem:[%s1 + $0x70] sm:$0xff]
      %v512 = vld [vmem:[%s1 + $0x78] sm:$0xff]
      %v513 = vld [vmem:[%s1 + $0x80] sm:$0xff]
      %v514 = vld [vmem:[%s1 + $0x88] sm:$0xff]
      %v515 = vld [vmem:[%s1 + $0x90] sm:$0xff]
      %v516 = vld [vmem:[%s1 + $0x98] sm:$0xff]
      %v517 = vld [vmem:[%s1 + $0xa0] sm:$0xff]
      %v518 = vld [vmem:[%s1 + $0xa8] sm:$0xff]
      %v519 = vld [vmem:[%s1 + $0xb0] sm:$0xff]
      %v520 = vld [vmem:[%s1 + $0xb8] sm:$0xff]
      %v521 = vld [vmem:[%s1 + $0xc0] sm:$0xff]
      %v522 = vld [vmem:[%s1 + $0xc8] sm:$0xff]
      %v523 = vld [vmem:[%s1 + $0xd0] sm:$0xff]
      %v524 = vld [vmem:[%s1 + $0xd8] sm:$0xff]
      %v525 = vld [vmem:[%s1 + $0xe0] sm:$0xff]
      %v526 = vld [vmem:[%s1 + $0xe8] sm:$0xff]
      %v527 = vld [vmem:[%s1 + $0xf0] sm:$0xff]
      %v528 = vld [vmem:[%s1 + $0xf8] sm:$0xff]
      %530 = vset.pattern.permute.xlu0 0
      %531 = vperm.xlu0 %530, %v497
      %v532 = vpop.permute.xlu0 %531
      %535 = vset.pattern.permute.xlu0 0
      %536 = vperm.xlu0 %535, %v498
      %v537 = vpop.permute.xlu0 %536
      %540 = vset.pattern.permute.xlu0 0
      %541 = vperm.xlu0 %540, %v499
      %v542 = vpop.permute.xlu0 %541
      %545 = vset.pattern.permute.xlu0 0
      %546 = vperm.xlu0 %545, %v500
      %v547 = vpop.permute.xlu0 %546
      %550 = vset.pattern.permute.xlu0 0
      %551 = vperm.xlu0 %550, %v501
      %v552 = vpop.permute.xlu0 %551
      %555 = vset.pattern.permute.xlu0 0
      %556 = vperm.xlu0 %555, %v502
      %v557 = vpop.permute.xlu0 %556
      %560 = vset.pattern.permute.xlu0 0
      %561 = vperm.xlu0 %560, %v503
      %v562 = vpop.permute.xlu0 %561
      %565 = vset.pattern.permute.xlu0 0
      %566 = vperm.xlu0 %565, %v504
      %v567 = vpop.permute.xlu0 %566
      %570 = vset.pattern.permute.xlu0 0
      %571 = vperm.xlu0 %570, %v505
      %v572 = vpop.permute.xlu0 %571
      %575 = vset.pattern.permute.xlu0 0
      %576 = vperm.xlu0 %575, %v506
      %v577 = vpop.permute.xlu0 %576
      %580 = vset.pattern.permute.xlu0 0
      %581 = vperm.xlu0 %580, %v507
      %v582 = vpop.permute.xlu0 %581
      %585 = vset.pattern.permute.xlu0 0
      %586 = vperm.xlu0 %585, %v508
      %v587 = vpop.permute.xlu0 %586
      %590 = vset.pattern.permute.xlu0 0
      %591 = vperm.xlu0 %590, %v509
      %v592 = vpop.permute.xlu0 %591
      %595 = vset.pattern.permute.xlu0 0
      %596 = vperm.xlu0 %595, %v510
      %v597 = vpop.permute.xlu0 %596
      %600 = vset.pattern.permute.xlu0 0
      %601 = vperm.xlu0 %600, %v511
      %v602 = vpop.permute.xlu0 %601
      %605 = vset.pattern.permute.xlu0 0
      %606 = vperm.xlu0 %605, %v512
      %v607 = vpop.permute.xlu0 %606
      %610 = vset.pattern.permute.xlu0 0
      %611 = vperm.xlu0 %610, %v513
      %v612 = vpop.permute.xlu0 %611
      %615 = vset.pattern.permute.xlu0 0
      %616 = vperm.xlu0 %615, %v514
      %v617 = vpop.permute.xlu0 %616
      %620 = vset.pattern.permute.xlu0 0
      %621 = vperm.xlu0 %620, %v515
      %v622 = vpop.permute.xlu0 %621
      %625 = vset.pattern.permute.xlu0 0
      %626 = vperm.xlu0 %625, %v516
      %v627 = vpop.permute.xlu0 %626
      %630 = vset.pattern.permute.xlu0 0
      %631 = vperm.xlu0 %630, %v517
      %v632 = vpop.permute.xlu0 %631
      %635 = vset.pattern.permute.xlu0 0
      %636 = vperm.xlu0 %635, %v518
      %v637 = vpop.permute.xlu0 %636
      %640 = vset.pattern.permute.xlu0 0
      %641 = vperm.xlu0 %640, %v519
      %v642 = vpop.permute.xlu0 %641
      %645 = vset.pattern.permute.xlu0 0
      %646 = vperm.xlu0 %645, %v520
      %v647 = vpop.permute.xlu0 %646
      %650 = vset.pattern.permute.xlu0 0
      %651 = vperm.xlu0 %650, %v521
      %v652 = vpop.permute.xlu0 %651
      %655 = vset.pattern.permute.xlu0 0
      %656 = vperm.xlu0 %655, %v522
      %v657 = vpop.permute.xlu0 %656
      %660 = vset.pattern.permute.xlu0 0
      %661 = vperm.xlu0 %660, %v523
      %v662 = vpop.permute.xlu0 %661
      %665 = vset.pattern.permute.xlu0 0
      %666 = vperm.xlu0 %665, %v524
      %v667 = vpop.permute.xlu0 %666
      %670 = vset.pattern.permute.xlu0 0
      %671 = vperm.xlu0 %670, %v525
      %v672 = vpop.permute.xlu0 %671
      %675 = vset.pattern.permute.xlu0 0
      %676 = vperm.xlu0 %675, %v526
      %v677 = vpop.permute.xlu0 %676
      %680 = vset.pattern.permute.xlu0 0
      %681 = vperm.xlu0 %680, %v527
      %v682 = vpop.permute.xlu0 %681
      %685 = vset.pattern.permute.xlu0 0
      %686 = vperm.xlu0 %685, %v528
      %v687 = vpop.permute.xlu0 %686
      %v689 = vmul.f32 %v401, %v532
      %v690 = vmul.f32 %v402, %v532
      %v691 = vmul.f32 %v403, %v532
      %v692 = vmul.f32 %v404, %v537
      %v693 = vmul.f32 %v405, %v537
      %v694 = vmul.f32 %v406, %v537
      %v695 = vmul.f32 %v407, %v542
      %v696 = vmul.f32 %v408, %v542
      %v697 = vmul.f32 %v409, %v542
      %v698 = vmul.f32 %v410, %v547
      %v699 = vmul.f32 %v411, %v547
      %v700 = vmul.f32 %v412, %v547
      %v701 = vmul.f32 %v413, %v552
      %v702 = vmul.f32 %v414, %v552
      %v703 = vmul.f32 %v415, %v552
      %v704 = vmul.f32 %v416, %v557
      %v705 = vmul.f32 %v417, %v557
      %v706 = vmul.f32 %v418, %v557
      %v707 = vmul.f32 %v419, %v562
      %v708 = vmul.f32 %v420, %v562
      %v709 = vmul.f32 %v421, %v562
      %v710 = vmul.f32 %v422, %v567
      %v711 = vmul.f32 %v423, %v567
      %v712 = vmul.f32 %v424, %v567
      %v713 = vmul.f32 %v425, %v572
      %v714 = vmul.f32 %v426, %v572
      %v715 = vmul.f32 %v427, %v572
      %v716 = vmul.f32 %v428, %v577
      %v717 = vmul.f32 %v429, %v577
      %v718 = vmul.f32 %v430, %v577
      %v719 = vmul.f32 %v431, %v582
      %v720 = vmul.f32 %v432, %v582
      %v721 = vmul.f32 %v433, %v582
      %v722 = vmul.f32 %v434, %v587
      %v723 = vmul.f32 %v435, %v587
      %v724 = vmul.f32 %v436, %v587
      %v725 = vmul.f32 %v437, %v592
      %v726 = vmul.f32 %v438, %v592
      %v727 = vmul.f32 %v439, %v592
      %v728 = vmul.f32 %v440, %v597
      %v729 = vmul.f32 %v441, %v597
      %v730 = vmul.f32 %v442, %v597
      %v731 = vmul.f32 %v443, %v602
      %v732 = vmul.f32 %v444, %v602
      %v733 = vmul.f32 %v445, %v602
      %v734 = vmul.f32 %v446, %v607
      %v735 = vmul.f32 %v447, %v607
      %v736 = vmul.f32 %v448, %v607
      %v737 = vmul.f32 %v449, %v612
      %v738 = vmul.f32 %v450, %v612
      %v739 = vmul.f32 %v451, %v612
      %v740 = vmul.f32 %v452, %v617
      %v741 = vmul.f32 %v453, %v617
      %v742 = vmul.f32 %v454, %v617
      %v743 = vmul.f32 %v455, %v622
      %v744 = vmul.f32 %v456, %v622
      %v745 = vmul.f32 %v457, %v622
      %v746 = vmul.f32 %v458, %v627
      %v747 = vmul.f32 %v459, %v627
      %v748 = vmul.f32 %v460, %v627
      %v749 = vmul.f32 %v461, %v632
      %v750 = vmul.f32 %v462, %v632
      %v751 = vmul.f32 %v463, %v632
      %v752 = vmul.f32 %v464, %v637
      %v753 = vmul.f32 %v465, %v637
      %v754 = vmul.f32 %v466, %v637
      %v755 = vmul.f32 %v467, %v642
      %v756 = vmul.f32 %v468, %v642
      %v757 = vmul.f32 %v469, %v642
      %v758 = vmul.f32 %v470, %v647
      %v759 = vmul.f32 %v471, %v647
      %v760 = vmul.f32 %v472, %v647
      %v761 = vmul.f32 %v473, %v652
      %v762 = vmul.f32 %v474, %v652
      %v763 = vmul.f32 %v475, %v652
      %v764 = vmul.f32 %v476, %v657
      %v765 = vmul.f32 %v477, %v657
      %v766 = vmul.f32 %v478, %v657
      %v767 = vmul.f32 %v479, %v662
      %v768 = vmul.f32 %v480, %v662
      %v769 = vmul.f32 %v481, %v662
      %v770 = vmul.f32 %v482, %v667
      %v771 = vmul.f32 %v483, %v667
      %v772 = vmul.f32 %v484, %v667
      %v773 = vmul.f32 %v485, %v672
      %v774 = vmul.f32 %v486, %v672
      %v775 = vmul.f32 %v487, %v672
      %v776 = vmul.f32 %v488, %v677
      %v777 = vmul.f32 %v489, %v677
      %v778 = vmul.f32 %v490, %v677
      %v779 = vmul.f32 %v491, %v682
      %v780 = vmul.f32 %v492, %v682
      %v781 = vmul.f32 %v493, %v682
      %v782 = vmul.f32 %v494, %v687
      %v783 = vmul.f32 %v495, %v687
      %v784 = vmul.f32 %v496, %v687
      %v785 = vld [vmem:[%s2] sm:$0xff]
      %v786 = vld [vmem:[%s2 + $0x8] sm:$0xff]
      %v787 = vld [vmem:[%s2 + $0x10] sm:$0xff]
      %v788 = vld [vmem:[%s2 + $0x18] sm:$0xff]
      %v789 = vld [vmem:[%s2 + $0x20] sm:$0xff]
      %v790 = vld [vmem:[%s2 + $0x28] sm:$0xff]
      %v791 = vld [vmem:[%s2 + $0x30] sm:$0xff]
      %v792 = vld [vmem:[%s2 + $0x38] sm:$0xff]
      %v793 = vld [vmem:[%s2 + $0x40] sm:$0xff]
      %v794 = vld [vmem:[%s2 + $0x48] sm:$0xff]
      %v795 = vld [vmem:[%s2 + $0x50] sm:$0xff]
      %v796 = vld [vmem:[%s2 + $0x58] sm:$0xff]
      %v797 = vld [vmem:[%s2 + $0x60] sm:$0xff]
      %v798 = vld [vmem:[%s2 + $0x68] sm:$0xff]
      %v799 = vld [vmem:[%s2 + $0x70] sm:$0xff]
      %v800 = vld [vmem:[%s2 + $0x78] sm:$0xff]
      %v801 = vld [vmem:[%s2 + $0x80] sm:$0xff]
      %v802 = vld [vmem:[%s2 + $0x88] sm:$0xff]
      %v803 = vld [vmem:[%s2 + $0x90] sm:$0xff]
      %v804 = vld [vmem:[%s2 + $0x98] sm:$0xff]
      %v805 = vld [vmem:[%s2 + $0xa0] sm:$0xff]
      %v806 = vld [vmem:[%s2 + $0xa8] sm:$0xff]
      %v807 = vld [vmem:[%s2 + $0xb0] sm:$0xff]
      %v808 = vld [vmem:[%s2 + $0xb8] sm:$0xff]
      %v809 = vld [vmem:[%s2 + $0xc0] sm:$0xff]
      %v810 = vld [vmem:[%s2 + $0xc8] sm:$0xff]
      %v811 = vld [vmem:[%s2 + $0xd0] sm:$0xff]
      %v812 = vld [vmem:[%s2 + $0xd8] sm:$0xff]
      %v813 = vld [vmem:[%s2 + $0xe0] sm:$0xff]
      %v814 = vld [vmem:[%s2 + $0xe8] sm:$0xff]
      %v815 = vld [vmem:[%s2 + $0xf0] sm:$0xff]
      %v816 = vld [vmem:[%s2 + $0xf8] sm:$0xff]
      %818 = vset.pattern.permute.xlu0 0
      %819 = vperm.xlu0 %818, %v785
      %v820 = vpop.permute.xlu0 %819
      %823 = vset.pattern.permute.xlu0 0
      %824 = vperm.xlu0 %823, %v786
      %v825 = vpop.permute.xlu0 %824
      %828 = vset.pattern.permute.xlu0 0
      %829 = vperm.xlu0 %828, %v787
      %v830 = vpop.permute.xlu0 %829
      %833 = vset.pattern.permute.xlu0 0
      %834 = vperm.xlu0 %833, %v788
      %v835 = vpop.permute.xlu0 %834
      %838 = vset.pattern.permute.xlu0 0
      %839 = vperm.xlu0 %838, %v789
      %v840 = vpop.permute.xlu0 %839
      %843 = vset.pattern.permute.xlu0 0
      %844 = vperm.xlu0 %843, %v790
      %v845 = vpop.permute.xlu0 %844
      %848 = vset.pattern.permute.xlu0 0
      %849 = vperm.xlu0 %848, %v791
      %v850 = vpop.permute.xlu0 %849
      %853 = vset.pattern.permute.xlu0 0
      %854 = vperm.xlu0 %853, %v792
      %v855 = vpop.permute.xlu0 %854
      %858 = vset.pattern.permute.xlu0 0
      %859 = vperm.xlu0 %858, %v793
      %v860 = vpop.permute.xlu0 %859
      %863 = vset.pattern.permute.xlu0 0
      %864 = vperm.xlu0 %863, %v794
      %v865 = vpop.permute.xlu0 %864
      %868 = vset.pattern.permute.xlu0 0
      %869 = vperm.xlu0 %868, %v795
      %v870 = vpop.permute.xlu0 %869
      %873 = vset.pattern.permute.xlu0 0
      %874 = vperm.xlu0 %873, %v796
      %v875 = vpop.permute.xlu0 %874
      %878 = vset.pattern.permute.xlu0 0
      %879 = vperm.xlu0 %878, %v797
      %v880 = vpop.permute.xlu0 %879
      %883 = vset.pattern.permute.xlu0 0
      %884 = vperm.xlu0 %883, %v798
      %v885 = vpop.permute.xlu0 %884
      %888 = vset.pattern.permute.xlu0 0
      %889 = vperm.xlu0 %888, %v799
      %v890 = vpop.permute.xlu0 %889
      %893 = vset.pattern.permute.xlu0 0
      %894 = vperm.xlu0 %893, %v800
      %v895 = vpop.permute.xlu0 %894
      %898 = vset.pattern.permute.xlu0 0
      %899 = vperm.xlu0 %898, %v801
      %v900 = vpop.permute.xlu0 %899
      %903 = vset.pattern.permute.xlu0 0
      %904 = vperm.xlu0 %903, %v802
      %v905 = vpop.permute.xlu0 %904
      %908 = vset.pattern.permute.xlu0 0
      %909 = vperm.xlu0 %908, %v803
      %v910 = vpop.permute.xlu0 %909
      %913 = vset.pattern.permute.xlu0 0
      %914 = vperm.xlu0 %913, %v804
      %v915 = vpop.permute.xlu0 %914
      %918 = vset.pattern.permute.xlu0 0
      %919 = vperm.xlu0 %918, %v805
      %v920 = vpop.permute.xlu0 %919
      %923 = vset.pattern.permute.xlu0 0
      %924 = vperm.xlu0 %923, %v806
      %v925 = vpop.permute.xlu0 %924
      %928 = vset.pattern.permute.xlu0 0
      %929 = vperm.xlu0 %928, %v807
      %v930 = vpop.permute.xlu0 %929
      %933 = vset.pattern.permute.xlu0 0
      %934 = vperm.xlu0 %933, %v808
      %v935 = vpop.permute.xlu0 %934
      %938 = vset.pattern.permute.xlu0 0
      %939 = vperm.xlu0 %938, %v809
      %v940 = vpop.permute.xlu0 %939
      %943 = vset.pattern.permute.xlu0 0
      %944 = vperm.xlu0 %943, %v810
      %v945 = vpop.permute.xlu0 %944
      %948 = vset.pattern.permute.xlu0 0
      %949 = vperm.xlu0 %948, %v811
      %v950 = vpop.permute.xlu0 %949
      %953 = vset.pattern.permute.xlu0 0
      %954 = vperm.xlu0 %953, %v812
      %v955 = vpop.permute.xlu0 %954
      %958 = vset.pattern.permute.xlu0 0
      %959 = vperm.xlu0 %958, %v813
      %v960 = vpop.permute.xlu0 %959
      %963 = vset.pattern.permute.xlu0 0
      %964 = vperm.xlu0 %963, %v814
      %v965 = vpop.permute.xlu0 %964
      %968 = vset.pattern.permute.xlu0 0
      %969 = vperm.xlu0 %968, %v815
      %v970 = vpop.permute.xlu0 %969
      %973 = vset.pattern.permute.xlu0 0
      %974 = vperm.xlu0 %973, %v816
      %v975 = vpop.permute.xlu0 %974
      %v977 = vadd.f32 %v689, %v820
      %v978 = vadd.f32 %v690, %v820
      %v979 = vadd.f32 %v691, %v820
      %v980 = vadd.f32 %v692, %v825
      %v981 = vadd.f32 %v693, %v825
      %v982 = vadd.f32 %v694, %v825
      %v983 = vadd.f32 %v695, %v830
      %v984 = vadd.f32 %v696, %v830
      %v985 = vadd.f32 %v697, %v830
      %v986 = vadd.f32 %v698, %v835
      %v987 = vadd.f32 %v699, %v835
      %v988 = vadd.f32 %v700, %v835
      %v989 = vadd.f32 %v701, %v840
      %v990 = vadd.f32 %v702, %v840
      %v991 = vadd.f32 %v703, %v840
      %v992 = vadd.f32 %v704, %v845
      %v993 = vadd.f32 %v705, %v845
      %v994 = vadd.f32 %v706, %v845
      %v995 = vadd.f32 %v707, %v850
      %v996 = vadd.f32 %v708, %v850
      %v997 = vadd.f32 %v709, %v850
      %v998 = vadd.f32 %v710, %v855
      %v999 = vadd.f32 %v711, %v855
      %v1000 = vadd.f32 %v712, %v855
      %v1001 = vadd.f32 %v713, %v860
      %v1002 = vadd.f32 %v714, %v860
      %v1003 = vadd.f32 %v715, %v860
      %v1004 = vadd.f32 %v716, %v865
      %v1005 = vadd.f32 %v717, %v865
      %v1006 = vadd.f32 %v718, %v865
      %v1007 = vadd.f32 %v719, %v870
      %v1008 = vadd.f32 %v720, %v870
      %v1009 = vadd.f32 %v721, %v870
      %v1010 = vadd.f32 %v722, %v875
      %v1011 = vadd.f32 %v723, %v875
      %v1012 = vadd.f32 %v724, %v875
      %v1013 = vadd.f32 %v725, %v880
      %v1014 = vadd.f32 %v726, %v880
      %v1015 = vadd.f32 %v727, %v880
      %v1016 = vadd.f32 %v728, %v885
      %v1017 = vadd.f32 %v729, %v885
      %v1018 = vadd.f32 %v730, %v885
      %v1019 = vadd.f32 %v731, %v890
      %v1020 = vadd.f32 %v732, %v890
      %v1021 = vadd.f32 %v733, %v890
      %v1022 = vadd.f32 %v734, %v895
      %v1023 = vadd.f32 %v735, %v895
      %v1024 = vadd.f32 %v736, %v895
      %v1025 = vadd.f32 %v737, %v900
      %v1026 = vadd.f32 %v738, %v900
      %v1027 = vadd.f32 %v739, %v900
      %v1028 = vadd.f32 %v740, %v905
      %v1029 = vadd.f32 %v741, %v905
      %v1030 = vadd.f32 %v742, %v905
      %v1031 = vadd.f32 %v743, %v910
      %v1032 = vadd.f32 %v744, %v910
      %v1033 = vadd.f32 %v745, %v910
      %v1034 = vadd.f32 %v746, %v915
      %v1035 = vadd.f32 %v747, %v915
      %v1036 = vadd.f32 %v748, %v915
      %v1037 = vadd.f32 %v749, %v920
      %v1038 = vadd.f32 %v750, %v920
      %v1039 = vadd.f32 %v751, %v920
      %v1040 = vadd.f32 %v752, %v925
      %v1041 = vadd.f32 %v753, %v925
      %v1042 = vadd.f32 %v754, %v925
      %v1043 = vadd.f32 %v755, %v930
      %v1044 = vadd.f32 %v756, %v930
      %v1045 = vadd.f32 %v757, %v930
      %v1046 = vadd.f32 %v758, %v935
      %v1047 = vadd.f32 %v759, %v935
      %v1048 = vadd.f32 %v760, %v935
      %v1049 = vadd.f32 %v761, %v940
      %v1050 = vadd.f32 %v762, %v940
      %v1051 = vadd.f32 %v763, %v940
      %v1052 = vadd.f32 %v764, %v945
      %v1053 = vadd.f32 %v765, %v945
      %v1054 = vadd.f32 %v766, %v945
      %v1055 = vadd.f32 %v767, %v950
      %v1056 = vadd.f32 %v768, %v950
      %v1057 = vadd.f32 %v769, %v950
      %v1058 = vadd.f32 %v770, %v955
      %v1059 = vadd.f32 %v771, %v955
      %v1060 = vadd.f32 %v772, %v955
      %v1061 = vadd.f32 %v773, %v960
      %v1062 = vadd.f32 %v774, %v960
      %v1063 = vadd.f32 %v775, %v960
      %v1064 = vadd.f32 %v776, %v965
      %v1065 = vadd.f32 %v777, %v965
      %v1066 = vadd.f32 %v778, %v965
      %v1067 = vadd.f32 %v779, %v970
      %v1068 = vadd.f32 %v780, %v970
      %v1069 = vadd.f32 %v781, %v970
      %v1070 = vadd.f32 %v782, %v975
      %v1071 = vadd.f32 %v783, %v975
      %v1072 = vadd.f32 %v784, %v975
      %v1073 = vmax.f32 %v977, 0.0
      %v1074 = vmax.f32 %v978, 0.0
      %v1075 = vmax.f32 %v979, 0.0
      %v1076 = vmax.f32 %v980, 0.0
      %v1077 = vmax.f32 %v981, 0.0
      %v1078 = vmax.f32 %v982, 0.0
      %v1079 = vmax.f32 %v983, 0.0
      %v1080 = vmax.f32 %v984, 0.0
      %v1081 = vmax.f32 %v985, 0.0
      %v1082 = vmax.f32 %v986, 0.0
      %v1083 = vmax.f32 %v987, 0.0
      %v1084 = vmax.f32 %v988, 0.0
      %v1085 = vmax.f32 %v989, 0.0
      %v1086 = vmax.f32 %v990, 0.0
      %v1087 = vmax.f32 %v991, 0.0
      %v1088 = vmax.f32 %v992, 0.0
      %v1089 = vmax.f32 %v993, 0.0
      %v1090 = vmax.f32 %v994, 0.0
      %v1091 = vmax.f32 %v995, 0.0
      %v1092 = vmax.f32 %v996, 0.0
      %v1093 = vmax.f32 %v997, 0.0
      %v1094 = vmax.f32 %v998, 0.0
      %v1095 = vmax.f32 %v999, 0.0
      %v1096 = vmax.f32 %v1000, 0.0
      %v1097 = vmax.f32 %v1001, 0.0
      %v1098 = vmax.f32 %v1002, 0.0
      %v1099 = vmax.f32 %v1003, 0.0
      %v1100 = vmax.f32 %v1004, 0.0
      %v1101 = vmax.f32 %v1005, 0.0
      %v1102 = vmax.f32 %v1006, 0.0
      %v1103 = vmax.f32 %v1007, 0.0
      %v1104 = vmax.f32 %v1008, 0.0
      %v1105 = vmax.f32 %v1009, 0.0
      %v1106 = vmax.f32 %v1010, 0.0
      %v1107 = vmax.f32 %v1011, 0.0
      %v1108 = vmax.f32 %v1012, 0.0
      %v1109 = vmax.f32 %v1013, 0.0
      %v1110 = vmax.f32 %v1014, 0.0
      %v1111 = vmax.f32 %v1015, 0.0
      %v1112 = vmax.f32 %v1016, 0.0
      %v1113 = vmax.f32 %v1017, 0.0
      %v1114 = vmax.f32 %v1018, 0.0
      %v1115 = vmax.f32 %v1019, 0.0
      %v1116 = vmax.f32 %v1020, 0.0
      %v1117 = vmax.f32 %v1021, 0.0
      %v1118 = vmax.f32 %v1022, 0.0
      %v1119 = vmax.f32 %v1023, 0.0
      %v1120 = vmax.f32 %v1024, 0.0
      %v1121 = vmax.f32 %v1025, 0.0
      %v1122 = vmax.f32 %v1026, 0.0
      %v1123 = vmax.f32 %v1027, 0.0
      %v1124 = vmax.f32 %v1028, 0.0
      %v1125 = vmax.f32 %v1029, 0.0
      %v1126 = vmax.f32 %v1030, 0.0
      %v1127 = vmax.f32 %v1031, 0.0
      %v1128 = vmax.f32 %v1032, 0.0
      %v1129 = vmax.f32 %v1033, 0.0
      %v1130 = vmax.f32 %v1034, 0.0
      %v1131 = vmax.f32 %v1035, 0.0
      %v1132 = vmax.f32 %v1036, 0.0
      %v1133 = vmax.f32 %v1037, 0.0
      %v1134 = vmax.f32 %v1038, 0.0
      %v1135 = vmax.f32 %v1039, 0.0
      %v1136 = vmax.f32 %v1040, 0.0
      %v1137 = vmax.f32 %v1041, 0.0
      %v1138 = vmax.f32 %v1042, 0.0
      %v1139 = vmax.f32 %v1043, 0.0
      %v1140 = vmax.f32 %v1044, 0.0
      %v1141 = vmax.f32 %v1045, 0.0
      %v1142 = vmax.f32 %v1046, 0.0
      %v1143 = vmax.f32 %v1047, 0.0
      %v1144 = vmax.f32 %v1048, 0.0
      %v1145 = vmax.f32 %v1049, 0.0
      %v1146 = vmax.f32 %v1050, 0.0
      %v1147 = vmax.f32 %v1051, 0.0
      %v1148 = vmax.f32 %v1052, 0.0
      %v1149 = vmax.f32 %v1053, 0.0
      %v1150 = vmax.f32 %v1054, 0.0
      %v1151 = vmax.f32 %v1055, 0.0
      %v1152 = vmax.f32 %v1056, 0.0
      %v1153 = vmax.f32 %v1057, 0.0
      %v1154 = vmax.f32 %v1058, 0.0
      %v1155 = vmax.f32 %v1059, 0.0
      %v1156 = vmax.f32 %v1060, 0.0
      %v1157 = vmax.f32 %v1061, 0.0
      %v1158 = vmax.f32 %v1062, 0.0
      %v1159 = vmax.f32 %v1063, 0.0
      %v1160 = vmax.f32 %v1064, 0.0
      %v1161 = vmax.f32 %v1065, 0.0
      %v1162 = vmax.f32 %v1066, 0.0
      %v1163 = vmax.f32 %v1067, 0.0
      %v1164 = vmax.f32 %v1068, 0.0
      %v1165 = vmax.f32 %v1069, 0.0
      %v1166 = vmax.f32 %v1070, 0.0
      %v1167 = vmax.f32 %v1071, 0.0
      %v1168 = vmax.f32 %v1072, 0.0
      %s1169 = smul.u32 %s23, 384
      %v1170 = vlaneseq
      %v1171 = vand.u32 %v1170, 127
      %v1172 = vadd.s32 %v1171, 128
      %v1173 = vadd.s32 %v1171, 256
      %v1174 = vstv %s1169
      %v1175 = vadd.s32 %v1174, %v1171
      %v1176 = vadd.s32 %v1174, %v1172
      %v1177 = vadd.s32 %v1174, %v1173
      %vm1178 = vcmp.lt.s32.totalorder %v1175, 300
      %vm1179 = vcmp.lt.s32.totalorder %v1176, 300
      %vm1180 = vcmp.lt.s32.totalorder %v1177, 300
      %v1181 = vsel %vm1178, 1, 0
      %v1182 = vsel %vm1179, 1, 0
      %v1183 = vsel %vm1180, 1, 0
      %vm1184 = vcmp.eq.s32.totalorder %v1181, 1
      %vm1185 = vcmp.eq.s32.totalorder %v1182, 1
      %vm1186 = vcmp.eq.s32.totalorder %v1183, 1
      %v1187 = vsel %vm1184, %v1073, 0.0
      %v1188 = vsel %vm1185, %v1074, 0.0
      %v1189 = vsel %vm1186, %v1075, 0.0
      %v1190 = vsel %vm1184, %v1076, 0.0
      %v1191 = vsel %vm1185, %v1077, 0.0
      %v1192 = vsel %vm1186, %v1078, 0.0
      %v1193 = vsel %vm1184, %v1079, 0.0
      %v1194 = vsel %vm1185, %v1080, 0.0
      %v1195 = vsel %vm1186, %v1081, 0.0
      %v1196 = vsel %vm1184, %v1082, 0.0
      %v1197 = vsel %vm1185, %v1083, 0.0
      %v1198 = vsel %vm1186, %v1084, 0.0
      %v1199 = vsel %vm1184, %v1085, 0.0
      %v1200 = vsel %vm1185, %v1086, 0.0
      %v1201 = vsel %vm1186, %v1087, 0.0
      %v1202 = vsel %vm1184, %v1088, 0.0
      %v1203 = vsel %vm1185, %v1089, 0.0
      %v1204 = vsel %vm1186, %v1090, 0.0
      %v1205 = vsel %vm1184, %v1091, 0.0
      %v1206 = vsel %vm1185, %v1092, 0.0
      %v1207 = vsel %vm1186, %v1093, 0.0
      %v1208 = vsel %vm1184, %v1094, 0.0
      %v1209 = vsel %vm1185, %v1095, 0.0
      %v1210 = vsel %vm1186, %v1096, 0.0
      %v1211 = vsel %vm1184, %v1097, 0.0
      %v1212 = vsel %vm1185, %v1098, 0.0
      %v1213 = vsel %vm1186, %v1099, 0.0
      %v1214 = vsel %vm1184, %v1100, 0.0
      %v1215 = vsel %vm1185, %v1101, 0.0
      %v1216 = vsel %vm1186, %v1102, 0.0
      %v1217 = vsel %vm1184, %v1103, 0.0
      %v1218 = vsel %vm1185, %v1104, 0.0
      %v1219 = vsel %vm1186, %v1105, 0.0
      %v1220 = vsel %vm1184, %v1106, 0.0
      %v1221 = vsel %vm1185, %v1107, 0.0
      %v1222 = vsel %vm1186, %v1108, 0.0
      %v1223 = vsel %vm1184, %v1109, 0.0
      %v1224 = vsel %vm1185, %v1110, 0.0
      %v1225 = vsel %vm1186, %v1111, 0.0
      %v1226 = vsel %vm1184, %v1112, 0.0
      %v1227 = vsel %vm1185, %v1113, 0.0
      %v1228 = vsel %vm1186, %v1114, 0.0
      %v1229 = vsel %vm1184, %v1115, 0.0
      %v1230 = vsel %vm1185, %v1116, 0.0
      %v1231 = vsel %vm1186, %v1117, 0.0
      %v1232 = vsel %vm1184, %v1118, 0.0
      %v1233 = vsel %vm1185, %v1119, 0.0
      %v1234 = vsel %vm1186, %v1120, 0.0
      %v1235 = vsel %vm1184, %v1121, 0.0
      %v1236 = vsel %vm1185, %v1122, 0.0
      %v1237 = vsel %vm1186, %v1123, 0.0
      %v1238 = vsel %vm1184, %v1124, 0.0
      %v1239 = vsel %vm1185, %v1125, 0.0
      %v1240 = vsel %vm1186, %v1126, 0.0
      %v1241 = vsel %vm1184, %v1127, 0.0
      %v1242 = vsel %vm1185, %v1128, 0.0
      %v1243 = vsel %vm1186, %v1129, 0.0
      %v1244 = vsel %vm1184, %v1130, 0.0
      %v1245 = vsel %vm1185, %v1131, 0.0
      %v1246 = vsel %vm1186, %v1132, 0.0
      %v1247 = vsel %vm1184, %v1133, 0.0
      %v1248 = vsel %vm1185, %v1134, 0.0
      %v1249 = vsel %vm1186, %v1135, 0.0
      %v1250 = vsel %vm1184, %v1136, 0.0
      %v1251 = vsel %vm1185, %v1137, 0.0
      %v1252 = vsel %vm1186, %v1138, 0.0
      %v1253 = vsel %vm1184, %v1139, 0.0
      %v1254 = vsel %vm1185, %v1140, 0.0
      %v1255 = vsel %vm1186, %v1141, 0.0
      %v1256 = vsel %vm1184, %v1142, 0.0
      %v1257 = vsel %vm1185, %v1143, 0.0
      %v1258 = vsel %vm1186, %v1144, 0.0
      %v1259 = vsel %vm1184, %v1145, 0.0
      %v1260 = vsel %vm1185, %v1146, 0.0
      %v1261 = vsel %vm1186, %v1147, 0.0
      %v1262 = vsel %vm1184, %v1148, 0.0
      %v1263 = vsel %vm1185, %v1149, 0.0
      %v1264 = vsel %vm1186, %v1150, 0.0
      %v1265 = vsel %vm1184, %v1151, 0.0
      %v1266 = vsel %vm1185, %v1152, 0.0
      %v1267 = vsel %vm1186, %v1153, 0.0
      %v1268 = vsel %vm1184, %v1154, 0.0
      %v1269 = vsel %vm1185, %v1155, 0.0
      %v1270 = vsel %vm1186, %v1156, 0.0
      %v1271 = vsel %vm1184, %v1157, 0.0
      %v1272 = vsel %vm1185, %v1158, 0.0
      %v1273 = vsel %vm1186, %v1159, 0.0
      %v1274 = vsel %vm1184, %v1160, 0.0
      %v1275 = vsel %vm1185, %v1161, 0.0
      %v1276 = vsel %vm1186, %v1162, 0.0
      %v1277 = vsel %vm1184, %v1163, 0.0
      %v1278 = vsel %vm1185, %v1164, 0.0
      %v1279 = vsel %vm1186, %v1165, 0.0
      %v1280 = vsel %vm1184, %v1166, 0.0
      %v1281 = vsel %vm1185, %v1167, 0.0
      %v1282 = vsel %vm1186, %v1168, 0.0
      %v1283 = vld [vmem:[%s3] sm:$0xff]
      %v1284 = vld [vmem:[%s3 + $0x8] sm:$0xff]
      %v1285 = vld [vmem:[%s3 + $0x10] sm:$0xff]
      %v1286 = vld [vmem:[%s3 + $0x18] sm:$0xff]
      %v1287 = vld [vmem:[%s3 + $0x20] sm:$0xff]
      %v1288 = vld [vmem:[%s3 + $0x28] sm:$0xff]
      %v1289 = vld [vmem:[%s3 + $0x30] sm:$0xff]
      %v1290 = vld [vmem:[%s3 + $0x38] sm:$0xff]
      %v1291 = vld [vmem:[%s3 + $0x40] sm:$0xff]
      %v1292 = vld [vmem:[%s3 + $0x48] sm:$0xff]
      %v1293 = vld [vmem:[%s3 + $0x50] sm:$0xff]
      %v1294 = vld [vmem:[%s3 + $0x58] sm:$0xff]
      %v1295 = vld [vmem:[%s3 + $0x60] sm:$0xff]
      %v1296 = vld [vmem:[%s3 + $0x68] sm:$0xff]
      %v1297 = vld [vmem:[%s3 + $0x70] sm:$0xff]
      %v1298 = vld [vmem:[%s3 + $0x78] sm:$0xff]
      %v1299 = vpack.c.bf16 %v1190, %v1187
      %v1300 = vpack.c.bf16 %v1191, %v1188
      %v1301 = vpack.c.bf16 %v1192, %v1189
      %v1302 = vpack.c.bf16 %v1196, %v1193
      %v1303 = vpack.c.bf16 %v1197, %v1194
      %v1304 = vpack.c.bf16 %v1198, %v1195
      %v1305 = vpack.c.bf16 %v1202, %v1199
      %v1306 = vpack.c.bf16 %v1203, %v1200
      %v1307 = vpack.c.bf16 %v1204, %v1201
      %v1308 = vpack.c.bf16 %v1208, %v1205
      %v1309 = vpack.c.bf16 %v1209, %v1206
      %v1310 = vpack.c.bf16 %v1210, %v1207
      %v1311 = vpack.c.bf16 %v1214, %v1211
      %v1312 = vpack.c.bf16 %v1215, %v1212
      %v1313 = vpack.c.bf16 %v1216, %v1213
      %v1314 = vpack.c.bf16 %v1220, %v1217
      %v1315 = vpack.c.bf16 %v1221, %v1218
      %v1316 = vpack.c.bf16 %v1222, %v1219
      %v1317 = vpack.c.bf16 %v1226, %v1223
      %v1318 = vpack.c.bf16 %v1227, %v1224
      %v1319 = vpack.c.bf16 %v1228, %v1225
      %v1320 = vpack.c.bf16 %v1232, %v1229
      %v1321 = vpack.c.bf16 %v1233, %v1230
      %v1322 = vpack.c.bf16 %v1234, %v1231
      %v1323 = vpack.c.bf16 %v1238, %v1235
      %v1324 = vpack.c.bf16 %v1239, %v1236
      %v1325 = vpack.c.bf16 %v1240, %v1237
      %v1326 = vpack.c.bf16 %v1244, %v1241
      %v1327 = vpack.c.bf16 %v1245, %v1242
      %v1328 = vpack.c.bf16 %v1246, %v1243
      %v1329 = vpack.c.bf16 %v1250, %v1247
      %v1330 = vpack.c.bf16 %v1251, %v1248
      %v1331 = vpack.c.bf16 %v1252, %v1249
      %v1332 = vpack.c.bf16 %v1256, %v1253
      %v1333 = vpack.c.bf16 %v1257, %v1254
      %v1334 = vpack.c.bf16 %v1258, %v1255
      %v1335 = vpack.c.bf16 %v1262, %v1259
      %v1336 = vpack.c.bf16 %v1263, %v1260
      %v1337 = vpack.c.bf16 %v1264, %v1261
      %v1338 = vpack.c.bf16 %v1268, %v1265
      %v1339 = vpack.c.bf16 %v1269, %v1266
      %v1340 = vpack.c.bf16 %v1270, %v1267
      %v1341 = vpack.c.bf16 %v1274, %v1271
      %v1342 = vpack.c.bf16 %v1275, %v1272
      %v1343 = vpack.c.bf16 %v1276, %v1273
      %v1344 = vpack.c.bf16 %v1280, %v1277
      %v1345 = vpack.c.bf16 %v1281, %v1278
      %v1346 = vpack.c.bf16 %v1282, %v1279
      %v1363 = vunpack.c.l.b16 %v1283
      %v1364 = vunpack.c.h.b16 %v1283
      %v1365 = vunpack.c.l.b16 %v1284
      %v1366 = vunpack.c.h.b16 %v1284
      %v1367 = vunpack.c.l.b16 %v1285
      %v1368 = vunpack.c.h.b16 %v1285
      %v1369 = vunpack.c.l.b16 %v1286
      %v1370 = vunpack.c.h.b16 %v1286
      %v1371 = vunpack.c.l.b16 %v1287
      %v1372 = vunpack.c.h.b16 %v1287
      %v1373 = vunpack.c.l.b16 %v1288
      %v1374 = vunpack.c.h.b16 %v1288
      %v1375 = vunpack.c.l.b16 %v1289
      %v1376 = vunpack.c.h.b16 %v1289
      %v1377 = vunpack.c.l.b16 %v1290
      %v1378 = vunpack.c.h.b16 %v1290
      %v1379 = vunpack.c.l.b16 %v1291
      %v1380 = vunpack.c.h.b16 %v1291
      %v1381 = vunpack.c.l.b16 %v1292
      %v1382 = vunpack.c.h.b16 %v1292
      %v1383 = vunpack.c.l.b16 %v1293
      %v1384 = vunpack.c.h.b16 %v1293
      %v1385 = vunpack.c.l.b16 %v1294
      %v1386 = vunpack.c.h.b16 %v1294
      %v1387 = vunpack.c.l.b16 %v1295
      %v1388 = vunpack.c.h.b16 %v1295
      %v1389 = vunpack.c.l.b16 %v1296
      %v1390 = vunpack.c.h.b16 %v1296
      %v1391 = vunpack.c.l.b16 %v1297
      %v1392 = vunpack.c.h.b16 %v1297
      %v1393 = vunpack.c.l.b16 %v1298
      %v1394 = vunpack.c.h.b16 %v1298
      %v1395 = vpack.c.b16 %v1365, %v1363
      %v1396 = vpack.c.b16 %v1366, %v1364
      %v1397 = vpack.c.b16 %v1369, %v1367
      %v1398 = vpack.c.b16 %v1370, %v1368
      %v1399 = vpack.c.b16 %v1373, %v1371
      %v1400 = vpack.c.b16 %v1374, %v1372
      %v1401 = vpack.c.b16 %v1377, %v1375
      %v1402 = vpack.c.b16 %v1378, %v1376
      %v1403 = vpack.c.b16 %v1381, %v1379
      %v1404 = vpack.c.b16 %v1382, %v1380
      %v1405 = vpack.c.b16 %v1385, %v1383
      %v1406 = vpack.c.b16 %v1386, %v1384
      %v1407 = vpack.c.b16 %v1389, %v1387
      %v1408 = vpack.c.b16 %v1390, %v1388
      %v1409 = vpack.c.b16 %v1393, %v1391
      %v1410 = vpack.c.b16 %v1394, %v1392
      %1427 = vmatprep.subr.bf16.mxu0 %v1300
      %1428 = vmatpush1.bf16.msra.mxu0 %v1299
      %1429 = vmatprep.subr.bf16.mxu0 %v1303
      %1430 = vmatpush1.bf16.msra.mxu0 %v1302
      %1431 = vmatprep.subr.bf16.mxu0 %v1306
      %1432 = vmatpush1.bf16.msra.mxu0 %v1305
      %1433 = vmatprep.subr.bf16.mxu0 %v1309
      %1434 = vmatpush1.bf16.msra.mxu0 %v1308
      %1435 = vmatprep.subr.bf16.mxu0 %v1312
      %1436 = vmatpush1.bf16.msra.mxu0 %v1311
      %1437 = vmatprep.subr.bf16.mxu0 %v1315
      %1438 = vmatpush1.bf16.msra.mxu0 %v1314
      %1439 = vmatprep.subr.bf16.mxu0 %v1318
      %1440 = vmatpush1.bf16.msra.mxu0 %v1317
      %1441 = vmatprep.subr.bf16.mxu0 %v1321
      %1442 = vmatpush1.bf16.msra.mxu0 %v1320
      %1443 = vmatprep.subr.bf16.mxu0 %v1324
      %1444 = vmatpush1.bf16.msra.mxu0 %v1323
      %1445 = vmatprep.subr.bf16.mxu0 %v1327
      %1446 = vmatpush1.bf16.msra.mxu0 %v1326
      %1447 = vmatprep.subr.bf16.mxu0 %v1330
      %1448 = vmatpush1.bf16.msra.mxu0 %v1329
      %1449 = vmatprep.subr.bf16.mxu0 %v1333
      %1450 = vmatpush1.bf16.msra.mxu0 %v1332
      %1451 = vmatprep.subr.bf16.mxu0 %v1336
      %1452 = vmatpush1.bf16.msra.mxu0 %v1335
      %1453 = vmatprep.subr.bf16.mxu0 %v1339
      %1454 = vmatpush1.bf16.msra.mxu0 %v1338
      %1455 = vmatprep.subr.bf16.mxu0 %v1342
      %1456 = vmatpush1.bf16.msra.mxu0 %v1341
      %1457 = vmatprep.subr.bf16.mxu0 %v1345
      %1458 = vmatpush1.bf16.msra.mxu0 %v1344
      %1459 = vmatprep.mubr.bf16.mxu0 %v1396
      %1460 = vmatmul.mubr.bf16.gmra.mrb[0].mxu0 %v1395
      %v1461 = vpop.f32.mrb[0].mxu0
      %v1462 = vadd.f32 0.0, %v1461
      %v1463 = vpop.f32.mrb[0].mxu0
      %v1464 = vadd.f32 0.0, %v1463
      %v1465 = vpop.f32.mrb[0].mxu0
      %v1466 = vadd.f32 0.0, %v1465
      %v1467 = vpop.f32.mrb[0].mxu0
      %v1468 = vadd.f32 0.0, %v1467
      %1469 = vmatprep.mubr.bf16.mxu0 %v1398
      %1470 = vmatmul.mubr.bf16.gmra.mrb[0].mxu0 %v1397
      %v1471 = vpop.f32.mrb[0].mxu0
      %v1472 = vadd.f32 0.0, %v1471
      %v1473 = vpop.f32.mrb[0].mxu0
      %v1474 = vadd.f32 0.0, %v1473
      %v1475 = vpop.f32.mrb[0].mxu0
      %v1476 = vadd.f32 0.0, %v1475
      %v1477 = vpop.f32.mrb[0].mxu0
      %v1478 = vadd.f32 0.0, %v1477
      %1479 = vmatprep.mubr.bf16.mxu0 %v1400
      %1480 = vmatmul.mubr.bf16.gmra.mrb[0].mxu0 %v1399
      %v1481 = vpop.f32.mrb[0].mxu0
      %v1482 = vadd.f32 0.0, %v1481
      %v1483 = vpop.f32.mrb[0].mxu0
      %v1484 = vadd.f32 0.0, %v1483
      %v1485 = vpop.f32.mrb[0].mxu0
      %v1486 = vadd.f32 0.0, %v1485
      %v1487 = vpop.f32.mrb[0].mxu0
      %v1488 = vadd.f32 0.0, %v1487
      %1489 = vmatprep.mubr.bf16.mxu0 %v1402
      %1490 = vmatmul.mubr.bf16.gmra.mrb[0].mxu0 %v1401
      %v1491 = vpop.f32.mrb[0].mxu0
      %v1492 = vadd.f32 0.0, %v1491
      %v1493 = vpop.f32.mrb[0].mxu0
      %v1494 = vadd.f32 0.0, %v1493
      %v1495 = vpop.f32.mrb[0].mxu0
      %v1496 = vadd.f32 0.0, %v1495
      %v1497 = vpop.f32.mrb[0].mxu0
      %v1498 = vadd.f32 0.0, %v1497
      %1499 = vmatprep.mubr.bf16.mxu0 %v1404
      %1500 = vmatmul.mubr.bf16.gmra.mrb[0].mxu0 %v1403
      %v1501 = vpop.f32.mrb[0].mxu0
      %v1502 = vadd.f32 0.0, %v1501
      %v1503 = vpop.f32.mrb[0].mxu0
      %v1504 = vadd.f32 0.0, %v1503
      %v1505 = vpop.f32.mrb[0].mxu0
      %v1506 = vadd.f32 0.0, %v1505
      %v1507 = vpop.f32.mrb[0].mxu0
      %v1508 = vadd.f32 0.0, %v1507
      %1509 = vmatprep.mubr.bf16.mxu0 %v1406
      %1510 = vmatmul.mubr.bf16.gmra.mrb[0].mxu0 %v1405
      %v1511 = vpop.f32.mrb[0].mxu0
      %v1512 = vadd.f32 0.0, %v1511
      %v1513 = vpop.f32.mrb[0].mxu0
      %v1514 = vadd.f32 0.0, %v1513
      %v1515 = vpop.f32.mrb[0].mxu0
      %v1516 = vadd.f32 0.0, %v1515
      %v1517 = vpop.f32.mrb[0].mxu0
      %v1518 = vadd.f32 0.0, %v1517
      %1519 = vmatprep.mubr.bf16.mxu0 %v1408
      %1520 = vmatmul.mubr.bf16.gmra.mrb[0].mxu0 %v1407
      %v1521 = vpop.f32.mrb[0].mxu0
      %v1522 = vadd.f32 0.0, %v1521
      %v1523 = vpop.f32.mrb[0].mxu0
      %v1524 = vadd.f32 0.0, %v1523
      %v1525 = vpop.f32.mrb[0].mxu0
      %v1526 = vadd.f32 0.0, %v1525
      %v1527 = vpop.f32.mrb[0].mxu0
      %v1528 = vadd.f32 0.0, %v1527
      %1529 = vmatprep.mubr.bf16.mxu0 %v1410
      %1530 = vmatmul.mubr.bf16.gmra.mrb[0].mxu0 %v1409
      %v1531 = vpop.f32.mrb[0].mxu0
      %v1532 = vadd.f32 0.0, %v1531
      %v1533 = vpop.f32.mrb[0].mxu0
      %v1534 = vadd.f32 0.0, %v1533
      %v1535 = vpop.f32.mrb[0].mxu0
      %v1536 = vadd.f32 0.0, %v1535
      %v1537 = vpop.f32.mrb[0].mxu0
      %v1538 = vadd.f32 0.0, %v1537
      %1539 = vdwg.mxu0
      %1540 = vmatprep.subr.bf16.mxu0 0
      %1541 = vmatpush1.bf16.msra.mxu0 %v1301
      %1542 = vmatprep.subr.bf16.mxu0 0
      %1543 = vmatpush1.bf16.msra.mxu0 %v1304
      %1544 = vmatprep.subr.bf16.mxu0 0
      %1545 = vmatpush1.bf16.msra.mxu0 %v1307
      %1546 = vmatprep.subr.bf16.mxu0 0
      %1547 = vmatpush1.bf16.msra.mxu0 %v1310
      %1548 = vmatprep.subr.bf16.mxu0 0
      %1549 = vmatpush1.bf16.msra.mxu0 %v1313
      %1550 = vmatprep.subr.bf16.mxu0 0
      %1551 = vmatpush1.bf16.msra.mxu0 %v1316
      %1552 = vmatprep.subr.bf16.mxu0 0
      %1553 = vmatpush1.bf16.msra.mxu0 %v1319
      %1554 = vmatprep.subr.bf16.mxu0 0
      %1555 = vmatpush1.bf16.msra.mxu0 %v1322
      %1556 = vmatprep.subr.bf16.mxu0 0
      %1557 = vmatpush1.bf16.msra.mxu0 %v1325
      %1558 = vmatprep.subr.bf16.mxu0 0
      %1559 = vmatpush1.bf16.msra.mxu0 %v1328
      %1560 = vmatprep.subr.bf16.mxu0 0
      %1561 = vmatpush1.bf16.msra.mxu0 %v1331
      %1562 = vmatprep.subr.bf16.mxu0 0
      %1563 = vmatpush1.bf16.msra.mxu0 %v1334
      %1564 = vmatprep.subr.bf16.mxu0 0
      %1565 = vmatpush1.bf16.msra.mxu0 %v1337
      %1566 = vmatprep.subr.bf16.mxu0 0
      %1567 = vmatpush1.bf16.msra.mxu0 %v1340
      %1568 = vmatprep.subr.bf16.mxu0 0
      %1569 = vmatpush1.bf16.msra.mxu0 %v1343
      %1570 = vmatprep.subr.bf16.mxu0 0
      %1571 = vmatpush1.bf16.msra.mxu0 %v1346
      %1572 = vmatprep.mubr.bf16.mxu0 %v1396
      %1573 = vmatmul.mubr.bf16.gmra.mrb[0].mxu0 %v1395
      %v1574 = vpop.f32.mrb[0].mxu0
      %v1575 = vadd.f32 0.0, %v1574
      %v1576 = vpop.f32.mrb[0].mxu0
      %v1577 = vpop.f32.mrb[0].mxu0
      %v1578 = vadd.f32 0.0, %v1577
      %v1579 = vpop.f32.mrb[0].mxu0
      %1580 = vmatprep.mubr.bf16.mxu0 %v1398
      %1581 = vmatmul.mubr.bf16.gmra.mrb[0].mxu0 %v1397
      %v1582 = vpop.f32.mrb[0].mxu0
      %v1583 = vadd.f32 0.0, %v1582
      %v1584 = vpop.f32.mrb[0].mxu0
      %v1585 = vpop.f32.mrb[0].mxu0
      %v1586 = vadd.f32 0.0, %v1585
      %v1587 = vpop.f32.mrb[0].mxu0
      %1588 = vmatprep.mubr.bf16.mxu0 %v1400
      %1589 = vmatmul.mubr.bf16.gmra.mrb[0].mxu0 %v1399
      %v1590 = vpop.f32.mrb[0].mxu0
      %v1591 = vadd.f32 0.0, %v1590
      %v1592 = vpop.f32.mrb[0].mxu0
      %v1593 = vpop.f32.mrb[0].mxu0
      %v1594 = vadd.f32 0.0, %v1593
      %v1595 = vpop.f32.mrb[0].mxu0
      %1596 = vmatprep.mubr.bf16.mxu0 %v1402
      %1597 = vmatmul.mubr.bf16.gmra.mrb[0].mxu0 %v1401
      %v1598 = vpop.f32.mrb[0].mxu0
      %v1599 = vadd.f32 0.0, %v1598
      %v1600 = vpop.f32.mrb[0].mxu0
      %v1601 = vpop.f32.mrb[0].mxu0
      %v1602 = vadd.f32 0.0, %v1601
      %v1603 = vpop.f32.mrb[0].mxu0
      %1604 = vmatprep.mubr.bf16.mxu0 %v1404
      %1605 = vmatmul.mubr.bf16.gmra.mrb[0].mxu0 %v1403
      %v1606 = vpop.f32.mrb[0].mxu0
      %v1607 = vadd.f32 0.0, %v1606
      %v1608 = vpop.f32.mrb[0].mxu0
      %v1609 = vpop.f32.mrb[0].mxu0
      %v1610 = vadd.f32 0.0, %v1609
      %v1611 = vpop.f32.mrb[0].mxu0
      %1612 = vmatprep.mubr.bf16.mxu0 %v1406
      %1613 = vmatmul.mubr.bf16.gmra.mrb[0].mxu0 %v1405
      %v1614 = vpop.f32.mrb[0].mxu0
      %v1615 = vadd.f32 0.0, %v1614
      %v1616 = vpop.f32.mrb[0].mxu0
      %v1617 = vpop.f32.mrb[0].mxu0
      %v1618 = vadd.f32 0.0, %v1617
      %v1619 = vpop.f32.mrb[0].mxu0
      %1620 = vmatprep.mubr.bf16.mxu0 %v1408
      %1621 = vmatmul.mubr.bf16.gmra.mrb[0].mxu0 %v1407
      %v1622 = vpop.f32.mrb[0].mxu0
      %v1623 = vadd.f32 0.0, %v1622
      %v1624 = vpop.f32.mrb[0].mxu0
      %v1625 = vpop.f32.mrb[0].mxu0
      %v1626 = vadd.f32 0.0, %v1625
      %v1627 = vpop.f32.mrb[0].mxu0
      %1628 = vmatprep.mubr.bf16.mxu0 %v1410
      %1629 = vmatmul.mubr.bf16.gmra.mrb[0].mxu0 %v1409
      %v1630 = vpop.f32.mrb[0].mxu0
      %v1631 = vadd.f32 0.0, %v1630
      %v1632 = vpop.f32.mrb[0].mxu0
      %v1633 = vpop.f32.mrb[0].mxu0
      %v1634 = vadd.f32 0.0, %v1633
      %v1635 = vpop.f32.mrb[0].mxu0
      %1636 = vdwg.mxu0
      %v1637 = vpack.c.bf16 %v1466, %v1462
      %v1638 = vpack.c.bf16 %v1468, %v1464
      %v1639 = vpack.c.bf16 %v1578, %v1575
      %v1640 = vpack.c.bf16 %v1476, %v1472
      %v1641 = vpack.c.bf16 %v1478, %v1474
      %v1642 = vpack.c.bf16 %v1586, %v1583
      %v1643 = vpack.c.bf16 %v1486, %v1482
      %v1644 = vpack.c.bf16 %v1488, %v1484
      %v1645 = vpack.c.bf16 %v1594, %v1591
      %v1646 = vpack.c.bf16 %v1496, %v1492
      %v1647 = vpack.c.bf16 %v1498, %v1494
      %v1648 = vpack.c.bf16 %v1602, %v1599
      %v1649 = vpack.c.bf16 %v1506, %v1502
      %v1650 = vpack.c.bf16 %v1508, %v1504
      %v1651 = vpack.c.bf16 %v1610, %v1607
      %v1652 = vpack.c.bf16 %v1516, %v1512
      %v1653 = vpack.c.bf16 %v1518, %v1514
      %v1654 = vpack.c.bf16 %v1618, %v1615
      %v1655 = vpack.c.bf16 %v1526, %v1522
      %v1656 = vpack.c.bf16 %v1528, %v1524
      %v1657 = vpack.c.bf16 %v1626, %v1623
      %v1658 = vpack.c.bf16 %v1536, %v1532
      %v1659 = vpack.c.bf16 %v1538, %v1534
      %v1660 = vpack.c.bf16 %v1634, %v1631
      %v1685 = vunpack.c.l.b16 %v1637
      %v1686 = vunpack.c.l.b16 %v1638
      %v1687 = vunpack.c.l.b16 %v1639
      %v1688 = vunpack.c.h.b16 %v1637
      %v1689 = vunpack.c.h.b16 %v1638
      %v1690 = vunpack.c.h.b16 %v1639
      %v1691 = vunpack.c.l.b16 %v1640
      %v1692 = vunpack.c.l.b16 %v1641
      %v1693 = vunpack.c.l.b16 %v1642
      %v1694 = vunpack.c.h.b16 %v1640
      %v1695 = vunpack.c.h.b16 %v1641
      %v1696 = vunpack.c.h.b16 %v1642
      %v1697 = vunpack.c.l.b16 %v1643
      %v1698 = vunpack.c.l.b16 %v1644
      %v1699 = vunpack.c.l.b16 %v1645
      %v1700 = vunpack.c.h.b16 %v1643
      %v1701 = vunpack.c.h.b16 %v1644
      %v1702 = vunpack.c.h.b16 %v1645
      %v1703 = vunpack.c.l.b16 %v1646
      %v1704 = vunpack.c.l.b16 %v1647
      %v1705 = vunpack.c.l.b16 %v1648
      %v1706 = vunpack.c.h.b16 %v1646
      %v1707 = vunpack.c.h.b16 %v1647
      %v1708 = vunpack.c.h.b16 %v1648
      %v1709 = vunpack.c.l.b16 %v1649
      %v1710 = vunpack.c.l.b16 %v1650
      %v1711 = vunpack.c.l.b16 %v1651
      %v1712 = vunpack.c.h.b16 %v1649
      %v1713 = vunpack.c.h.b16 %v1650
      %v1714 = vunpack.c.h.b16 %v1651
      %v1715 = vunpack.c.l.b16 %v1652
      %v1716 = vunpack.c.l.b16 %v1653
      %v1717 = vunpack.c.l.b16 %v1654
      %v1718 = vunpack.c.h.b16 %v1652
      %v1719 = vunpack.c.h.b16 %v1653
      %v1720 = vunpack.c.h.b16 %v1654
      %v1721 = vunpack.c.l.b16 %v1655
      %v1722 = vunpack.c.l.b16 %v1656
      %v1723 = vunpack.c.l.b16 %v1657
      %v1724 = vunpack.c.h.b16 %v1655
      %v1725 = vunpack.c.h.b16 %v1656
      %v1726 = vunpack.c.h.b16 %v1657
      %v1727 = vunpack.c.l.b16 %v1658
      %v1728 = vunpack.c.l.b16 %v1659
      %v1729 = vunpack.c.l.b16 %v1660
      %v1730 = vunpack.c.h.b16 %v1658
      %v1731 = vunpack.c.h.b16 %v1659
      %v1732 = vunpack.c.h.b16 %v1660
      %v1733 = vpack.c.b16 %v1686, %v1685
      %v1734 = vpack.c.b16 %v1687, %v1687
      %v1735 = vpack.c.b16 %v1689, %v1688
      %v1736 = vpack.c.b16 %v1690, %v1690
      %v1737 = vpack.c.b16 %v1692, %v1691
      %v1738 = vpack.c.b16 %v1693, %v1693
      %v1739 = vpack.c.b16 %v1695, %v1694
      %v1740 = vpack.c.b16 %v1696, %v1696
      %v1741 = vpack.c.b16 %v1698, %v1697
      %v1742 = vpack.c.b16 %v1699, %v1699
      %v1743 = vpack.c.b16 %v1701, %v1700
      %v1744 = vpack.c.b16 %v1702, %v1702
      %v1745 = vpack.c.b16 %v1704, %v1703
      %v1746 = vpack.c.b16 %v1705, %v1705
      %v1747 = vpack.c.b16 %v1707, %v1706
      %v1748 = vpack.c.b16 %v1708, %v1708
      %v1749 = vpack.c.b16 %v1710, %v1709
      %v1750 = vpack.c.b16 %v1711, %v1711
      %v1751 = vpack.c.b16 %v1713, %v1712
      %v1752 = vpack.c.b16 %v1714, %v1714
      %v1753 = vpack.c.b16 %v1716, %v1715
      %v1754 = vpack.c.b16 %v1717, %v1717
      %v1755 = vpack.c.b16 %v1719, %v1718
      %v1756 = vpack.c.b16 %v1720, %v1720
      %v1757 = vpack.c.b16 %v1722, %v1721
      %v1758 = vpack.c.b16 %v1723, %v1723
      %v1759 = vpack.c.b16 %v1725, %v1724
      %v1760 = vpack.c.b16 %v1726, %v1726
      %v1761 = vpack.c.b16 %v1728, %v1727
      %v1762 = vpack.c.b16 %v1729, %v1729
      %v1763 = vpack.c.b16 %v1731, %v1730
      %v1764 = vpack.c.b16 %v1732, %v1732
      %1797 = vst [vmem:[%s316] sm:$0xff] %v1733
      %1798 = vst [vmem:[%s316 + $0x8] sm:$0xf] %v1734
      %1799 = vst [vmem:[%s316 + $0xc] sm:$0xff] %v1735
      %1800 = vst [vmem:[%s316 + $0x14] sm:$0xf] %v1736
      %1801 = vst [vmem:[%s316 + $0x18] sm:$0xff] %v1737
      %1802 = vst [vmem:[%s316 + $0x20] sm:$0xf] %v1738
      %1803 = vst [vmem:[%s316 + $0x24] sm:$0xff] %v1739
      %1804 = vst [vmem:[%s316 + $0x2c] sm:$0xf] %v1740
      %1805 = vst [vmem:[%s316 + $0x30] sm:$0xff] %v1741
      %1806 = vst [vmem:[%s316 + $0x38] sm:$0xf] %v1742
      %1807 = vst [vmem:[%s316 + $0x3c] sm:$0xff] %v1743
      %1808 = vst [vmem:[%s316 + $0x44] sm:$0xf] %v1744
      %1809 = vst [vmem:[%s316 + $0x48] sm:$0xff] %v1745
      %1810 = vst [vmem:[%s316 + $0x50] sm:$0xf] %v1746
      %1811 = vst [vmem:[%s316 + $0x54] sm:$0xff] %v1747
      %1812 = vst [vmem:[%s316 + $0x5c] sm:$0xf] %v1748
      %1813 = vst [vmem:[%s316 + $0x60] sm:$0xff] %v1749
      %1814 = vst [vmem:[%s316 + $0x68] sm:$0xf] %v1750
      %1815 = vst [vmem:[%s316 + $0x6c] sm:$0xff] %v1751
      %1816 = vst [vmem:[%s316 + $0x74] sm:$0xf] %v1752
      %1817 = vst [vmem:[%s316 + $0x78] sm:$0xff] %v1753
      %1818 = vst [vmem:[%s316 + $0x80] sm:$0xf] %v1754
      %1819 = vst [vmem:[%s316 + $0x84] sm:$0xff] %v1755
      %1820 = vst [vmem:[%s316 + $0x8c] sm:$0xf] %v1756
      %1821 = vst [vmem:[%s316 + $0x90] sm:$0xff] %v1757
      %1822 = vst [vmem:[%s316 + $0x98] sm:$0xf] %v1758
      %1823 = vst [vmem:[%s316 + $0x9c] sm:$0xff] %v1759
      %1824 = vst [vmem:[%s316 + $0xa4] sm:$0xf] %v1760
      %1825 = vst [vmem:[%s316 + $0xa8] sm:$0xff] %v1761
      %1826 = vst [vmem:[%s316 + $0xb0] sm:$0xf] %v1762
      %1827 = vst [vmem:[%s316 + $0xb4] sm:$0xff] %v1763
      %1828 = vst [vmem:[%s316 + $0xbc] sm:$0xf] %v1764
      %v1829 = vadd.f32 %v1462, %v1464
      %v1830 = vadd.f32 %v1829, %v1575
      %1831 = vadd.xlane.f32.xlu0 %v1830
      %v1832 = vpop.xlane.xlu0 %1831
      %v1833 = vadd.f32 %v1466, %v1468
      %v1834 = vadd.f32 %v1833, %v1578
      %1835 = vadd.xlane.f32.xlu0 %v1834
      %v1836 = vpop.xlane.xlu0 %1835
      %v1837 = vadd.f32 %v1472, %v1474
      %v1838 = vadd.f32 %v1837, %v1583
      %1839 = vadd.xlane.f32.xlu0 %v1838
      %v1840 = vpop.xlane.xlu0 %1839
      %v1841 = vadd.f32 %v1476, %v1478
      %v1842 = vadd.f32 %v1841, %v1586
      %1843 = vadd.xlane.f32.xlu0 %v1842
      %v1844 = vpop.xlane.xlu0 %1843
      %v1845 = vadd.f32 %v1482, %v1484
      %v1846 = vadd.f32 %v1845, %v1591
      %1847 = vadd.xlane.f32.xlu0 %v1846
      %v1848 = vpop.xlane.xlu0 %1847
      %v1849 = vadd.f32 %v1486, %v1488
      %v1850 = vadd.f32 %v1849, %v1594
      %1851 = vadd.xlane.f32.xlu0 %v1850
      %v1852 = vpop.xlane.xlu0 %1851
      %v1853 = vadd.f32 %v1492, %v1494
      %v1854 = vadd.f32 %v1853, %v1599
      %1855 = vadd.xlane.f32.xlu0 %v1854
      %v1856 = vpop.xlane.xlu0 %1855
      %v1857 = vadd.f32 %v1496, %v1498
      %v1858 = vadd.f32 %v1857, %v1602
      %1859 = vadd.xlane.f32.xlu0 %v1858
      %v1860 = vpop.xlane.xlu0 %1859
      %v1861 = vadd.f32 %v1502, %v1504
      %v1862 = vadd.f32 %v1861, %v1607
      %1863 = vadd.xlane.f32.xlu0 %v1862
      %v1864 = vpop.xlane.xlu0 %1863
      %v1865 = vadd.f32 %v1506, %v1508
      %v1866 = vadd.f32 %v1865, %v1610
      %1867 = vadd.xlane.f32.xlu0 %v1866
      %v1868 = vpop.xlane.xlu0 %1867
      %v1869 = vadd.f32 %v1512, %v1514
      %v1870 = vadd.f32 %v1869, %v1615
      %1871 = vadd.xlane.f32.xlu0 %v1870
      %v1872 = vpop.xlane.xlu0 %1871
      %v1873 = vadd.f32 %v1516, %v1518
      %v1874 = vadd.f32 %v1873, %v1618
      %1875 = vadd.xlane.f32.xlu0 %v1874
      %v1876 = vpop.xlane.xlu0 %1875
      %v1877 = vadd.f32 %v1522, %v1524
      %v1878 = vadd.f32 %v1877, %v1623
      %1879 = vadd.xlane.f32.xlu0 %v1878
      %v1880 = vpop.xlane.xlu0 %1879
      %v1881 = vadd.f32 %v1526, %v1528
      %v1882 = vadd.f32 %v1881, %v1626
      %1883 = vadd.xlane.f32.xlu0 %v1882
      %v1884 = vpop.xlane.xlu0 %1883
      %v1885 = vadd.f32 %v1532, %v1534
      %v1886 = vadd.f32 %v1885, %v1631
      %1887 = vadd.xlane.f32.xlu0 %v1886
      %v1888 = vpop.xlane.xlu0 %1887
      %v1889 = vadd.f32 %v1536, %v1538
      %v1890 = vadd.f32 %v1889, %v1634
      %1891 = vadd.xlane.f32.xlu0 %v1890
      %v1892 = vpop.xlane.xlu0 %1891
      %vm1893 = vcmask 7168
      %1894 = vst.msk [vmem:[%s326] sm:$0xff] %vm1893, %v1832
      %1895 = vst.msk [vmem:[%s326 + $0x8] sm:$0xff] %vm1893, %v1836
      %1896 = vst.msk [vmem:[%s326 + $0x10] sm:$0xff] %vm1893, %v1840
      %1897 = vst.msk [vmem:[%s326 + $0x18] sm:$0xff] %vm1893, %v1844
      %1898 = vst.msk [vmem:[%s326 + $0x20] sm:$0xff] %vm1893, %v1848
      %1899 = vst.msk [vmem:[%s326 + $0x28] sm:$0xff] %vm1893, %v1852
      %1900 = vst.msk [vmem:[%s326 + $0x30] sm:$0xff] %vm1893, %v1856
      %1901 = vst.msk [vmem:[%s326 + $0x38] sm:$0xff] %vm1893, %v1860
      %1902 = vst.msk [vmem:[%s326 + $0x40] sm:$0xff] %vm1893, %v1864
      %1903 = vst.msk [vmem:[%s326 + $0x48] sm:$0xff] %vm1893, %v1868
      %1904 = vst.msk [vmem:[%s326 + $0x50] sm:$0xff] %vm1893, %v1872
      %1905 = vst.msk [vmem:[%s326 + $0x58] sm:$0xff] %vm1893, %v1876
      %1906 = vst.msk [vmem:[%s326 + $0x60] sm:$0xff] %vm1893, %v1880
      %1907 = vst.msk [vmem:[%s326 + $0x68] sm:$0xff] %vm1893, %v1884
      %1908 = vst.msk [vmem:[%s326 + $0x70] sm:$0xff] %vm1893, %v1888
      %1909 = vst.msk [vmem:[%s326 + $0x78] sm:$0xff] %vm1893, %v1892
      %v1910 = vmul.f32 %v1462, %v1462
      %v1911 = vmul.f32 %v1464, %v1464
      %v1912 = vmul.f32 %v1575, %v1575
      %v1913 = vmul.f32 %v1466, %v1466
      %v1914 = vmul.f32 %v1468, %v1468
      %v1915 = vmul.f32 %v1578, %v1578
      %v1916 = vmul.f32 %v1472, %v1472
      %v1917 = vmul.f32 %v1474, %v1474
      %v1918 = vmul.f32 %v1583, %v1583
      %v1919 = vmul.f32 %v1476, %v1476
      %v1920 = vmul.f32 %v1478, %v1478
      %v1921 = vmul.f32 %v1586, %v1586
      %v1922 = vmul.f32 %v1482, %v1482
      %v1923 = vmul.f32 %v1484, %v1484
      %v1924 = vmul.f32 %v1591, %v1591
      %v1925 = vmul.f32 %v1486, %v1486
      %v1926 = vmul.f32 %v1488, %v1488
      %v1927 = vmul.f32 %v1594, %v1594
      %v1928 = vmul.f32 %v1492, %v1492
      %v1929 = vmul.f32 %v1494, %v1494
      %v1930 = vmul.f32 %v1599, %v1599
      %v1931 = vmul.f32 %v1496, %v1496
      %v1932 = vmul.f32 %v1498, %v1498
      %v1933 = vmul.f32 %v1602, %v1602
      %v1934 = vmul.f32 %v1502, %v1502
      %v1935 = vmul.f32 %v1504, %v1504
      %v1936 = vmul.f32 %v1607, %v1607
      %v1937 = vmul.f32 %v1506, %v1506
      %v1938 = vmul.f32 %v1508, %v1508
      %v1939 = vmul.f32 %v1610, %v1610
      %v1940 = vmul.f32 %v1512, %v1512
      %v1941 = vmul.f32 %v1514, %v1514
      %v1942 = vmul.f32 %v1615, %v1615
      %v1943 = vmul.f32 %v1516, %v1516
      %v1944 = vmul.f32 %v1518, %v1518
      %v1945 = vmul.f32 %v1618, %v1618
      %v1946 = vmul.f32 %v1522, %v1522
      %v1947 = vmul.f32 %v1524, %v1524
      %v1948 = vmul.f32 %v1623, %v1623
      %v1949 = vmul.f32 %v1526, %v1526
      %v1950 = vmul.f32 %v1528, %v1528
      %v1951 = vmul.f32 %v1626, %v1626
      %v1952 = vmul.f32 %v1532, %v1532
      %v1953 = vmul.f32 %v1534, %v1534
      %v1954 = vmul.f32 %v1631, %v1631
      %v1955 = vmul.f32 %v1536, %v1536
      %v1956 = vmul.f32 %v1538, %v1538
      %v1957 = vmul.f32 %v1634, %v1634
      %v1958 = vadd.f32 %v1910, %v1911
      %v1959 = vadd.f32 %v1958, %v1912
      %1960 = vadd.xlane.f32.xlu0 %v1959
      %v1961 = vpop.xlane.xlu0 %1960
      %v1962 = vadd.f32 %v1913, %v1914
      %v1963 = vadd.f32 %v1962, %v1915
      %1964 = vadd.xlane.f32.xlu0 %v1963
      %v1965 = vpop.xlane.xlu0 %1964
      %v1966 = vadd.f32 %v1916, %v1917
      %v1967 = vadd.f32 %v1966, %v1918
      %1968 = vadd.xlane.f32.xlu0 %v1967
      %v1969 = vpop.xlane.xlu0 %1968
      %v1970 = vadd.f32 %v1919, %v1920
      %v1971 = vadd.f32 %v1970, %v1921
      %1972 = vadd.xlane.f32.xlu0 %v1971
      %v1973 = vpop.xlane.xlu0 %1972
      %v1974 = vadd.f32 %v1922, %v1923
      %v1975 = vadd.f32 %v1974, %v1924
      %1976 = vadd.xlane.f32.xlu0 %v1975
      %v1977 = vpop.xlane.xlu0 %1976
      %v1978 = vadd.f32 %v1925, %v1926
      %v1979 = vadd.f32 %v1978, %v1927
      %1980 = vadd.xlane.f32.xlu0 %v1979
      %v1981 = vpop.xlane.xlu0 %1980
      %v1982 = vadd.f32 %v1928, %v1929
      %v1983 = vadd.f32 %v1982, %v1930
      %1984 = vadd.xlane.f32.xlu0 %v1983
      %v1985 = vpop.xlane.xlu0 %1984
      %v1986 = vadd.f32 %v1931, %v1932
      %v1987 = vadd.f32 %v1986, %v1933
      %1988 = vadd.xlane.f32.xlu0 %v1987
      %v1989 = vpop.xlane.xlu0 %1988
      %v1990 = vadd.f32 %v1934, %v1935
      %v1991 = vadd.f32 %v1990, %v1936
      %1992 = vadd.xlane.f32.xlu0 %v1991
      %v1993 = vpop.xlane.xlu0 %1992
      %v1994 = vadd.f32 %v1937, %v1938
      %v1995 = vadd.f32 %v1994, %v1939
      %1996 = vadd.xlane.f32.xlu0 %v1995
      %v1997 = vpop.xlane.xlu0 %1996
      %v1998 = vadd.f32 %v1940, %v1941
      %v1999 = vadd.f32 %v1998, %v1942
      %2000 = vadd.xlane.f32.xlu0 %v1999
      %v2001 = vpop.xlane.xlu0 %2000
      %v2002 = vadd.f32 %v1943, %v1944
      %v2003 = vadd.f32 %v2002, %v1945
      %2004 = vadd.xlane.f32.xlu0 %v2003
      %v2005 = vpop.xlane.xlu0 %2004
      %v2006 = vadd.f32 %v1946, %v1947
      %v2007 = vadd.f32 %v2006, %v1948
      %2008 = vadd.xlane.f32.xlu0 %v2007
      %v2009 = vpop.xlane.xlu0 %2008
      %v2010 = vadd.f32 %v1949, %v1950
      %v2011 = vadd.f32 %v2010, %v1951
      %2012 = vadd.xlane.f32.xlu0 %v2011
      %v2013 = vpop.xlane.xlu0 %2012
      %v2014 = vadd.f32 %v1952, %v1953
      %v2015 = vadd.f32 %v2014, %v1954
      %2016 = vadd.xlane.f32.xlu0 %v2015
      %v2017 = vpop.xlane.xlu0 %2016
      %v2018 = vadd.f32 %v1955, %v1956
      %v2019 = vadd.f32 %v2018, %v1957
      %2020 = vadd.xlane.f32.xlu0 %v2019
      %v2021 = vpop.xlane.xlu0 %2020
      %2022 = vst.msk [vmem:[%s335] sm:$0xff] %vm1893, %v1961
      %2023 = vst.msk [vmem:[%s335 + $0x8] sm:$0xff] %vm1893, %v1965
      %2024 = vst.msk [vmem:[%s335 + $0x10] sm:$0xff] %vm1893, %v1969
      %2025 = vst.msk [vmem:[%s335 + $0x18] sm:$0xff] %vm1893, %v1973
      %2026 = vst.msk [vmem:[%s335 + $0x20] sm:$0xff] %vm1893, %v1977
      %2027 = vst.msk [vmem:[%s335 + $0x28] sm:$0xff] %vm1893, %v1981
      %2028 = vst.msk [vmem:[%s335 + $0x30] sm:$0xff] %vm1893, %v1985
      %2029 = vst.msk [vmem:[%s335 + $0x38] sm:$0xff] %vm1893, %v1989
      %2030 = vst.msk [vmem:[%s335 + $0x40] sm:$0xff] %vm1893, %v1993
      %2031 = vst.msk [vmem:[%s335 + $0x48] sm:$0xff] %vm1893, %v1997
      %2032 = vst.msk [vmem:[%s335 + $0x50] sm:$0xff] %vm1893, %v2001
      %2033 = vst.msk [vmem:[%s335 + $0x58] sm:$0xff] %vm1893, %v2005
      %2034 = vst.msk [vmem:[%s335 + $0x60] sm:$0xff] %vm1893, %v2009
      %2035 = vst.msk [vmem:[%s335 + $0x68] sm:$0xff] %vm1893, %v2013
      %2036 = vst.msk [vmem:[%s335 + $0x70] sm:$0xff] %vm1893, %v2017
      %2037 = vst.msk [vmem:[%s335 + $0x78] sm:$0xff] %vm1893, %v2021
      %s2038 = smul.u32 3, %s23
      %p2039 = scmp.lt.s32.totalorder %s22, 1
      %s2040 = scalar_select %p2039, %s22, 1
      %p2041 = scmp.lt.s32.totalorder %s2038, 2
      %s2042 = scalar_select %p2041, %s2038, 2
      %s2043 = smul.addr %s2040, 48
      %s2044 = sadd.s32 %s2042, %s2043
      %s2045 = smul.addr %s2044, 4
      %s2046 = scalar_lea.vmem %s4, %s2045
      %p2047 = scmp.lt.s32.totalorder %s22, 1
      %s2048 = scalar_select %p2047, %s22, 1
      %p2049 = scmp.lt.s32.totalorder %s23, 0
      %s2050 = scalar_select %p2049, %s23, 0
      %s2051 = smul.addr %s2050, 16
      %s2052 = smul.addr %s2048, 16
      %s2053 = sadd.s32 %s2051, %s2052
      %s2054 = smul.addr %s2053, 8
      %s2055 = scalar_lea.vmem %s5, %s2054
      %p2056 = scmp.lt.s32.totalorder %s22, 1
      %s2057 = scalar_select %p2056, %s22, 1
      %p2058 = scmp.lt.s32.totalorder %s23, 0
      %s2059 = scalar_select %p2058, %s23, 0
      %s2060 = smul.addr %s2059, 16
      %s2061 = smul.addr %s2057, 16
      %s2062 = sadd.s32 %s2060, %s2061
      %s2063 = smul.addr %s2062, 8
      %s2064 = scalar_lea.vmem %s6, %s2063
      // Predicated region
      $region37: #{point_gen_con.5} parent=35 // pred_check
        %p2065 = pneg %p141
      $region38: #{point_gen_con.5} parent=35 // pred_check_branch
        %2067 = sbr.rel (%p2065) target = $region40
      $region39: #{point_gen_con.5} parent=35 // pred_region
        %s2068 = smul.u32 3, %s23
      $region40: #{point_gen_con.5} parent=35 // pred_fallthru
        _
      // Predicated region
      $region41: #{point_gen_con.5} parent=35 // pred_check
        %p2069 = pneg %p169
      $region42: #{point_gen_con.5} parent=35 // pred_check_branch
        %2071 = sbr.rel (%p2069) target = $region44
      $region43: #{point_gen_con.5} parent=35 // pred_region
        _
      $region44: #{point_gen_con.5} parent=35 // pred_fallthru
        _
      // Predicated region
      $region45: #{point_gen_con.5} parent=35 // pred_check
        %p2072 = pneg %p197
      $region46: #{point_gen_con.5} parent=35 // pred_check_branch
        %2074 = sbr.rel (%p2072) target = $region48
      $region47: #{point_gen_con.5} parent=35 // pred_region
        _
      $region48: #{point_gen_con.5} parent=35 // pred_fallthru
        _
    $region36: #{point_gen_con.5} parent=5 // pred_fallthru
      _
    %p2075 = scmp.le.s32.totalorder 2, %s13
    // Predicated region
    $region49: #{point_gen_con.5} parent=5 // pred_check
      %p2076 = pneg %p2075
    $region50: #{point_gen_con.5} parent=5 // pred_check_branch
      %2078 = sbr.rel (%p2076) target = $region52
    $region51: #{point_gen_con.5} parent=5 // pred_region
      %s2079 = ssub.s32 %s13, 2
      // Predicated region
      $region53: #{point_gen_con.5} parent=51 // pred_check
        %p2080 = pneg %p147
      $region54: #{point_gen_con.5} parent=51 // pred_check_branch
        %2082 = sbr.rel (%p2080) target = $region56
      $region55: #{point_gen_con.5} parent=51 // pred_region
        %s2083 = smul.u32 3, %s25
        %p2084 = scmp.lt.s32.totalorder %s24, 1
        %s2085 = scalar_select %p2084, %s24, 1
        %p2086 = scmp.lt.s32.totalorder %s2083, 2
        %s2087 = scalar_select %p2086, %s2083, 2
        %s2088 = smul.addr %s2085, 48
        %s2089 = sadd.s32 %s2087, %s2088
        %s2090 = smul.addr %s2089, 4
        %s2091 = scalar_lea.vmem %s4, %s2090
      $region56: #{point_gen_con.5} parent=51 // pred_fallthru
        _
      // Predicated region
      $region57: #{point_gen_con.5} parent=51 // pred_check
        %p2092 = pneg %p175
      $region58: #{point_gen_con.5} parent=51 // pred_check_branch
        %2094 = sbr.rel (%p2092) target = $region60
      $region59: #{point_gen_con.5} parent=51 // pred_region
        %p2095 = scmp.lt.s32.totalorder %s24, 1
        %s2096 = scalar_select %p2095, %s24, 1
        %p2097 = scmp.lt.s32.totalorder %s25, 0
        %s2098 = scalar_select %p2097, %s25, 0
        %s2099 = smul.addr %s2098, 16
        %s2100 = smul.addr %s2096, 16
        %s2101 = sadd.s32 %s2099, %s2100
        %s2102 = smul.addr %s2101, 8
        %s2103 = scalar_lea.vmem %s5, %s2102
      $region60: #{point_gen_con.5} parent=51 // pred_fallthru
        _
      // Predicated region
      $region61: #{point_gen_con.5} parent=51 // pred_check
        %p2104 = pneg %p203
      $region62: #{point_gen_con.5} parent=51 // pred_check_branch
        %2106 = sbr.rel (%p2104) target = $region64
      $region63: #{point_gen_con.5} parent=51 // pred_region
        %p2107 = scmp.lt.s32.totalorder %s24, 1
        %s2108 = scalar_select %p2107, %s24, 1
        %p2109 = scmp.lt.s32.totalorder %s25, 0
        %s2110 = scalar_select %p2109, %s25, 0
        %s2111 = smul.addr %s2110, 16
        %s2112 = smul.addr %s2108, 16
        %s2113 = sadd.s32 %s2111, %s2112
        %s2114 = smul.addr %s2113, 8
        %s2115 = scalar_lea.vmem %s6, %s2114
      $region64: #{point_gen_con.5} parent=51 // pred_fallthru
        _
    $region52: #{point_gen_con.5} parent=5 // pred_fallthru
      _
  $region6: #{point_gen_con.5} parent=0 // loop_footer
    %s17 = sadd.s32 1, %s13
  $region7: #{point_gen_con.5} parent=0 // loop_footer_branch
    %12 = sbr.rel target = $region3
  $region8: #{point_gen_con.5} parent=0 // loop_exit
    _

</llo_original>
